<compile_context>
chip_gen: v7x
topology: tpu7x:2x2x1
jax: 0.10.0
libtpu: 0.0.40
codegen_flags: <defaults>
</compile_context>

<pallas_src>
import functools

import jax
import jax.numpy as jnp
from jax import lax
from jax.experimental import pallas as pl
from jax.experimental.pallas import tpu as pltpu


# -----------------------------------------------------------------------------
# helpers
# -----------------------------------------------------------------------------
@functools.lru_cache(maxsize=1)
def _compiler_params_1d():
    """CompilerParams for the 1-D (M) grid, built lazily at trace time so the
    VMEM budget reflects the actual compile target (v5e/v6e: 128 MiB, v7x: 64 MiB)."""
    try:
        vmem = int(pltpu.get_tpu_info().vmem_capacity_bytes * 0.7)
    except Exception:
        vmem = 48 * 1024 * 1024
    return pltpu.CompilerParams(
        dimension_semantics=("parallel",), vmem_limit_bytes=vmem)


def _pick_tm(m):
    """Largest M tile <= 256 that divides M exactly (>= 2 grid steps when
    M >= 512 so v7x's second TensorCore has work); small layers are one block."""
    if m <= 256:
        return m
    for tm in (256, 128, 64, 32, 16, 8):
        if m % tm == 0:
            return tm
    return m


# -----------------------------------------------------------------------------
# Pallas kernels: single-dot GEMM, fused bias (+ReLU), bf16 output
# -----------------------------------------------------------------------------
def _gemm_bias_kernel(a_ref, w_ref, b_ref, o_ref, *, relu):
    acc = jnp.dot(a_ref[...], w_ref[...], preferred_element_type=jnp.float32)
    acc = acc + b_ref[...]
    if relu:
        acc = jnp.maximum(acc, 0.0)
    o_ref[...] = acc.astype(o_ref.dtype)


def _trans_skip_kernel(a1_ref, w1_ref, b1_ref, a2_ref, w2_ref, b2_ref, o_ref):
    # relu(transpose-conv parity GEMM) + (block-diagonal 1x1 add_conv GEMM),
    # both accumulated and added in f32 before the single bf16 store.
    t = jnp.dot(a1_ref[...], w1_ref[...], preferred_element_type=jnp.float32)
    t = jnp.maximum(t + b1_ref[...], 0.0)
    s = jnp.dot(a2_ref[...], w2_ref[...], preferred_element_type=jnp.float32)
    o_ref[...] = (t + s + b2_ref[...]).astype(o_ref.dtype)


def pallas_gemm_bias(a, w, b, *, relu, out_dtype=jnp.bfloat16):
    """out = (ReLU?)(a @ w + b).  a:(M,K) bf16, w:(K,N) bf16, b:(1,N) f32."""
    m, k = a.shape
    _, n = w.shape
    tm = _pick_tm(m)
    out_struct = jax.ShapeDtypeStruct((m, n), out_dtype)
    cost = pl.CostEstimate(
        flops=2 * m * k * n, transcendentals=0,
        bytes_accessed=(a.size * a.dtype.itemsize + w.size * w.dtype.itemsize
                        + b.size * 4 + m * n * out_struct.dtype.itemsize))
    return pl.pallas_call(
        functools.partial(_gemm_bias_kernel, relu=relu),
        out_shape=out_struct,
        grid=(m // tm,),
        in_specs=[pl.BlockSpec((tm, k), lambda i: (i, 0)),
                  pl.BlockSpec((k, n), lambda i: (0, 0)),
                  pl.BlockSpec((1, n), lambda i: (0, 0))],
        out_specs=pl.BlockSpec((tm, n), lambda i: (i, 0)),
        compiler_params=_compiler_params_1d(),
        cost_estimate=cost,
    )(a, w, b)


def pallas_trans_skip_gemm(a1, w1, b1, a2, w2, b2, *, out_dtype=jnp.bfloat16):
    """out = relu(a1 @ w1 + b1) + (a2 @ w2 + b2); one fused decoder-stage call."""
    m, k1 = a1.shape
    _, n = w1.shape
    _, k2 = a2.shape
    tm = _pick_tm(m)
    out_struct = jax.ShapeDtypeStruct((m, n), out_dtype)
    cost = pl.CostEstimate(
        flops=2 * m * (k1 + k2) * n, transcendentals=0,
        bytes_accessed=(a1.size * 2 + a2.size * 2 + w1.size * 2 + w2.size * 2
                        + (b1.size + b2.size) * 4
                        + m * n * out_struct.dtype.itemsize))
    return pl.pallas_call(
        _trans_skip_kernel,
        out_shape=out_struct,
        grid=(m // tm,),
        in_specs=[pl.BlockSpec((tm, k1), lambda i: (i, 0)),
                  pl.BlockSpec((k1, n), lambda i: (0, 0)),
                  pl.BlockSpec((1, n), lambda i: (0, 0)),
                  pl.BlockSpec((tm, k2), lambda i: (i, 0)),
                  pl.BlockSpec((k2, n), lambda i: (0, 0)),
                  pl.BlockSpec((1, n), lambda i: (0, 0))],
        out_specs=pl.BlockSpec((tm, n), lambda i: (i, 0)),
        compiler_params=_compiler_params_1d(),
        cost_estimate=cost,
    )(a1, w1, b1, a2, w2, b2)


# -----------------------------------------------------------------------------
# Conv layers built on the Pallas GEMMs (small XLA glue stays bf16, no padding)
# -----------------------------------------------------------------------------
def _im2col(x, k, stride, padding, oh, ow):
    # TODO(synk): im2col still duplicates taps k*k-fold in HBM; negligible at
    # these spatial sizes, but for large image_size the tap loop should move
    # in-kernel (offset reads of the once-padded NHWC input).
    xp = jnp.pad(x, ((0, 0), (padding, padding), (padding, padding), (0, 0)))
    cols = [xp[:, i:i + stride * oh:stride, j:j + stride * ow:stride, :]
            for i in range(k) for j in range(k)]
    return jnp.concatenate(cols, axis=-1)


def conv2d(x, p, *, kernel, stride=1, padding=0, relu=False,
           out_dtype=jnp.bfloat16):
    n, h, w, c = x.shape
    cout = p["w"].shape[1]
    oh = (h + 2 * padding - kernel) // stride + 1
    ow = (w + 2 * padding - kernel) // stride + 1
    if kernel == 1 and stride == 1 and padding == 0:
        a = x.reshape(n * h * w, c)
    else:
        a = _im2col(x, kernel, stride, padding, oh, ow).reshape(
            n * oh * ow, kernel * kernel * c)
    out = pallas_gemm_bias(a, p["w"], p["b"], relu=relu, out_dtype=out_dtype)
    return out.reshape(n, oh, ow, cout)


def _pixel_shuffle2(y_cols, n, h, w, cout):
    # (n*h*w, 4*cout) parity columns (ph, pw, c) -> (n, 2h, 2w, cout)
    # TODO(synk): could be written directly by the kernel via a parity-strided
    # out_spec; kept as a tiny bf16 XLA transpose at these sizes.
    y = y_cols.reshape(n, h, w, 2, 2, cout)
    return jnp.transpose(y, (0, 1, 3, 2, 4, 5)).reshape(n, 2 * h, 2 * w, cout)


def trans_block(x, p):
    """ConvTranspose2d(k=5, s=2, p=2, op=1) + ReLU via sub-pixel decomposition:
    one 3x3/stride-1 GEMM producing 4*Cout parity channels, then pixel-shuffle."""
    n, h, w, cin = x.shape
    cout = p["w"].shape[1] // 4
    a = _im2col(x, 3, 1, 1, h, w).reshape(n * h * w, 9 * cin)
    y = pallas_gemm_bias(a, p["w"], p["b"], relu=True)
    return _pixel_shuffle2(y, n, h, w, cout)


def decoder_stage_fused(x, skip, p_trans, p_add):
    """relu(TransBlock(x)) + add_conv(skip): single fused pallas_call."""
    n, h, w, cin = x.shape
    cout = p_trans["w"].shape[1] // 4
    cadd = skip.shape[-1]
    a1 = _im2col(x, 3, 1, 1, h, w).reshape(n * h * w, 9 * cin)
    # space-to-depth the encoder skip feature into the same (ph, pw, c) parity layout
    s = skip.reshape(n, h, 2, w, 2, cadd)
    s = jnp.transpose(s, (0, 1, 3, 2, 4, 5)).reshape(n * h * w, 4 * cadd)
    y = pallas_trans_skip_gemm(a1, p_trans["w"], p_trans["b"],
                               s, p_add["w"], p_add["b"])
    return _pixel_shuffle2(y, n, h, w, cout)


# -----------------------------------------------------------------------------
# Parameter construction (deterministic fan-in scaled normal) + GEMM prep
# -----------------------------------------------------------------------------
def _init_conv(key, cin, cout, k):
    fan_in = cin * k * k
    w = jax.random.normal(key, (k, k, cin, cout), jnp.float32) / jnp.sqrt(fan_in)
    return w, jnp.zeros((cout,), jnp.float32)


def _init_conv_t(key, cin, cout, k):
    fan_in = cin * k * k
    w = jax.random.normal(key, (cin, cout, k, k), jnp.float32) / jnp.sqrt(fan_in)
    return w, jnp.zeros((cout,), jnp.float32)


def make_raw_params(opt, key):
    fd = opt["feature_dim"]
    nfeat = [fd, fd // 2, fd // 4, fd // 8, fd // 16, fd // 32]
    enc_ch = [3, 16, 24, 32, 96, fd]
    keys = jax.random.split(key, 16)
    ki = iter(range(16))
    raw = {}
    # TODO(synk): pretrained torchvision mobilenetv2 backbone cannot be loaded here;
    # replaced by 5 deterministic stride-2 conv+ReLU stages with matching stage channels.
    raw["encoder"] = [_init_conv(keys[next(ki)], enc_ch[i], enc_ch[i + 1], 3)
                      for i in range(5)]
    # TODO(synk): TransBlock source not provided; implemented as
    # ConvTranspose2d(k=5, stride=2, padding=2, output_padding=1) + ReLU (no BatchNorm).
    raw["decoder_trans"] = [_init_conv_t(keys[next(ki)], nfeat[i], nfeat[i + 1], 5)
                            for i in range(5)]
    raw["decoder_final"] = _init_conv(keys[next(ki)], nfeat[5], opt["output_dim"], 1)
    add_in = [96, 32, 24, 16]
    raw["add_conv"] = [_init_conv(keys[next(ki)], add_in[i], nfeat[i + 1], 1)
                       for i in range(4)]
    return raw


def _prep_conv(w_hwio, bias):
    kh, kw, cin, cout = w_hwio.shape
    return {"w": w_hwio.reshape(kh * kw * cin, cout).astype(jnp.bfloat16),
            "b": bias.reshape(1, cout).astype(jnp.float32)}


# Tap-selection matrices for the stride-2 / k=5 / pad=2 / output_pad=1 sub-pixel
# split of ConvTranspose2d.  Per axis, output parity 0 (even) uses kernel taps
# (4,2,0) on x[u-1],x[u],x[u+1]; parity 1 (odd) uses taps (3,1) on x[u],x[u+1].
_SEL = jnp.zeros((2, 3, 5), jnp.float32)
_SEL = _SEL.at[0, 0, 4].set(1.0).at[0, 1, 2].set(1.0).at[0, 2, 0].set(1.0)
_SEL = _SEL.at[1, 1, 3].set(1.0).at[1, 2, 1].set(1.0)


def _prep_transblock(w_iohw, bias):
    cin, cout, kh, kw = w_iohw.shape
    assert kh == 5 and kw == 5
    w = jnp.transpose(w_iohw, (2, 3, 0, 1)).astype(jnp.float32)   # (5,5,Cin,Cout)
    # sub[tap_h, tap_w, ci, ph, pw, co]: 3x3 conv taps per output parity (ph, pw)
    sub = jnp.einsum("xak,ybl,klio->abixyo", _SEL, _SEL, w)
    return {"w": sub.reshape(9 * cin, 4 * cout).astype(jnp.bfloat16),
            "b": jnp.tile(bias, 4).reshape(1, 4 * cout).astype(jnp.float32)}


def _prep_addconv(w_hwio, bias):
    _, _, cadd, cout = w_hwio.shape
    wa = w_hwio.reshape(cadd, cout)
    # block-diagonal over the 4 output parities so the 1x1 skip conv runs as a
    # second GEMM inside the fused decoder-stage kernel
    w4 = jnp.einsum("pq,io->piqo", jnp.eye(4, dtype=jnp.float32), wa)
    return {"w": w4.reshape(4 * cadd, 4 * cout).astype(jnp.bfloat16),
            "b": jnp.tile(bias, 4).reshape(1, 4 * cout).astype(jnp.float32)}


def prepare_params(raw):
    return {
        "encoder": [_prep_conv(w, b) for w, b in raw["encoder"]],
        "decoder_trans": [_prep_transblock(w, b) for w, b in raw["decoder_trans"]],
        "add_conv": [_prep_addconv(w, b) for w, b in raw["add_conv"]],
        "decoder_final": _prep_conv(*raw["decoder_final"]),
    }


# -----------------------------------------------------------------------------
# Forward pass (mirrors single_view_model.forward, skip_level=True, task != depthseg)
# -----------------------------------------------------------------------------
def single_view_forward(params, image, *, opt):
    s = opt["image_size"]
    x = image.reshape(-1, 3, s, s)                              # images.view(-1,3,S,S)
    h = jnp.transpose(x, (0, 2, 3, 1)).astype(jnp.bfloat16)     # NCHW->NHWC, bf16 once
    h_list = []
    for p in params["encoder"]:
        h = conv2d(h, p, kernel=3, stride=2, padding=1, relu=True)
        h_list.append(h)
    h = h_list[-1]
    for i in range(5):
        if i <= 3 and opt["skip_level"]:
            # h = relu(TransBlock(h)) + add_conv[i](h_list[-i-2])  (one fused kernel)
            h = decoder_stage_fused(h, h_list[-i - 2],
                                    params["decoder_trans"][i],
                                    params["add_conv"][i])
        else:
            h = trans_block(h, params["decoder_trans"][i])
    h = conv2d(h, params["decoder_final"], kernel=1, relu=False,
               out_dtype=jnp.float32)
    h = jnp.transpose(h, (0, 3, 1, 2))                          # NHWC -> NCHW
    return h.reshape(-1, opt["camera_num"], opt["output_dim"], s, s)


# -----------------------------------------------------------------------------
# Pure-JAX f32 reference (same weights) for a numerical sanity check
# -----------------------------------------------------------------------------
def reference_forward(raw, image, opt):
    s = opt["image_size"]
    dn = ("NHWC", "HWIO", "NHWC")
    x = image.reshape(-1, 3, s, s)
    h = jnp.transpose(x, (0, 2, 3, 1))
    h_list = []
    for w, b in raw["encoder"]:
        h = lax.conv_general_dilated(h, w, (2, 2), ((1, 1), (1, 1)),
                                     dimension_numbers=dn)
        h = jax.nn.relu(h + b)
        h_list.append(h)
    h = h_list[-1]
    for i in range(5):
        wt, bt = raw["decoder_trans"][i]
        wc = jnp.transpose(jnp.flip(wt, axis=(2, 3)), (2, 3, 0, 1))  # flipped HWIO
        h = lax.conv_general_dilated(h, wc, (1, 1), ((2, 3), (2, 3)),
                                     lhs_dilation=(2, 2), dimension_numbers=dn)
        h = jax.nn.relu(h + bt)
        if i <= 3 and opt["skip_level"]:
            wa, ba = raw["add_conv"][i]
            sk = lax.conv_general_dilated(h_list[-i - 2], wa, (1, 1),
                                          ((0, 0), (0, 0)), dimension_numbers=dn)
            h = h + sk + ba
    wf, bf = raw["decoder_final"]
    h = lax.conv_general_dilated(h, wf, (1, 1), ((0, 0), (0, 0)),
                                 dimension_numbers=dn) + bf
    h = jnp.transpose(h, (0, 3, 1, 2))
    return h.reshape(-1, opt["camera_num"], opt["output_dim"], s, s)


if __name__ == "__main__":
    opt = dict(
        image_size=32,
        feature_dim=64,
        output_dim=3,
        camera_num=2,
        skip_level=True,
        task="seg",
        backbone="mobilenetv2",
    )
    key = jax.random.PRNGKey(0)
    pkey, xkey = jax.random.split(key)
    raw = make_raw_params(opt, pkey)
    params = prepare_params(raw)

    # image: (batch, camera_num, 3, S, S)
    image = jax.random.normal(
        xkey, (1, opt["camera_num"], 3, opt["image_size"], opt["image_size"]),
        jnp.float32)

    fwd = jax.jit(functools.partial(single_view_forward, opt=opt))
    pred = fwd(params, image)
    jax.block_until_ready(pred)

    assert pred.shape == (1, opt["camera_num"], opt["output_dim"],
                          opt["image_size"], opt["image_size"])
    assert bool(jnp.all(jnp.isfinite(pred)))

    # numerical sanity check vs pure-JAX reference (bf16 MXU operands => loose tol)
    ref = reference_forward(raw, image, opt)
    rel = float(jnp.linalg.norm(pred - ref) / (jnp.linalg.norm(ref) + 1e-8))
    assert rel < 0.05, f"relative error too large: {rel}"

    print("KERNEL_OK")
</pallas_src>

<mosaic_0001>
module attributes {stable_mosaic.version = 11 : i64} {
  func.func @_gemm_bias_kernel(%arg0: i32, %arg1: memref<256x27xbf16, #tpu.memory_space<vmem>>, %arg2: memref<27x16xbf16, #tpu.memory_space<vmem>>, %arg3: memref<1x16xf32, #tpu.memory_space<vmem>>, %arg4: memref<256x16xbf16, #tpu.memory_space<vmem>>) attributes {dimension_semantics = [#tpu.dimension_semantics<parallel>], iteration_bounds = array<i64: 2>, scalar_prefetch = 0 : i64, scratch_operands = 0 : i64, tpu.core_type = #tpu.core_type<tc>, window_params = [{transform_indices = @transform_0, window_bounds = array<i64: 256, 27>}, {pipeline_mode = #tpu.pipeline_mode<synchronous>, transform_indices = @transform_1, window_bounds = array<i64: 27, 16>}, {pipeline_mode = #tpu.pipeline_mode<synchronous>, transform_indices = @transform_2, window_bounds = array<i64: 1, 16>}, {transform_indices = @transform_3, window_bounds = array<i64: 256, 16>}]} {
    %c0 = arith.constant 0 : index
    %c0_0 = arith.constant 0 : index
    %0 = vector.load %arg1[%c0, %c0_0] : memref<256x27xbf16, #tpu.memory_space<vmem>>, vector<256x27xbf16>
    %c0_1 = arith.constant 0 : index
    %c0_2 = arith.constant 0 : index
    %1 = vector.load %arg2[%c0_1, %c0_2] : memref<27x16xbf16, #tpu.memory_space<vmem>>, vector<27x16xbf16>
    %cst = arith.constant dense<0.000000e+00> : vector<256x16xf32>
    %2 = tpu.matmul %0, %1, %cst {dimension_numbers = #tpu.dot_dimension_numbers<[1], [0], [0], [1], [0, 0, 1, 1], [], []>} : vector<256x27xbf16>, vector<27x16xbf16>, vector<256x16xf32> -> vector<256x16xf32>
    %c0_3 = arith.constant 0 : index
    %c0_4 = arith.constant 0 : index
    %3 = vector.load %arg3[%c0_3, %c0_4] : memref<1x16xf32, #tpu.memory_space<vmem>>, vector<1x16xf32>
    %4 = vector.broadcast %3 : vector<1x16xf32> to vector<256x16xf32>
    %5 = arith.addf %2, %4 : vector<256x16xf32>
    %cst_5 = arith.constant 0.000000e+00 : f32
    %6 = vector.broadcast %cst_5 : f32 to vector<256x16xf32>
    %7 = arith.maximumf %5, %6 : vector<256x16xf32>
    %8 = arith.truncf %7 : vector<256x16xf32> to vector<256x16xbf16>
    %c0_6 = arith.constant 0 : index
    %c0_7 = arith.constant 0 : index
    %9 = vector.load %arg4[%c0_6, %c0_7] : memref<256x16xbf16, #tpu.memory_space<vmem>>, vector<256x16xbf16>
    tpu.vector_store %arg4[%c0_6, %c0_7], %8 {strides = array<i32>} : memref<256x16xbf16, #tpu.memory_space<vmem>>, vector<256x16xbf16>,
    return
  }
  func.func @transform_0(%arg0: i32) -> (i32, i32) {
    %c0_i32 = arith.constant 0 : i32
    %c0_i32_0 = arith.constant 0 : i32
    return %arg0, %c0_i32 : i32, i32
  }
  func.func @transform_1(%arg0: i32) -> (i32, i32) {
    %c0_i32 = arith.constant 0 : i32
    %c0_i32_0 = arith.constant 0 : i32
    %c0_i32_1 = arith.constant 0 : i32
    return %c0_i32, %c0_i32_0 : i32, i32
  }
  func.func @transform_2(%arg0: i32) -> (i32, i32) {
    %c0_i32 = arith.constant 0 : i32
    %c0_i32_0 = arith.constant 0 : i32
    %c0_i32_1 = arith.constant 0 : i32
    return %c0_i32, %c0_i32_0 : i32, i32
  }
  func.func @transform_3(%arg0: i32) -> (i32, i32) {
    %c0_i32 = arith.constant 0 : i32
    %c0_i32_0 = arith.constant 0 : i32
    return %arg0, %c0_i32 : i32, i32
  }
}

module attributes {stable_mosaic.version = 11 : i64} {
  func.func @_gemm_bias_kernel(%arg0: i32, %arg1: memref<128x144xbf16, #tpu.memory_space<vmem>>, %arg2: memref<144x24xbf16, #tpu.memory_space<vmem>>, %arg3: memref<1x24xf32, #tpu.memory_space<vmem>>, %arg4: memref<128x24xbf16, #tpu.memory_space<vmem>>) attributes {dimension_semantics = [#tpu.dimension_semantics<parallel>], iteration_bounds = array<i64: 1>, scalar_prefetch = 0 : i64, scratch_operands = 0 : i64, tpu.core_type = #tpu.core_type<tc>, window_params = [{transform_indices = @transform_0, window_bounds = array<i64: 128, 144>}, {pipeline_mode = #tpu.pipeline_mode<synchronous>, transform_indices = @transform_1, window_bounds = array<i64: 144, 24>}, {pipeline_mode = #tpu.pipeline_mode<synchronous>, transform_indices = @transform_2, window_bounds = array<i64: 1, 24>}, {transform_indices = @transform_3, window_bounds = array<i64: 128, 24>}]} {
    %c0 = arith.constant 0 : index
    %c0_0 = arith.constant 0 : index
    %0 = vector.load %arg1[%c0, %c0_0] : memref<128x144xbf16, #tpu.memory_space<vmem>>, vector<128x144xbf16>
    %c0_1 = arith.constant 0 : index
    %c0_2 = arith.constant 0 : index
    %1 = vector.load %arg2[%c0_1, %c0_2] : memref<144x24xbf16, #tpu.memory_space<vmem>>, vector<144x24xbf16>
    %cst = arith.constant dense<0.000000e+00> : vector<128x24xf32>
    %2 = tpu.matmul %0, %1, %cst {dimension_numbers = #tpu.dot_dimension_numbers<[1], [0], [0], [1], [0, 0, 1, 1], [], []>} : vector<128x144xbf16>, vector<144x24xbf16>, vector<128x24xf32> -> vector<128x24xf32>
    %c0_3 = arith.constant 0 : index
    %c0_4 = arith.constant 0 : index
    %3 = vector.load %arg3[%c0_3, %c0_4] : memref<1x24xf32, #tpu.memory_space<vmem>>, vector<1x24xf32>
    %4 = vector.broadcast %3 : vector<1x24xf32> to vector<128x24xf32>
    %5 = arith.addf %2, %4 : vector<128x24xf32>
    %cst_5 = arith.constant 0.000000e+00 : f32
    %6 = vector.broadcast %cst_5 : f32 to vector<128x24xf32>
    %7 = arith.maximumf %5, %6 : vector<128x24xf32>
    %8 = arith.truncf %7 : vector<128x24xf32> to vector<128x24xbf16>
    %c0_6 = arith.constant 0 : index
    %c0_7 = arith.constant 0 : index
    %9 = vector.load %arg4[%c0_6, %c0_7] : memref<128x24xbf16, #tpu.memory_space<vmem>>, vector<128x24xbf16>
    tpu.vector_store %arg4[%c0_6, %c0_7], %8 {strides = array<i32>} : memref<128x24xbf16, #tpu.memory_space<vmem>>, vector<128x24xbf16>,
    return
  }
  func.func @transform_0(%arg0: i32) -> (i32, i32) {
    %c0_i32 = arith.constant 0 : i32
    %c0_i32_0 = arith.constant 0 : i32
    return %arg0, %c0_i32 : i32, i32
  }
  func.func @transform_1(%arg0: i32) -> (i32, i32) {
    %c0_i32 = arith.constant 0 : i32
    %c0_i32_0 = arith.constant 0 : i32
    %c0_i32_1 = arith.constant 0 : i32
    return %c0_i32, %c0_i32_0 : i32, i32
  }
  func.func @transform_2(%arg0: i32) -> (i32, i32) {
    %c0_i32 = arith.constant 0 : i32
    %c0_i32_0 = arith.constant 0 : i32
    %c0_i32_1 = arith.constant 0 : i32
    return %c0_i32, %c0_i32_0 : i32, i32
  }
  func.func @transform_3(%arg0: i32) -> (i32, i32) {
    %c0_i32 = arith.constant 0 : i32
    %c0_i32_0 = arith.constant 0 : i32
    return %arg0, %c0_i32 : i32, i32
  }
}

module attributes {stable_mosaic.version = 11 : i64} {
  func.func @_gemm_bias_kernel(%arg0: i32, %arg1: memref<32x216xbf16, #tpu.memory_space<vmem>>, %arg2: memref<216x32xbf16, #tpu.memory_space<vmem>>, %arg3: memref<1x32xf32, #tpu.memory_space<vmem>>, %arg4: memref<32x32xbf16, #tpu.memory_space<vmem>>) attributes {dimension_semantics = [#tpu.dimension_semantics<parallel>], iteration_bounds = array<i64: 1>, scalar_prefetch = 0 : i64, scratch_operands = 0 : i64, tpu.core_type = #tpu.core_type<tc>, window_params = [{transform_indices = @transform_0, window_bounds = array<i64: 32, 216>}, {pipeline_mode = #tpu.pipeline_mode<synchronous>, transform_indices = @transform_1, window_bounds = array<i64: 216, 32>}, {pipeline_mode = #tpu.pipeline_mode<synchronous>, transform_indices = @transform_2, window_bounds = array<i64: 1, 32>}, {transform_indices = @transform_3, window_bounds = array<i64: 32, 32>}]} {
    %c0 = arith.constant 0 : index
    %c0_0 = arith.constant 0 : index
    %0 = vector.load %arg1[%c0, %c0_0] : memref<32x216xbf16, #tpu.memory_space<vmem>>, vector<32x216xbf16>
    %c0_1 = arith.constant 0 : index
    %c0_2 = arith.constant 0 : index
    %1 = vector.load %arg2[%c0_1, %c0_2] : memref<216x32xbf16, #tpu.memory_space<vmem>>, vector<216x32xbf16>
    %cst = arith.constant dense<0.000000e+00> : vector<32x32xf32>
    %2 = tpu.matmul %0, %1, %cst {dimension_numbers = #tpu.dot_dimension_numbers<[1], [0], [0], [1], [0, 0, 1, 1], [], []>} : vector<32x216xbf16>, vector<216x32xbf16>, vector<32x32xf32> -> vector<32x32xf32>
    %c0_3 = arith.constant 0 : index
    %c0_4 = arith.constant 0 : index
    %3 = vector.load %arg3[%c0_3, %c0_4] : memref<1x32xf32, #tpu.memory_space<vmem>>, vector<1x32xf32>
    %4 = vector.broadcast %3 : vector<1x32xf32> to vector<32x32xf32>
    %5 = arith.addf %2, %4 : vector<32x32xf32>
    %cst_5 = arith.constant 0.000000e+00 : f32
    %6 = vector.broadcast %cst_5 : f32 to vector<32x32xf32>
    %7 = arith.maximumf %5, %6 : vector<32x32xf32>
    %8 = arith.truncf %7 : vector<32x32xf32> to vector<32x32xbf16>
    %c0_6 = arith.constant 0 : index
    %c0_7 = arith.constant 0 : index
    %9 = vector.load %arg4[%c0_6, %c0_7] : memref<32x32xbf16, #tpu.memory_space<vmem>>, vector<32x32xbf16>
    tpu.vector_store %arg4[%c0_6, %c0_7], %8 {strides = array<i32>} : memref<32x32xbf16, #tpu.memory_space<vmem>>, vector<32x32xbf16>,
    return
  }
  func.func @transform_0(%arg0: i32) -> (i32, i32) {
    %c0_i32 = arith.constant 0 : i32
    %c0_i32_0 = arith.constant 0 : i32
    return %arg0, %c0_i32 : i32, i32
  }
  func.func @transform_1(%arg0: i32) -> (i32, i32) {
    %c0_i32 = arith.constant 0 : i32
    %c0_i32_0 = arith.constant 0 : i32
    %c0_i32_1 = arith.constant 0 : i32
    return %c0_i32, %c0_i32_0 : i32, i32
  }
  func.func @transform_2(%arg0: i32) -> (i32, i32) {
    %c0_i32 = arith.constant 0 : i32
    %c0_i32_0 = arith.constant 0 : i32
    %c0_i32_1 = arith.constant 0 : i32
    return %c0_i32, %c0_i32_0 : i32, i32
  }
  func.func @transform_3(%arg0: i32) -> (i32, i32) {
    %c0_i32 = arith.constant 0 : i32
    %c0_i32_0 = arith.constant 0 : i32
    return %arg0, %c0_i32 : i32, i32
  }
}

module attributes {stable_mosaic.version = 11 : i64} {
  func.func @_gemm_bias_kernel(%arg0: i32, %arg1: memref<8x288xbf16, #tpu.memory_space<vmem>>, %arg2: memref<288x96xbf16, #tpu.memory_space<vmem>>, %arg3: memref<1x96xf32, #tpu.memory_space<vmem>>, %arg4: memref<8x96xbf16, #tpu.memory_space<vmem>>) attributes {dimension_semantics = [#tpu.dimension_semantics<parallel>], iteration_bounds = array<i64: 1>, scalar_prefetch = 0 : i64, scratch_operands = 0 : i64, tpu.core_type = #tpu.core_type<tc>, window_params = [{transform_indices = @transform_0, window_bounds = array<i64: 8, 288>}, {pipeline_mode = #tpu.pipeline_mode<synchronous>, transform_indices = @transform_1, window_bounds = array<i64: 288, 96>}, {pipeline_mode = #tpu.pipeline_mode<synchronous>, transform_indices = @transform_2, window_bounds = array<i64: 1, 96>}, {transform_indices = @transform_3, window_bounds = array<i64: 8, 96>}]} {
    %c0 = arith.constant 0 : index
    %c0_0 = arith.constant 0 : index
    %0 = vector.load %arg1[%c0, %c0_0] : memref<8x288xbf16, #tpu.memory_space<vmem>>, vector<8x288xbf16>
    %c0_1 = arith.constant 0 : index
    %c0_2 = arith.constant 0 : index
    %1 = vector.load %arg2[%c0_1, %c0_2] : memref<288x96xbf16, #tpu.memory_space<vmem>>, vector<288x96xbf16>
    %cst = arith.constant dense<0.000000e+00> : vector<8x96xf32>
    %2 = tpu.matmul %0, %1, %cst {dimension_numbers = #tpu.dot_dimension_numbers<[1], [0], [0], [1], [0, 0, 1, 1], [], []>} : vector<8x288xbf16>, vector<288x96xbf16>, vector<8x96xf32> -> vector<8x96xf32>
    %c0_3 = arith.constant 0 : index
    %c0_4 = arith.constant 0 : index
    %3 = vector.load %arg3[%c0_3, %c0_4] : memref<1x96xf32, #tpu.memory_space<vmem>>, vector<1x96xf32>
    %4 = vector.broadcast %3 : vector<1x96xf32> to vector<8x96xf32>
    %5 = arith.addf %2, %4 : vector<8x96xf32>
    %cst_5 = arith.constant 0.000000e+00 : f32
    %6 = vector.broadcast %cst_5 : f32 to vector<8x96xf32>
    %7 = arith.maximumf %5, %6 : vector<8x96xf32>
    %8 = arith.truncf %7 : vector<8x96xf32> to vector<8x96xbf16>
    %c0_6 = arith.constant 0 : index
    %c0_7 = arith.constant 0 : index
    %9 = vector.load %arg4[%c0_6, %c0_7] : memref<8x96xbf16, #tpu.memory_space<vmem>>, vector<8x96xbf16>
    tpu.vector_store %arg4[%c0_6, %c0_7], %8 {strides = array<i32>} : memref<8x96xbf16, #tpu.memory_space<vmem>>, vector<8x96xbf16>,
    return
  }
  func.func @transform_0(%arg0: i32) -> (i32, i32) {
    %c0_i32 = arith.constant 0 : i32
    %c0_i32_0 = arith.constant 0 : i32
    return %arg0, %c0_i32 : i32, i32
  }
  func.func @transform_1(%arg0: i32) -> (i32, i32) {
    %c0_i32 = arith.constant 0 : i32
    %c0_i32_0 = arith.constant 0 : i32
    %c0_i32_1 = arith.constant 0 : i32
    return %c0_i32, %c0_i32_0 : i32, i32
  }
  func.func @transform_2(%arg0: i32) -> (i32, i32) {
    %c0_i32 = arith.constant 0 : i32
    %c0_i32_0 = arith.constant 0 : i32
    %c0_i32_1 = arith.constant 0 : i32
    return %c0_i32, %c0_i32_0 : i32, i32
  }
  func.func @transform_3(%arg0: i32) -> (i32, i32) {
    %c0_i32 = arith.constant 0 : i32
    %c0_i32_0 = arith.constant 0 : i32
    return %arg0, %c0_i32 : i32, i32
  }
}

module attributes {stable_mosaic.version = 11 : i64} {
  func.func @_gemm_bias_kernel(%arg0: i32, %arg1: memref<2x864xbf16, #tpu.memory_space<vmem>>, %arg2: memref<864x64xbf16, #tpu.memory_space<vmem>>, %arg3: memref<1x64xf32, #tpu.memory_space<vmem>>, %arg4: memref<2x64xbf16, #tpu.memory_space<vmem>>) attributes {dimension_semantics = [#tpu.dimension_semantics<parallel>], iteration_bounds = array<i64: 1>, scalar_prefetch = 0 : i64, scratch_operands = 0 : i64, tpu.core_type = #tpu.core_type<tc>, window_params = [{transform_indices = @transform_0, window_bounds = array<i64: 2, 864>}, {pipeline_mode = #tpu.pipeline_mode<synchronous>, transform_indices = @transform_1, window_bounds = array<i64: 864, 64>}, {pipeline_mode = #tpu.pipeline_mode<synchronous>, transform_indices = @transform_2, window_bounds = array<i64: 1, 64>}, {transform_indices = @transform_3, window_bounds = array<i64: 2, 64>}]} {
    %c0 = arith.constant 0 : index
    %c0_0 = arith.constant 0 : index
    %0 = vector.load %arg1[%c0, %c0_0] : memref<2x864xbf16, #tpu.memory_space<vmem>>, vector<2x864xbf16>
    %c0_1 = arith.constant 0 : index
    %c0_2 = arith.constant 0 : index
    %1 = vector.load %arg2[%c0_1, %c0_2] : memref<864x64xbf16, #tpu.memory_space<vmem>>, vector<864x64xbf16>
    %cst = arith.constant dense<0.000000e+00> : vector<2x64xf32>
    %2 = tpu.matmul %0, %1, %cst {dimension_numbers = #tpu.dot_dimension_numbers<[1], [0], [0], [1], [0, 0, 1, 1], [], []>} : vector<2x864xbf16>, vector<864x64xbf16>, vector<2x64xf32> -> vector<2x64xf32>
    %c0_3 = arith.constant 0 : index
    %c0_4 = arith.constant 0 : index
    %3 = vector.load %arg3[%c0_3, %c0_4] : memref<1x64xf32, #tpu.memory_space<vmem>>, vector<1x64xf32>
    %4 = vector.broadcast %3 : vector<1x64xf32> to vector<2x64xf32>
    %5 = arith.addf %2, %4 : vector<2x64xf32>
    %cst_5 = arith.constant 0.000000e+00 : f32
    %6 = vector.broadcast %cst_5 : f32 to vector<2x64xf32>
    %7 = arith.maximumf %5, %6 : vector<2x64xf32>
    %8 = arith.truncf %7 : vector<2x64xf32> to vector<2x64xbf16>
    %c0_6 = arith.constant 0 : index
    %c0_7 = arith.constant 0 : index
    %9 = vector.load %arg4[%c0_6, %c0_7] : memref<2x64xbf16, #tpu.memory_space<vmem>>, vector<2x64xbf16>
    tpu.vector_store %arg4[%c0_6, %c0_7], %8 {strides = array<i32>} : memref<2x64xbf16, #tpu.memory_space<vmem>>, vector<2x64xbf16>,
    return
  }
  func.func @transform_0(%arg0: i32) -> (i32, i32) {
    %c0_i32 = arith.constant 0 : i32
    %c0_i32_0 = arith.constant 0 : i32
    return %arg0, %c0_i32 : i32, i32
  }
  func.func @transform_1(%arg0: i32) -> (i32, i32) {
    %c0_i32 = arith.constant 0 : i32
    %c0_i32_0 = arith.constant 0 : i32
    %c0_i32_1 = arith.constant 0 : i32
    return %c0_i32, %c0_i32_0 : i32, i32
  }
  func.func @transform_2(%arg0: i32) -> (i32, i32) {
    %c0_i32 = arith.constant 0 : i32
    %c0_i32_0 = arith.constant 0 : i32
    %c0_i32_1 = arith.constant 0 : i32
    return %c0_i32, %c0_i32_0 : i32, i32
  }
  func.func @transform_3(%arg0: i32) -> (i32, i32) {
    %c0_i32 = arith.constant 0 : i32
    %c0_i32_0 = arith.constant 0 : i32
    return %arg0, %c0_i32 : i32, i32
  }
}

module attributes {stable_mosaic.version = 11 : i64} {
  func.func @_trans_skip_kernel(%arg0: i32, %arg1: memref<2x576xbf16, #tpu.memory_space<vmem>>, %arg2: memref<576x128xbf16, #tpu.memory_space<vmem>>, %arg3: memref<1x128xf32, #tpu.memory_space<vmem>>, %arg4: memref<2x384xbf16, #tpu.memory_space<vmem>>, %arg5: memref<384x128xbf16, #tpu.memory_space<vmem>>, %arg6: memref<1x128xf32, #tpu.memory_space<vmem>>, %arg7: memref<2x128xbf16, #tpu.memory_space<vmem>>) attributes {dimension_semantics = [#tpu.dimension_semantics<parallel>], iteration_bounds = array<i64: 1>, scalar_prefetch = 0 : i64, scratch_operands = 0 : i64, tpu.core_type = #tpu.core_type<tc>, window_params = [{transform_indices = @transform_0, window_bounds = array<i64: 2, 576>}, {pipeline_mode = #tpu.pipeline_mode<synchronous>, transform_indices = @transform_1, window_bounds = array<i64: 576, 128>}, {pipeline_mode = #tpu.pipeline_mode<synchronous>, transform_indices = @transform_2, window_bounds = array<i64: 1, 128>}, {transform_indices = @transform_3, window_bounds = array<i64: 2, 384>}, {pipeline_mode = #tpu.pipeline_mode<synchronous>, transform_indices = @transform_4, window_bounds = array<i64: 384, 128>}, {pipeline_mode = #tpu.pipeline_mode<synchronous>, transform_indices = @transform_5, window_bounds = array<i64: 1, 128>}, {transform_indices = @transform_6, window_bounds = array<i64: 2, 128>}]} {
    %c0 = arith.constant 0 : index
    %c0_0 = arith.constant 0 : index
    %0 = vector.load %arg1[%c0, %c0_0] : memref<2x576xbf16, #tpu.memory_space<vmem>>, vector<2x576xbf16>
    %c0_1 = arith.constant 0 : index
    %c0_2 = arith.constant 0 : index
    %1 = vector.load %arg2[%c0_1, %c0_2] : memref<576x128xbf16, #tpu.memory_space<vmem>>, vector<576x128xbf16>
    %cst = arith.constant dense<0.000000e+00> : vector<2x128xf32>
    %2 = tpu.matmul %0, %1, %cst {dimension_numbers = #tpu.dot_dimension_numbers<[1], [0], [0], [1], [0, 0, 1, 1], [], []>} : vector<2x576xbf16>, vector<576x128xbf16>, vector<2x128xf32> -> vector<2x128xf32>
    %c0_3 = arith.constant 0 : index
    %c0_4 = arith.constant 0 : index
    %3 = vector.load %arg3[%c0_3, %c0_4] : memref<1x128xf32, #tpu.memory_space<vmem>>, vector<1x128xf32>
    %4 = vector.broadcast %3 : vector<1x128xf32> to vector<2x128xf32>
    %5 = arith.addf %2, %4 : vector<2x128xf32>
    %cst_5 = arith.constant 0.000000e+00 : f32
    %6 = vector.broadcast %cst_5 : f32 to vector<2x128xf32>
    %7 = arith.maximumf %5, %6 : vector<2x128xf32>
    %c0_6 = arith.constant 0 : index
    %c0_7 = arith.constant 0 : index
    %8 = vector.load %arg4[%c0_6, %c0_7] : memref<2x384xbf16, #tpu.memory_space<vmem>>, vector<2x384xbf16>
    %c0_8 = arith.constant 0 : index
    %c0_9 = arith.constant 0 : index
    %9 = vector.load %arg5[%c0_8, %c0_9] : memref<384x128xbf16, #tpu.memory_space<vmem>>, vector<384x128xbf16>
    %cst_10 = arith.constant dense<0.000000e+00> : vector<2x128xf32>
    %10 = tpu.matmul %8, %9, %cst_10 {dimension_numbers = #tpu.dot_dimension_numbers<[1], [0], [0], [1], [0, 0, 1, 1], [], []>} : vector<2x384xbf16>, vector<384x128xbf16>, vector<2x128xf32> -> vector<2x128xf32>
    %11 = arith.addf %7, %10 : vector<2x128xf32>
    %c0_11 = arith.constant 0 : index
    %c0_12 = arith.constant 0 : index
    %12 = vector.load %arg6[%c0_11, %c0_12] : memref<1x128xf32, #tpu.memory_space<vmem>>, vector<1x128xf32>
    %13 = vector.broadcast %12 : vector<1x128xf32> to vector<2x128xf32>
    %14 = arith.addf %11, %13 : vector<2x128xf32>
    %15 = arith.truncf %14 : vector<2x128xf32> to vector<2x128xbf16>
    %c0_13 = arith.constant 0 : index
    %c0_14 = arith.constant 0 : index
    %16 = vector.load %arg7[%c0_13, %c0_14] : memref<2x128xbf16, #tpu.memory_space<vmem>>, vector<2x128xbf16>
    tpu.vector_store %arg7[%c0_13, %c0_14], %15 {strides = array<i32>} : memref<2x128xbf16, #tpu.memory_space<vmem>>, vector<2x128xbf16>,
    return
  }
  func.func @transform_0(%arg0: i32) -> (i32, i32) {
    %c0_i32 = arith.constant 0 : i32
    %c0_i32_0 = arith.constant 0 : i32
    return %arg0, %c0_i32 : i32, i32
  }
  func.func @transform_1(%arg0: i32) -> (i32, i32) {
    %c0_i32 = arith.constant 0 : i32
    %c0_i32_0 = arith.constant 0 : i32
    %c0_i32_1 = arith.constant 0 : i32
    return %c0_i32, %c0_i32_0 : i32, i32
  }
  func.func @transform_2(%arg0: i32) -> (i32, i32) {
    %c0_i32 = arith.constant 0 : i32
    %c0_i32_0 = arith.constant 0 : i32
    %c0_i32_1 = arith.constant 0 : i32
    return %c0_i32, %c0_i32_0 : i32, i32
  }
  func.func @transform_3(%arg0: i32) -> (i32, i32) {
    %c0_i32 = arith.constant 0 : i32
    %c0_i32_0 = arith.constant 0 : i32
    return %arg0, %c0_i32 : i32, i32
  }
  func.func @transform_4(%arg0: i32) -> (i32, i32) {
    %c0_i32 = arith.constant 0 : i32
    %c0_i32_0 = arith.constant 0 : i32
    %c0_i32_1 = arith.constant 0 : i32
    return %c0_i32, %c0_i32_0 : i32, i32
  }
  func.func @transform_5(%arg0: i32) -> (i32, i32) {
    %c0_i32 = arith.constant 0 : i32
    %c0_i32_0 = arith.constant 0 : i32
    %c0_i32_1 = arith.constant 0 : i32
    return %c0_i32, %c0_i32_0 : i32, i32
  }
  func.func @transform_6(%arg0: i32) -> (i32, i32) {
    %c0_i32 = arith.constant 0 : i32
    %c0_i32_0 = arith.constant 0 : i32
    return %arg0, %c0_i32 : i32, i32
  }
}

module attributes {stable_mosaic.version = 11 : i64} {
  func.func @_trans_skip_kernel(%arg0: i32, %arg1: memref<8x288xbf16, #tpu.memory_space<vmem>>, %arg2: memref<288x64xbf16, #tpu.memory_space<vmem>>, %arg3: memref<1x64xf32, #tpu.memory_space<vmem>>, %arg4: memref<8x128xbf16, #tpu.memory_space<vmem>>, %arg5: memref<128x64xbf16, #tpu.memory_space<vmem>>, %arg6: memref<1x64xf32, #tpu.memory_space<vmem>>, %arg7: memref<8x64xbf16, #tpu.memory_space<vmem>>) attributes {dimension_semantics = [#tpu.dimension_semantics<parallel>], iteration_bounds = array<i64: 1>, scalar_prefetch = 0 : i64, scratch_operands = 0 : i64, tpu.core_type = #tpu.core_type<tc>, window_params = [{transform_indices = @transform_0, window_bounds = array<i64: 8, 288>}, {pipeline_mode = #tpu.pipeline_mode<synchronous>, transform_indices = @transform_1, window_bounds = array<i64: 288, 64>}, {pipeline_mode = #tpu.pipeline_mode<synchronous>, transform_indices = @transform_2, window_bounds = array<i64: 1, 64>}, {transform_indices = @transform_3, window_bounds = array<i64: 8, 128>}, {pipeline_mode = #tpu.pipeline_mode<synchronous>, transform_indices = @transform_4, window_bounds = array<i64: 128, 64>}, {pipeline_mode = #tpu.pipeline_mode<synchronous>, transform_indices = @transform_5, window_bounds = array<i64: 1, 64>}, {transform_indices = @transform_6, window_bounds = array<i64: 8, 64>}]} {
    %c0 = arith.constant 0 : index
    %c0_0 = arith.constant 0 : index
    %0 = vector.load %arg1[%c0, %c0_0] : memref<8x288xbf16, #tpu.memory_space<vmem>>, vector<8x288xbf16>
    %c0_1 = arith.constant 0 : index
    %c0_2 = arith.constant 0 : index
    %1 = vector.load %arg2[%c0_1, %c0_2] : memref<288x64xbf16, #tpu.memory_space<vmem>>, vector<288x64xbf16>
    %cst = arith.constant dense<0.000000e+00> : vector<8x64xf32>
    %2 = tpu.matmul %0, %1, %cst {dimension_numbers = #tpu.dot_dimension_numbers<[1], [0], [0], [1], [0, 0, 1, 1], [], []>} : vector<8x288xbf16>, vector<288x64xbf16>, vector<8x64xf32> -> vector<8x64xf32>
    %c0_3 = arith.constant 0 : index
    %c0_4 = arith.constant 0 : index
    %3 = vector.load %arg3[%c0_3, %c0_4] : memref<1x64xf32, #tpu.memory_space<vmem>>, vector<1x64xf32>
    %4 = vector.broadcast %3 : vector<1x64xf32> to vector<8x64xf32>
    %5 = arith.addf %2, %4 : vector<8x64xf32>
    %cst_5 = arith.constant 0.000000e+00 : f32
    %6 = vector.broadcast %cst_5 : f32 to vector<8x64xf32>
    %7 = arith.maximumf %5, %6 : vector<8x64xf32>
    %c0_6 = arith.constant 0 : index
    %c0_7 = arith.constant 0 : index
    %8 = vector.load %arg4[%c0_6, %c0_7] : memref<8x128xbf16, #tpu.memory_space<vmem>>, vector<8x128xbf16>
    %c0_8 = arith.constant 0 : index
    %c0_9 = arith.constant 0 : index
    %9 = vector.load %arg5[%c0_8, %c0_9] : memref<128x64xbf16, #tpu.memory_space<vmem>>, vector<128x64xbf16>
    %cst_10 = arith.constant dense<0.000000e+00> : vector<8x64xf32>
    %10 = tpu.matmul %8, %9, %cst_10 {dimension_numbers = #tpu.dot_dimension_numbers<[1], [0], [0], [1], [0, 0, 1, 1], [], []>} : vector<8x128xbf16>, vector<128x64xbf16>, vector<8x64xf32> -> vector<8x64xf32>
    %11 = arith.addf %7, %10 : vector<8x64xf32>
    %c0_11 = arith.constant 0 : index
    %c0_12 = arith.constant 0 : index
    %12 = vector.load %arg6[%c0_11, %c0_12] : memref<1x64xf32, #tpu.memory_space<vmem>>, vector<1x64xf32>
    %13 = vector.broadcast %12 : vector<1x64xf32> to vector<8x64xf32>
    %14 = arith.addf %11, %13 : vector<8x64xf32>
    %15 = arith.truncf %14 : vector<8x64xf32> to vector<8x64xbf16>
    %c0_13 = arith.constant 0 : index
    %c0_14 = arith.constant 0 : index
    %16 = vector.load %arg7[%c0_13, %c0_14] : memref<8x64xbf16, #tpu.memory_space<vmem>>, vector<8x64xbf16>
    tpu.vector_store %arg7[%c0_13, %c0_14], %15 {strides = array<i32>} : memref<8x64xbf16, #tpu.memory_space<vmem>>, vector<8x64xbf16>,
    return
  }
  func.func @transform_0(%arg0: i32) -> (i32, i32) {
    %c0_i32 = arith.constant 0 : i32
    %c0_i32_0 = arith.constant 0 : i32
    return %arg0, %c0_i32 : i32, i32
  }
  func.func @transform_1(%arg0: i32) -> (i32, i32) {
    %c0_i32 = arith.constant 0 : i32
    %c0_i32_0 = arith.constant 0 : i32
    %c0_i32_1 = arith.constant 0 : i32
    return %c0_i32, %c0_i32_0 : i32, i32
  }
  func.func @transform_2(%arg0: i32) -> (i32, i32) {
    %c0_i32 = arith.constant 0 : i32
    %c0_i32_0 = arith.constant 0 : i32
    %c0_i32_1 = arith.constant 0 : i32
    return %c0_i32, %c0_i32_0 : i32, i32
  }
  func.func @transform_3(%arg0: i32) -> (i32, i32) {
    %c0_i32 = arith.constant 0 : i32
    %c0_i32_0 = arith.constant 0 : i32
    return %arg0, %c0_i32 : i32, i32
  }
  func.func @transform_4(%arg0: i32) -> (i32, i32) {
    %c0_i32 = arith.constant 0 : i32
    %c0_i32_0 = arith.constant 0 : i32
    %c0_i32_1 = arith.constant 0 : i32
    return %c0_i32, %c0_i32_0 : i32, i32
  }
  func.func @transform_5(%arg0: i32) -> (i32, i32) {
    %c0_i32 = arith.constant 0 : i32
    %c0_i32_0 = arith.constant 0 : i32
    %c0_i32_1 = arith.constant 0 : i32
    return %c0_i32, %c0_i32_0 : i32, i32
  }
  func.func @transform_6(%arg0: i32) -> (i32, i32) {
    %c0_i32 = arith.constant 0 : i32
    %c0_i32_0 = arith.constant 0 : i32
    return %arg0, %c0_i32 : i32, i32
  }
}

module attributes {stable_mosaic.version = 11 : i64} {
  func.func @_trans_skip_kernel(%arg0: i32, %arg1: memref<32x144xbf16, #tpu.memory_space<vmem>>, %arg2: memref<144x32xbf16, #tpu.memory_space<vmem>>, %arg3: memref<1x32xf32, #tpu.memory_space<vmem>>, %arg4: memref<32x96xbf16, #tpu.memory_space<vmem>>, %arg5: memref<96x32xbf16, #tpu.memory_space<vmem>>, %arg6: memref<1x32xf32, #tpu.memory_space<vmem>>, %arg7: memref<32x32xbf16, #tpu.memory_space<vmem>>) attributes {dimension_semantics = [#tpu.dimension_semantics<parallel>], iteration_bounds = array<i64: 1>, scalar_prefetch = 0 : i64, scratch_operands = 0 : i64, tpu.core_type = #tpu.core_type<tc>, window_params = [{transform_indices = @transform_0, window_bounds = array<i64: 32, 144>}, {pipeline_mode = #tpu.pipeline_mode<synchronous>, transform_indices = @transform_1, window_bounds = array<i64: 144, 32>}, {pipeline_mode = #tpu.pipeline_mode<synchronous>, transform_indices = @transform_2, window_bounds = array<i64: 1, 32>}, {transform_indices = @transform_3, window_bounds = array<i64: 32, 96>}, {pipeline_mode = #tpu.pipeline_mode<synchronous>, transform_indices = @transform_4, window_bounds = array<i64: 96, 32>}, {pipeline_mode = #tpu.pipeline_mode<synchronous>, transform_indices = @transform_5, window_bounds = array<i64: 1, 32>}, {transform_indices = @transform_6, window_bounds = array<i64: 32, 32>}]} {
    %c0 = arith.constant 0 : index
    %c0_0 = arith.constant 0 : index
    %0 = vector.load %arg1[%c0, %c0_0] : memref<32x144xbf16, #tpu.memory_space<vmem>>, vector<32x144xbf16>
    %c0_1 = arith.constant 0 : index
    %c0_2 = arith.constant 0 : index
    %1 = vector.load %arg2[%c0_1, %c0_2] : memref<144x32xbf16, #tpu.memory_space<vmem>>, vector<144x32xbf16>
    %cst = arith.constant dense<0.000000e+00> : vector<32x32xf32>
    %2 = tpu.matmul %0, %1, %cst {dimension_numbers = #tpu.dot_dimension_numbers<[1], [0], [0], [1], [0, 0, 1, 1], [], []>} : vector<32x144xbf16>, vector<144x32xbf16>, vector<32x32xf32> -> vector<32x32xf32>
    %c0_3 = arith.constant 0 : index
    %c0_4 = arith.constant 0 : index
    %3 = vector.load %arg3[%c0_3, %c0_4] : memref<1x32xf32, #tpu.memory_space<vmem>>, vector<1x32xf32>
    %4 = vector.broadcast %3 : vector<1x32xf32> to vector<32x32xf32>
    %5 = arith.addf %2, %4 : vector<32x32xf32>
    %cst_5 = arith.constant 0.000000e+00 : f32
    %6 = vector.broadcast %cst_5 : f32 to vector<32x32xf32>
    %7 = arith.maximumf %5, %6 : vector<32x32xf32>
    %c0_6 = arith.constant 0 : index
    %c0_7 = arith.constant 0 : index
    %8 = vector.load %arg4[%c0_6, %c0_7] : memref<32x96xbf16, #tpu.memory_space<vmem>>, vector<32x96xbf16>
    %c0_8 = arith.constant 0 : index
    %c0_9 = arith.constant 0 : index
    %9 = vector.load %arg5[%c0_8, %c0_9] : memref<96x32xbf16, #tpu.memory_space<vmem>>, vector<96x32xbf16>
    %cst_10 = arith.constant dense<0.000000e+00> : vector<32x32xf32>
    %10 = tpu.matmul %8, %9, %cst_10 {dimension_numbers = #tpu.dot_dimension_numbers<[1], [0], [0], [1], [0, 0, 1, 1], [], []>} : vector<32x96xbf16>, vector<96x32xbf16>, vector<32x32xf32> -> vector<32x32xf32>
    %11 = arith.addf %7, %10 : vector<32x32xf32>
    %c0_11 = arith.constant 0 : index
    %c0_12 = arith.constant 0 : index
    %12 = vector.load %arg6[%c0_11, %c0_12] : memref<1x32xf32, #tpu.memory_space<vmem>>, vector<1x32xf32>
    %13 = vector.broadcast %12 : vector<1x32xf32> to vector<32x32xf32>
    %14 = arith.addf %11, %13 : vector<32x32xf32>
    %15 = arith.truncf %14 : vector<32x32xf32> to vector<32x32xbf16>
    %c0_13 = arith.constant 0 : index
    %c0_14 = arith.constant 0 : index
    %16 = vector.load %arg7[%c0_13, %c0_14] : memref<32x32xbf16, #tpu.memory_space<vmem>>, vector<32x32xbf16>
    tpu.vector_store %arg7[%c0_13, %c0_14], %15 {strides = array<i32>} : memref<32x32xbf16, #tpu.memory_space<vmem>>, vector<32x32xbf16>,
    return
  }
  func.func @transform_0(%arg0: i32) -> (i32, i32) {
    %c0_i32 = arith.constant 0 : i32
    %c0_i32_0 = arith.constant 0 : i32
    return %arg0, %c0_i32 : i32, i32
  }
  func.func @transform_1(%arg0: i32) -> (i32, i32) {
    %c0_i32 = arith.constant 0 : i32
    %c0_i32_0 = arith.constant 0 : i32
    %c0_i32_1 = arith.constant 0 : i32
    return %c0_i32, %c0_i32_0 : i32, i32
  }
  func.func @transform_2(%arg0: i32) -> (i32, i32) {
    %c0_i32 = arith.constant 0 : i32
    %c0_i32_0 = arith.constant 0 : i32
    %c0_i32_1 = arith.constant 0 : i32
    return %c0_i32, %c0_i32_0 : i32, i32
  }
  func.func @transform_3(%arg0: i32) -> (i32, i32) {
    %c0_i32 = arith.constant 0 : i32
    %c0_i32_0 = arith.constant 0 : i32
    return %arg0, %c0_i32 : i32, i32
  }
  func.func @transform_4(%arg0: i32) -> (i32, i32) {
    %c0_i32 = arith.constant 0 : i32
    %c0_i32_0 = arith.constant 0 : i32
    %c0_i32_1 = arith.constant 0 : i32
    return %c0_i32, %c0_i32_0 : i32, i32
  }
  func.func @transform_5(%arg0: i32) -> (i32, i32) {
    %c0_i32 = arith.constant 0 : i32
    %c0_i32_0 = arith.constant 0 : i32
    %c0_i32_1 = arith.constant 0 : i32
    return %c0_i32, %c0_i32_0 : i32, i32
  }
  func.func @transform_6(%arg0: i32) -> (i32, i32) {
    %c0_i32 = arith.constant 0 : i32
    %c0_i32_0 = arith.constant 0 : i32
    return %arg0, %c0_i32 : i32, i32
  }
}

module attributes {stable_mosaic.version = 11 : i64} {
  func.func @_trans_skip_kernel(%arg0: i32, %arg1: memref<128x72xbf16, #tpu.memory_space<vmem>>, %arg2: memref<72x16xbf16, #tpu.memory_space<vmem>>, %arg3: memref<1x16xf32, #tpu.memory_space<vmem>>, %arg4: memref<128x64xbf16, #tpu.memory_space<vmem>>, %arg5: memref<64x16xbf16, #tpu.memory_space<vmem>>, %arg6: memref<1x16xf32, #tpu.memory_space<vmem>>, %arg7: memref<128x16xbf16, #tpu.memory_space<vmem>>) attributes {dimension_semantics = [#tpu.dimension_semantics<parallel>], iteration_bounds = array<i64: 1>, scalar_prefetch = 0 : i64, scratch_operands = 0 : i64, tpu.core_type = #tpu.core_type<tc>, window_params = [{transform_indices = @transform_0, window_bounds = array<i64: 128, 72>}, {pipeline_mode = #tpu.pipeline_mode<synchronous>, transform_indices = @transform_1, window_bounds = array<i64: 72, 16>}, {pipeline_mode = #tpu.pipeline_mode<synchronous>, transform_indices = @transform_2, window_bounds = array<i64: 1, 16>}, {transform_indices = @transform_3, window_bounds = array<i64: 128, 64>}, {pipeline_mode = #tpu.pipeline_mode<synchronous>, transform_indices = @transform_4, window_bounds = array<i64: 64, 16>}, {pipeline_mode = #tpu.pipeline_mode<synchronous>, transform_indices = @transform_5, window_bounds = array<i64: 1, 16>}, {transform_indices = @transform_6, window_bounds = array<i64: 128, 16>}]} {
    %c0 = arith.constant 0 : index
    %c0_0 = arith.constant 0 : index
    %0 = vector.load %arg1[%c0, %c0_0] : memref<128x72xbf16, #tpu.memory_space<vmem>>, vector<128x72xbf16>
    %c0_1 = arith.constant 0 : index
    %c0_2 = arith.constant 0 : index
    %1 = vector.load %arg2[%c0_1, %c0_2] : memref<72x16xbf16, #tpu.memory_space<vmem>>, vector<72x16xbf16>
    %cst = arith.constant dense<0.000000e+00> : vector<128x16xf32>
    %2 = tpu.matmul %0, %1, %cst {dimension_numbers = #tpu.dot_dimension_numbers<[1], [0], [0], [1], [0, 0, 1, 1], [], []>} : vector<128x72xbf16>, vector<72x16xbf16>, vector<128x16xf32> -> vector<128x16xf32>
    %c0_3 = arith.constant 0 : index
    %c0_4 = arith.constant 0 : index
    %3 = vector.load %arg3[%c0_3, %c0_4] : memref<1x16xf32, #tpu.memory_space<vmem>>, vector<1x16xf32>
    %4 = vector.broadcast %3 : vector<1x16xf32> to vector<128x16xf32>
    %5 = arith.addf %2, %4 : vector<128x16xf32>
    %cst_5 = arith.constant 0.000000e+00 : f32
    %6 = vector.broadcast %cst_5 : f32 to vector<128x16xf32>
    %7 = arith.maximumf %5, %6 : vector<128x16xf32>
    %c0_6 = arith.constant 0 : index
    %c0_7 = arith.constant 0 : index
    %8 = vector.load %arg4[%c0_6, %c0_7] : memref<128x64xbf16, #tpu.memory_space<vmem>>, vector<128x64xbf16>
    %c0_8 = arith.constant 0 : index
    %c0_9 = arith.constant 0 : index
    %9 = vector.load %arg5[%c0_8, %c0_9] : memref<64x16xbf16, #tpu.memory_space<vmem>>, vector<64x16xbf16>
    %cst_10 = arith.constant dense<0.000000e+00> : vector<128x16xf32>
    %10 = tpu.matmul %8, %9, %cst_10 {dimension_numbers = #tpu.dot_dimension_numbers<[1], [0], [0], [1], [0, 0, 1, 1], [], []>} : vector<128x64xbf16>, vector<64x16xbf16>, vector<128x16xf32> -> vector<128x16xf32>
    %11 = arith.addf %7, %10 : vector<128x16xf32>
    %c0_11 = arith.constant 0 : index
    %c0_12 = arith.constant 0 : index
    %12 = vector.load %arg6[%c0_11, %c0_12] : memref<1x16xf32, #tpu.memory_space<vmem>>, vector<1x16xf32>
    %13 = vector.broadcast %12 : vector<1x16xf32> to vector<128x16xf32>
    %14 = arith.addf %11, %13 : vector<128x16xf32>
    %15 = arith.truncf %14 : vector<128x16xf32> to vector<128x16xbf16>
    %c0_13 = arith.constant 0 : index
    %c0_14 = arith.constant 0 : index
    %16 = vector.load %arg7[%c0_13, %c0_14] : memref<128x16xbf16, #tpu.memory_space<vmem>>, vector<128x16xbf16>
    tpu.vector_store %arg7[%c0_13, %c0_14], %15 {strides = array<i32>} : memref<128x16xbf16, #tpu.memory_space<vmem>>, vector<128x16xbf16>,
    return
  }
  func.func @transform_0(%arg0: i32) -> (i32, i32) {
    %c0_i32 = arith.constant 0 : i32
    %c0_i32_0 = arith.constant 0 : i32
    return %arg0, %c0_i32 : i32, i32
  }
  func.func @transform_1(%arg0: i32) -> (i32, i32) {
    %c0_i32 = arith.constant 0 : i32
    %c0_i32_0 = arith.constant 0 : i32
    %c0_i32_1 = arith.constant 0 : i32
    return %c0_i32, %c0_i32_0 : i32, i32
  }
  func.func @transform_2(%arg0: i32) -> (i32, i32) {
    %c0_i32 = arith.constant 0 : i32
    %c0_i32_0 = arith.constant 0 : i32
    %c0_i32_1 = arith.constant 0 : i32
    return %c0_i32, %c0_i32_0 : i32, i32
  }
  func.func @transform_3(%arg0: i32) -> (i32, i32) {
    %c0_i32 = arith.constant 0 : i32
    %c0_i32_0 = arith.constant 0 : i32
    return %arg0, %c0_i32 : i32, i32
  }
  func.func @transform_4(%arg0: i32) -> (i32, i32) {
    %c0_i32 = arith.constant 0 : i32
    %c0_i32_0 = arith.constant 0 : i32
    %c0_i32_1 = arith.constant 0 : i32
    return %c0_i32, %c0_i32_0 : i32, i32
  }
  func.func @transform_5(%arg0: i32) -> (i32, i32) {
    %c0_i32 = arith.constant 0 : i32
    %c0_i32_0 = arith.constant 0 : i32
    %c0_i32_1 = arith.constant 0 : i32
    return %c0_i32, %c0_i32_0 : i32, i32
  }
  func.func @transform_6(%arg0: i32) -> (i32, i32) {
    %c0_i32 = arith.constant 0 : i32
    %c0_i32_0 = arith.constant 0 : i32
    return %arg0, %c0_i32 : i32, i32
  }
}

module attributes {stable_mosaic.version = 11 : i64} {
  func.func @_gemm_bias_kernel(%arg0: i32, %arg1: memref<256x36xbf16, #tpu.memory_space<vmem>>, %arg2: memref<36x8xbf16, #tpu.memory_space<vmem>>, %arg3: memref<1x8xf32, #tpu.memory_space<vmem>>, %arg4: memref<256x8xbf16, #tpu.memory_space<vmem>>) attributes {dimension_semantics = [#tpu.dimension_semantics<parallel>], iteration_bounds = array<i64: 2>, scalar_prefetch = 0 : i64, scratch_operands = 0 : i64, tpu.core_type = #tpu.core_type<tc>, window_params = [{transform_indices = @transform_0, window_bounds = array<i64: 256, 36>}, {pipeline_mode = #tpu.pipeline_mode<synchronous>, transform_indices = @transform_1, window_bounds = array<i64: 36, 8>}, {pipeline_mode = #tpu.pipeline_mode<synchronous>, transform_indices = @transform_2, window_bounds = array<i64: 1, 8>}, {transform_indices = @transform_3, window_bounds = array<i64: 256, 8>}]} {
    %c0 = arith.constant 0 : index
    %c0_0 = arith.constant 0 : index
    %0 = vector.load %arg1[%c0, %c0_0] : memref<256x36xbf16, #tpu.memory_space<vmem>>, vector<256x36xbf16>
    %c0_1 = arith.constant 0 : index
    %c0_2 = arith.constant 0 : index
    %1 = vector.load %arg2[%c0_1, %c0_2] : memref<36x8xbf16, #tpu.memory_space<vmem>>, vector<36x8xbf16>
    %cst = arith.constant dense<0.000000e+00> : vector<256x8xf32>
    %2 = tpu.matmul %0, %1, %cst {dimension_numbers = #tpu.dot_dimension_numbers<[1], [0], [0], [1], [0, 0, 1, 1], [], []>} : vector<256x36xbf16>, vector<36x8xbf16>, vector<256x8xf32> -> vector<256x8xf32>
    %c0_3 = arith.constant 0 : index
    %c0_4 = arith.constant 0 : index
    %3 = vector.load %arg3[%c0_3, %c0_4] : memref<1x8xf32, #tpu.memory_space<vmem>>, vector<1x8xf32>
    %4 = vector.broadcast %3 : vector<1x8xf32> to vector<256x8xf32>
    %5 = arith.addf %2, %4 : vector<256x8xf32>
    %cst_5 = arith.constant 0.000000e+00 : f32
    %6 = vector.broadcast %cst_5 : f32 to vector<256x8xf32>
    %7 = arith.maximumf %5, %6 : vector<256x8xf32>
    %8 = arith.truncf %7 : vector<256x8xf32> to vector<256x8xbf16>
    %c0_6 = arith.constant 0 : index
    %c0_7 = arith.constant 0 : index
    %9 = vector.load %arg4[%c0_6, %c0_7] : memref<256x8xbf16, #tpu.memory_space<vmem>>, vector<256x8xbf16>
    tpu.vector_store %arg4[%c0_6, %c0_7], %8 {strides = array<i32>} : memref<256x8xbf16, #tpu.memory_space<vmem>>, vector<256x8xbf16>,
    return
  }
  func.func @transform_0(%arg0: i32) -> (i32, i32) {
    %c0_i32 = arith.constant 0 : i32
    %c0_i32_0 = arith.constant 0 : i32
    return %arg0, %c0_i32 : i32, i32
  }
  func.func @transform_1(%arg0: i32) -> (i32, i32) {
    %c0_i32 = arith.constant 0 : i32
    %c0_i32_0 = arith.constant 0 : i32
    %c0_i32_1 = arith.constant 0 : i32
    return %c0_i32, %c0_i32_0 : i32, i32
  }
  func.func @transform_2(%arg0: i32) -> (i32, i32) {
    %c0_i32 = arith.constant 0 : i32
    %c0_i32_0 = arith.constant 0 : i32
    %c0_i32_1 = arith.constant 0 : i32
    return %c0_i32, %c0_i32_0 : i32, i32
  }
  func.func @transform_3(%arg0: i32) -> (i32, i32) {
    %c0_i32 = arith.constant 0 : i32
    %c0_i32_0 = arith.constant 0 : i32
    return %arg0, %c0_i32 : i32, i32
  }
}

module attributes {stable_mosaic.version = 11 : i64} {
  func.func @_gemm_bias_kernel(%arg0: i32, %arg1: memref<256x2xbf16, #tpu.memory_space<vmem>>, %arg2: memref<2x3xbf16, #tpu.memory_space<vmem>>, %arg3: memref<1x3xf32, #tpu.memory_space<vmem>>, %arg4: memref<256x3xf32, #tpu.memory_space<vmem>>) attributes {dimension_semantics = [#tpu.dimension_semantics<parallel>], iteration_bounds = array<i64: 8>, scalar_prefetch = 0 : i64, scratch_operands = 0 : i64, tpu.core_type = #tpu.core_type<tc>, window_params = [{transform_indices = @transform_0, window_bounds = array<i64: 256, 2>}, {pipeline_mode = #tpu.pipeline_mode<synchronous>, transform_indices = @transform_1, window_bounds = array<i64: 2, 3>}, {pipeline_mode = #tpu.pipeline_mode<synchronous>, transform_indices = @transform_2, window_bounds = array<i64: 1, 3>}, {transform_indices = @transform_3, window_bounds = array<i64: 256, 3>}]} {
    %c0 = arith.constant 0 : index
    %c0_0 = arith.constant 0 : index
    %0 = vector.load %arg1[%c0, %c0_0] : memref<256x2xbf16, #tpu.memory_space<vmem>>, vector<256x2xbf16>
    %c0_1 = arith.constant 0 : index
    %c0_2 = arith.constant 0 : index
    %1 = vector.load %arg2[%c0_1, %c0_2] : memref<2x3xbf16, #tpu.memory_space<vmem>>, vector<2x3xbf16>
    %cst = arith.constant dense<0.000000e+00> : vector<256x3xf32>
    %2 = tpu.matmul %0, %1, %cst {dimension_numbers = #tpu.dot_dimension_numbers<[1], [0], [0], [1], [0, 0, 1, 1], [], []>} : vector<256x2xbf16>, vector<2x3xbf16>, vector<256x3xf32> -> vector<256x3xf32>
    %c0_3 = arith.constant 0 : index
    %c0_4 = arith.constant 0 : index
    %3 = vector.load %arg3[%c0_3, %c0_4] : memref<1x3xf32, #tpu.memory_space<vmem>>, vector<1x3xf32>
    %4 = vector.broadcast %3 : vector<1x3xf32> to vector<256x3xf32>
    %5 = arith.addf %2, %4 : vector<256x3xf32>
    %c0_5 = arith.constant 0 : index
    %c0_6 = arith.constant 0 : index
    %6 = vector.load %arg4[%c0_5, %c0_6] : memref<256x3xf32, #tpu.memory_space<vmem>>, vector<256x3xf32>
    tpu.vector_store %arg4[%c0_5, %c0_6], %5 {strides = array<i32>} : memref<256x3xf32, #tpu.memory_space<vmem>>, vector<256x3xf32>,
    return
  }
  func.func @transform_0(%arg0: i32) -> (i32, i32) {
    %c0_i32 = arith.constant 0 : i32
    %c0_i32_0 = arith.constant 0 : i32
    return %arg0, %c0_i32 : i32, i32
  }
  func.func @transform_1(%arg0: i32) -> (i32, i32) {
    %c0_i32 = arith.constant 0 : i32
    %c0_i32_0 = arith.constant 0 : i32
    %c0_i32_1 = arith.constant 0 : i32
    return %c0_i32, %c0_i32_0 : i32, i32
  }
  func.func @transform_2(%arg0: i32) -> (i32, i32) {
    %c0_i32 = arith.constant 0 : i32
    %c0_i32_0 = arith.constant 0 : i32
    %c0_i32_1 = arith.constant 0 : i32
    return %c0_i32, %c0_i32_0 : i32, i32
  }
  func.func @transform_3(%arg0: i32) -> (i32, i32) {
    %c0_i32 = arith.constant 0 : i32
    %c0_i32_0 = arith.constant 0 : i32
    return %arg0, %c0_i32 : i32, i32
  }
}

</mosaic_0001>

<llo_original>
// kernel: single_view_forward.11
$region0: #{single_view_forward.11}
  #allocation0 [shape = 'u32[]', space=smem, size = 0x4, offset = 0x4, fixed_abs, tag = 'smem constant byte address 0x4 - core index']
  #allocation1 [shape = 'u32[144,128]{1,0:T(1,128)}', space=vmem, size = 0x12000, scoped, tag = 'internal scratch']
  %s0 = inlined_call_operand.vmem [shape: bf16[512,27], index: 0, kind: input, shape index: {}]
  %s1 = inlined_call_operand.vmem [shape: bf16[27,16], index: 1, kind: input, shape index: {}]
  %s2 = inlined_call_operand.vmem [shape: f32[1,16], index: 2, kind: input, shape index: {}]
  %s3 = inlined_call_operand.vmem [shape: bf16[512,16], index: 3, kind: output, shape index: {}]
  %s4 = sld [smem:[#allocation0]]
  $region45: #{single_view_forward.11} parent=0
    _
  %s6 = ssub.s32 1, %s4
  %s7 = scalar_select 0, %s6, %s4
  loop: start=0, step=1, limit=4
  $region2: #{single_view_forward.11} parent=0 // loop_pre_header
    _
  $region3: #{single_view_forward.11} parent=0 // loop_header
    %s9 = sphi 0, %s13
    %p10 = scmp.ge.s32.totalorder %s9, 4
    %s19 = sphi 0, %s21
    %s22 = sphi 0, %s19
    %s23 = sphi 0, %s22
    %s39 = sphi 0, %s23
    %s43 = sphi 0, %s43
    %s45 = sphi 0, %s43
    %s46 = sphi 0, %s45
    %s60 = sphi 0, %s46
    %s64 = sphi 0, %s64
    %s66 = sphi 0, %s64
    %s67 = sphi 0, %s66
    %s81 = sphi 0, %s67
    %s87 = sphi 0, %s89
    %s90 = sphi 0, %s87
    %s91 = sphi 0, %s90
    %s107 = sphi 0, %s91
  $region4: #{single_view_forward.11} parent=0 // loop_header_branch
    %12 = sbr.rel (%p10) target = $region8
  $region5: #{single_view_forward.11} parent=0 // loop_body
    %s14 = ssub.s32 %s9, 1
    %s15 = ssub.s32 %s9, 2
    %s16 = sadd.s32 %s9, 1
    %s17 = ssub.s32 %s9, %s16
    %p18 = scmp.eq.s32.totalorder %s17, 0
    %s20 = sadd.s32 %s19, 1
    %s21 = scalar_select %p18, %s19, %s20
    %p24 = pneg %p18
    %p25 = scmp.eq.s32.totalorder %s9, 1
    %p26 = por %p24, %p25
    %p27 = scmp.ne.s32.totalorder %s19, %s22
    %p28 = scmp.eq.s32.totalorder %s9, 0
    %p29 = por %p27, %p28
    %p30 = scmp.ne.s32.totalorder %s19, %s22
    %p31 = scmp.eq.s32.totalorder %s14, 1
    %p32 = por %p30, %p31
    %p33 = scmp.ne.s32.totalorder %s22, %s23
    %p34 = scmp.eq.s32.totalorder %s14, 0
    %p35 = por %p33, %p34
    %p36 = scmp.ne.s32.totalorder %s22, %s23
    %p37 = scmp.eq.s32.totalorder %s15, 1
    %p38 = por %p36, %p37
    %p40 = scmp.ne.s32.totalorder %s23, %s39
    %p41 = scmp.eq.s32.totalorder %s15, 0
    %p42 = por %p40, %p41
    %s44 = sadd.s32 %s43, 1
    %p47 = scmp.eq.s32.totalorder %s9, 1
    %p48 = scmp.ne.s32.totalorder %s43, %s45
    %p49 = scmp.eq.s32.totalorder %s9, 0
    %p50 = por %p48, %p49
    %p51 = scmp.ne.s32.totalorder %s43, %s45
    %p52 = scmp.eq.s32.totalorder %s14, 1
    %p53 = por %p51, %p52
    %p54 = scmp.ne.s32.totalorder %s45, %s46
    %p55 = scmp.eq.s32.totalorder %s14, 0
    %p56 = por %p54, %p55
    %p57 = scmp.ne.s32.totalorder %s45, %s46
    %p58 = scmp.eq.s32.totalorder %s15, 1
    %p59 = por %p57, %p58
    %p61 = scmp.ne.s32.totalorder %s46, %s60
    %p62 = scmp.eq.s32.totalorder %s15, 0
    %p63 = por %p61, %p62
    %s65 = sadd.s32 %s64, 1
    %p68 = scmp.eq.s32.totalorder %s9, 1
    %p69 = scmp.ne.s32.totalorder %s64, %s66
    %p70 = scmp.eq.s32.totalorder %s9, 0
    %p71 = por %p69, %p70
    %p72 = scmp.ne.s32.totalorder %s64, %s66
    %p73 = scmp.eq.s32.totalorder %s14, 1
    %p74 = por %p72, %p73
    %p75 = scmp.ne.s32.totalorder %s66, %s67
    %p76 = scmp.eq.s32.totalorder %s14, 0
    %p77 = por %p75, %p76
    %p78 = scmp.ne.s32.totalorder %s66, %s67
    %p79 = scmp.eq.s32.totalorder %s15, 1
    %p80 = por %p78, %p79
    %p82 = scmp.ne.s32.totalorder %s67, %s81
    %p83 = scmp.eq.s32.totalorder %s15, 0
    %p84 = por %p82, %p83
    %s85 = ssub.s32 %s9, %s16
    %p86 = scmp.eq.s32.totalorder %s85, 0
    %s88 = sadd.s32 %s87, 1
    %s89 = scalar_select %p86, %s87, %s88
    %p92 = pneg %p86
    %p93 = scmp.eq.s32.totalorder %s9, 1
    %p94 = por %p92, %p93
    %p95 = scmp.ne.s32.totalorder %s87, %s90
    %p96 = scmp.eq.s32.totalorder %s9, 0
    %p97 = por %p95, %p96
    %p98 = scmp.ne.s32.totalorder %s87, %s90
    %p99 = scmp.eq.s32.totalorder %s14, 1
    %p100 = por %p98, %p99
    %p101 = scmp.ne.s32.totalorder %s90, %s91
    %p102 = scmp.eq.s32.totalorder %s14, 0
    %p103 = por %p101, %p102
    %p104 = scmp.ne.s32.totalorder %s90, %s91
    %p105 = scmp.eq.s32.totalorder %s15, 1
    %p106 = por %p104, %p105
    %p108 = scmp.ne.s32.totalorder %s91, %s107
    %p109 = scmp.eq.s32.totalorder %s15, 0
    %p110 = por %p108, %p109
    %p111 = scmp.le.s32.totalorder 1, %s9
    %p112 = scmp.lt.s32.totalorder %s9, 3
    %p113 = pnand %p111, %p112
    %p114 = pneg %p113
    // Predicated region
    $region9: #{single_view_forward.11} parent=5 // pred_check
      _
    $region10: #{single_view_forward.11} parent=5 // pred_check_branch
      %116 = sbr.rel (%p113) target = $region12
    $region11: #{single_view_forward.11} parent=5 // pred_region
      %s117 = ssub.s32 %s9, 1
      // Predicated region
      $region13: #{single_view_forward.11} parent=11 // pred_check
        %p118 = pneg %p56
      $region14: #{single_view_forward.11} parent=11 // pred_check_branch
        %120 = sbr.rel (%p118) target = $region16
      $region15: #{single_view_forward.11} parent=11 // pred_region
        _
      $region16: #{single_view_forward.11} parent=11 // pred_fallthru
        _
      // Predicated region
      $region17: #{single_view_forward.11} parent=11 // pred_check
        %p121 = pneg %p77
      $region18: #{single_view_forward.11} parent=11 // pred_check_branch
        %123 = sbr.rel (%p121) target = $region20
      $region19: #{single_view_forward.11} parent=11 // pred_region
        _
      $region20: #{single_view_forward.11} parent=11 // pred_fallthru
        _
    $region12: #{single_view_forward.11} parent=5 // pred_fallthru
      _
    %p124 = scmp.lt.s32.totalorder %s9, 2
    // Predicated region
    $region21: #{single_view_forward.11} parent=5 // pred_check
      %p125 = pneg %p124
    $region22: #{single_view_forward.11} parent=5 // pred_check_branch
      %127 = sbr.rel (%p125) target = $region24
    $region23: #{single_view_forward.11} parent=5 // pred_region
      // Predicated region
      $region25: #{single_view_forward.11} parent=23 // pred_check
        %p128 = pneg %p29
      $region26: #{single_view_forward.11} parent=23 // pred_check_branch
        %130 = sbr.rel (%p128) target = $region28
      $region27: #{single_view_forward.11} parent=23 // pred_region
        %s131 = smul.u32 32, %s9
        %p132 = scmp.lt.s32.totalorder %s131, 63
        %s133 = scalar_select %p132, %s131, 63
        %s134 = smul.addr %s133, 4
        %s135 = scalar_lea.vmem %s0, %s134
        %s136 = smul.u32 32, %s9
      $region28: #{single_view_forward.11} parent=23 // pred_fallthru
        _
    $region24: #{single_view_forward.11} parent=5 // pred_fallthru
      _
    %p137 = scmp.le.s32.totalorder 1, %s9
    %p138 = scmp.lt.s32.totalorder %s9, 3
    %p139 = pnand %p137, %p138
    %p140 = pneg %p139
    // Predicated region
    $region29: #{single_view_forward.11} parent=5 // pred_check
      _
    $region30: #{single_view_forward.11} parent=5 // pred_check_branch
      %142 = sbr.rel (%p139) target = $region32
    $region31: #{single_view_forward.11} parent=5 // pred_region
      %s143 = ssub.s32 %s9, 1
      %s144 = smul.u32 32, %s14
      %p145 = scmp.lt.s32.totalorder %s144, 63
      %s146 = scalar_select %p145, %s144, 63
      %s147 = smul.addr %s146, 4
      %s148 = scalar_lea.vmem %s0, %s147
      %p149 = pneg %p35
      %p150 = pneg %p32
      %p151 = pneg %p56
      %p152 = pneg %p53
      %p153 = pneg %p77
      %p154 = pneg %p74
      %p155 = pneg %p103
      %p156 = pneg %p100
      %s157 = smul.u32 32, %s14
      %p158 = scmp.lt.s32.totalorder %s157, 63
      %s159 = scalar_select %p158, %s157, 63
      %s160 = smul.addr %s159, 4
      %s161 = scalar_lea.vmem %s3, %s160
      %s162 = smul.u32 32, %s14
      %p163 = scmp.lt.s32.totalorder %s162, 63
      %s164 = scalar_select %p163, %s162, 63
      %s165 = smul.addr %s164, 4
      %s166 = scalar_lea.vmem %s0, %s165
      %s167 = smul.u32 32, %s14
      %s168 = smul.u32 32, %s14
      %p169 = scmp.lt.s32.totalorder %s168, 63
      %s170 = scalar_select %p169, %s168, 63
      %s171 = smul.addr %s170, 4
      %s172 = scalar_lea.vmem %s3, %s171
      %s173 = smul.u32 32, %s14
      %v175 = vld [vmem:[%s166] sm:$0xf]
      %v176 = vld [vmem:[%s166 + $0x4] sm:$0xf]
      %v177 = vld [vmem:[%s166 + $0x8] sm:$0xf]
      %v178 = vld [vmem:[%s166 + $0xc] sm:$0xf]
      %v179 = vld [vmem:[%s166 + $0x10] sm:$0xf]
      %v180 = vld [vmem:[%s166 + $0x14] sm:$0xf]
      %v181 = vld [vmem:[%s166 + $0x18] sm:$0xf]
      %v182 = vld [vmem:[%s166 + $0x1c] sm:$0xf]
      %v183 = vld [vmem:[%s166 + $0x20] sm:$0xf]
      %v184 = vld [vmem:[%s166 + $0x24] sm:$0xf]
      %v185 = vld [vmem:[%s166 + $0x28] sm:$0xf]
      %v186 = vld [vmem:[%s166 + $0x2c] sm:$0xf]
      %v187 = vld [vmem:[%s166 + $0x30] sm:$0xf]
      %v188 = vld [vmem:[%s166 + $0x34] sm:$0xf]
      %v189 = vld [vmem:[%s166 + $0x38] sm:$0xf]
      %v190 = vld [vmem:[%s166 + $0x3c] sm:$0xf]
      %v191 = vld [vmem:[%s166 + $0x40] sm:$0xf]
      %v192 = vld [vmem:[%s166 + $0x44] sm:$0xf]
      %v193 = vld [vmem:[%s166 + $0x48] sm:$0xf]
      %v194 = vld [vmem:[%s166 + $0x4c] sm:$0xf]
      %v195 = vld [vmem:[%s166 + $0x50] sm:$0xf]
      %v196 = vld [vmem:[%s166 + $0x54] sm:$0xf]
      %v197 = vld [vmem:[%s166 + $0x58] sm:$0xf]
      %v198 = vld [vmem:[%s166 + $0x5c] sm:$0xf]
      %v199 = vld [vmem:[%s166 + $0x60] sm:$0xf]
      %v200 = vld [vmem:[%s166 + $0x64] sm:$0xf]
      %v201 = vld [vmem:[%s166 + $0x68] sm:$0xf]
      %v202 = vld [vmem:[%s166 + $0x6c] sm:$0xf]
      %v203 = vld [vmem:[%s166 + $0x70] sm:$0xf]
      %v204 = vld [vmem:[%s166 + $0x74] sm:$0xf]
      %v205 = vld [vmem:[%s166 + $0x78] sm:$0xf]
      %v206 = vld [vmem:[%s166 + $0x7c] sm:$0xf]
      %v207 = vld [vmem:[%s1] sm:$0xf]
      %v208 = vld [vmem:[%s1 + $0x4] sm:$0xf]
      %v209 = vld [vmem:[%s1 + $0x8] sm:$0xf]
      %v210 = vld [vmem:[%s1 + $0xc] sm:$0x3]
      %v211 = vld [vmem:[%s2] sm:$0x1]
      %v213 = vlaneseq
      %v214 = vshrl.u32 %v213, 7
      %v215 = vsub.s32 0, %v214
      %v216 = vrot.slane %v211, %v215
      %v250 = vunpack.c.l.b16 %v175
      %v251 = vunpack.c.l.b16 %v176
      %v252 = vunpack.c.l.b16 %v177
      %v253 = vunpack.c.l.b16 %v178
      %v254 = vunpack.c.l.b16 %v179
      %v255 = vunpack.c.l.b16 %v180
      %v256 = vunpack.c.l.b16 %v181
      %v257 = vunpack.c.l.b16 %v182
      %v258 = vunpack.c.l.b16 %v183
      %v259 = vunpack.c.l.b16 %v184
      %v260 = vunpack.c.l.b16 %v185
      %v261 = vunpack.c.l.b16 %v186
      %v262 = vunpack.c.l.b16 %v187
      %v263 = vunpack.c.l.b16 %v188
      %v264 = vunpack.c.l.b16 %v189
      %v265 = vunpack.c.l.b16 %v190
      %v266 = vunpack.c.l.b16 %v191
      %v267 = vunpack.c.l.b16 %v192
      %v268 = vunpack.c.l.b16 %v193
      %v269 = vunpack.c.l.b16 %v194
      %v270 = vunpack.c.l.b16 %v195
      %v271 = vunpack.c.l.b16 %v196
      %v272 = vunpack.c.l.b16 %v197
      %v273 = vunpack.c.l.b16 %v198
      %v274 = vunpack.c.l.b16 %v199
      %v275 = vunpack.c.l.b16 %v200
      %v276 = vunpack.c.l.b16 %v201
      %v277 = vunpack.c.l.b16 %v202
      %v278 = vunpack.c.l.b16 %v203
      %v279 = vunpack.c.l.b16 %v204
      %v280 = vunpack.c.l.b16 %v205
      %v281 = vunpack.c.l.b16 %v206
      %v282 = vpack.c.b16 %v251, %v250
      %v283 = vpack.c.b16 %v253, %v252
      %v284 = vpack.c.b16 %v255, %v254
      %v285 = vpack.c.b16 %v257, %v256
      %v286 = vpack.c.b16 %v259, %v258
      %v287 = vpack.c.b16 %v261, %v260
      %v288 = vpack.c.b16 %v263, %v262
      %v289 = vpack.c.b16 %v265, %v264
      %v290 = vpack.c.b16 %v267, %v266
      %v291 = vpack.c.b16 %v269, %v268
      %v292 = vpack.c.b16 %v271, %v270
      %v293 = vpack.c.b16 %v273, %v272
      %v294 = vpack.c.b16 %v275, %v274
      %v295 = vpack.c.b16 %v277, %v276
      %v296 = vpack.c.b16 %v279, %v278
      %v297 = vpack.c.b16 %v281, %v280
      %v302 = vunpack.c.l.b16 %v207
      %v303 = vunpack.c.l.b16 %v208
      %v304 = vunpack.c.l.b16 %v209
      %v305 = vunpack.c.l.b16 %v210
      %v306 = vpack.c.b16 %v303, %v302
      %v307 = vpack.c.b16 %v305, %v304
      %vm309 = vcmask 220160
      %v311 = vsel %vm309, %v282, 0
      %v314 = vsel %vm309, %v283, 0
      %v317 = vsel %vm309, %v284, 0
      %v320 = vsel %vm309, %v285, 0
      %v323 = vsel %vm309, %v286, 0
      %v326 = vsel %vm309, %v287, 0
      %v329 = vsel %vm309, %v288, 0
      %v332 = vsel %vm309, %v289, 0
      %v335 = vsel %vm309, %v290, 0
      %v338 = vsel %vm309, %v291, 0
      %v341 = vsel %vm309, %v292, 0
      %v344 = vsel %vm309, %v293, 0
      %v347 = vsel %vm309, %v294, 0
      %v350 = vsel %vm309, %v295, 0
      %v353 = vsel %vm309, %v296, 0
      %v356 = vsel %vm309, %v297, 0
      %vm358 = vcmask 1044480
      %vm359 = vcmask 1045504
      %v360 = vsel %vm358, 4294967295, 65535
      %v361 = vsel %vm359, %v360, 0
      %v363 = vand.u32 %v307, %v361
      %365 = vmatprep.subr.bf16.mxu0 0
      %366 = vmatpush1.bf16.msra.mxu0 %v306
      %367 = vmatprep.subr.bf16.mxu0 0
      %368 = vmatpush1.bf16.msra.mxu0 %v363
      %369 = vmatprep.subr.bf16.mxu0 0
      %370 = vmatpush1.bf16.msra.mxu0 0
      %371 = vmatprep.subr.bf16.mxu0 0
      %372 = vmatpush1.bf16.msra.mxu0 0
      %373 = vmatprep.subr.bf16.mxu0 0
      %374 = vmatpush1.bf16.msra.mxu0 0
      %375 = vmatprep.subr.bf16.mxu0 0
      %376 = vmatpush1.bf16.msra.mxu0 0
      %377 = vmatprep.subr.bf16.mxu0 0
      %378 = vmatpush1.bf16.msra.mxu0 0
      %379 = vmatprep.subr.bf16.mxu0 0
      %380 = vmatpush1.bf16.msra.mxu0 0
      %381 = vmatprep.subr.bf16.mxu0 0
      %382 = vmatpush1.bf16.msra.mxu0 0
      %383 = vmatprep.subr.bf16.mxu0 0
      %384 = vmatpush1.bf16.msra.mxu0 0
      %385 = vmatprep.subr.bf16.mxu0 0
      %386 = vmatpush1.bf16.msra.mxu0 0
      %387 = vmatprep.subr.bf16.mxu0 0
      %388 = vmatpush1.bf16.msra.mxu0 0
      %389 = vmatprep.subr.bf16.mxu0 0
      %390 = vmatpush1.bf16.msra.mxu0 0
      %391 = vmatprep.subr.bf16.mxu0 0
      %392 = vmatpush1.bf16.msra.mxu0 0
      %393 = vmatprep.subr.bf16.mxu0 0
      %394 = vmatpush1.bf16.msra.mxu0 0
      %395 = vmatprep.subr.bf16.mxu0 0
      %396 = vmatpush1.bf16.msra.mxu0 0
      %397 = vmatprep.mubr.bf16.mxu0 0
      %398 = vmatmul.mubr.bf16.gmra.mrb[0].mxu0 %v311
      %v399 = vpop.f32.mrb[0].mxu0
      %v400 = vadd.f32 %v216, %v399
      %v401 = vpop.f32.mrb[0].mxu0
      %v402 = vpop.f32.mrb[0].mxu0
      %v403 = vadd.f32 %v216, %v402
      %v404 = vpop.f32.mrb[0].mxu0
      %405 = vmatprep.mubr.bf16.mxu0 0
      %406 = vmatmul.mubr.bf16.gmra.mrb[0].mxu0 %v314
      %v407 = vpop.f32.mrb[0].mxu0
      %v408 = vadd.f32 %v216, %v407
      %v409 = vpop.f32.mrb[0].mxu0
      %v410 = vpop.f32.mrb[0].mxu0
      %v411 = vadd.f32 %v216, %v410
      %v412 = vpop.f32.mrb[0].mxu0
      %413 = vmatprep.mubr.bf16.mxu0 0
      %414 = vmatmul.mubr.bf16.gmra.mrb[0].mxu0 %v317
      %v415 = vpop.f32.mrb[0].mxu0
      %v416 = vadd.f32 %v216, %v415
      %v417 = vpop.f32.mrb[0].mxu0
      %v418 = vpop.f32.mrb[0].mxu0
      %v419 = vadd.f32 %v216, %v418
      %v420 = vpop.f32.mrb[0].mxu0
      %421 = vmatprep.mubr.bf16.mxu0 0
      %422 = vmatmul.mubr.bf16.gmra.mrb[0].mxu0 %v320
      %v423 = vpop.f32.mrb[0].mxu0
      %v424 = vadd.f32 %v216, %v423
      %v425 = vpop.f32.mrb[0].mxu0
      %v426 = vpop.f32.mrb[0].mxu0
      %v427 = vadd.f32 %v216, %v426
      %v428 = vpop.f32.mrb[0].mxu0
      %429 = vmatprep.mubr.bf16.mxu0 0
      %430 = vmatmul.mubr.bf16.gmra.mrb[0].mxu0 %v323
      %v431 = vpop.f32.mrb[0].mxu0
      %v432 = vadd.f32 %v216, %v431
      %v433 = vpop.f32.mrb[0].mxu0
      %v434 = vpop.f32.mrb[0].mxu0
      %v435 = vadd.f32 %v216, %v434
      %v436 = vpop.f32.mrb[0].mxu0
      %437 = vmatprep.mubr.bf16.mxu0 0
      %438 = vmatmul.mubr.bf16.gmra.mrb[0].mxu0 %v326
      %v439 = vpop.f32.mrb[0].mxu0
      %v440 = vadd.f32 %v216, %v439
      %v441 = vpop.f32.mrb[0].mxu0
      %v442 = vpop.f32.mrb[0].mxu0
      %v443 = vadd.f32 %v216, %v442
      %v444 = vpop.f32.mrb[0].mxu0
      %445 = vmatprep.mubr.bf16.mxu0 0
      %446 = vmatmul.mubr.bf16.gmra.mrb[0].mxu0 %v329
      %v447 = vpop.f32.mrb[0].mxu0
      %v448 = vadd.f32 %v216, %v447
      %v449 = vpop.f32.mrb[0].mxu0
      %v450 = vpop.f32.mrb[0].mxu0
      %v451 = vadd.f32 %v216, %v450
      %v452 = vpop.f32.mrb[0].mxu0
      %453 = vmatprep.mubr.bf16.mxu0 0
      %454 = vmatmul.mubr.bf16.gmra.mrb[0].mxu0 %v332
      %v455 = vpop.f32.mrb[0].mxu0
      %v456 = vadd.f32 %v216, %v455
      %v457 = vpop.f32.mrb[0].mxu0
      %v458 = vpop.f32.mrb[0].mxu0
      %v459 = vadd.f32 %v216, %v458
      %v460 = vpop.f32.mrb[0].mxu0
      %461 = vmatprep.mubr.bf16.mxu0 0
      %462 = vmatmul.mubr.bf16.gmra.mrb[0].mxu0 %v335
      %v463 = vpop.f32.mrb[0].mxu0
      %v464 = vadd.f32 %v216, %v463
      %v465 = vpop.f32.mrb[0].mxu0
      %v466 = vpop.f32.mrb[0].mxu0
      %v467 = vadd.f32 %v216, %v466
      %v468 = vpop.f32.mrb[0].mxu0
      %469 = vmatprep.mubr.bf16.mxu0 0
      %470 = vmatmul.mubr.bf16.gmra.mrb[0].mxu0 %v338
      %v471 = vpop.f32.mrb[0].mxu0
      %v472 = vadd.f32 %v216, %v471
      %v473 = vpop.f32.mrb[0].mxu0
      %v474 = vpop.f32.mrb[0].mxu0
      %v475 = vadd.f32 %v216, %v474
      %v476 = vpop.f32.mrb[0].mxu0
      %477 = vmatprep.mubr.bf16.mxu0 0
      %478 = vmatmul.mubr.bf16.gmra.mrb[0].mxu0 %v341
      %v479 = vpop.f32.mrb[0].mxu0
      %v480 = vadd.f32 %v216, %v479
      %v481 = vpop.f32.mrb[0].mxu0
      %v482 = vpop.f32.mrb[0].mxu0
      %v483 = vadd.f32 %v216, %v482
      %v484 = vpop.f32.mrb[0].mxu0
      %485 = vmatprep.mubr.bf16.mxu0 0
      %486 = vmatmul.mubr.bf16.gmra.mrb[0].mxu0 %v344
      %v487 = vpop.f32.mrb[0].mxu0
      %v488 = vadd.f32 %v216, %v487
      %v489 = vpop.f32.mrb[0].mxu0
      %v490 = vpop.f32.mrb[0].mxu0
      %v491 = vadd.f32 %v216, %v490
      %v492 = vpop.f32.mrb[0].mxu0
      %493 = vmatprep.mubr.bf16.mxu0 0
      %494 = vmatmul.mubr.bf16.gmra.mrb[0].mxu0 %v347
      %v495 = vpop.f32.mrb[0].mxu0
      %v496 = vadd.f32 %v216, %v495
      %v497 = vpop.f32.mrb[0].mxu0
      %v498 = vpop.f32.mrb[0].mxu0
      %v499 = vadd.f32 %v216, %v498
      %v500 = vpop.f32.mrb[0].mxu0
      %501 = vmatprep.mubr.bf16.mxu0 0
      %502 = vmatmul.mubr.bf16.gmra.mrb[0].mxu0 %v350
      %v503 = vpop.f32.mrb[0].mxu0
      %v504 = vadd.f32 %v216, %v503
      %v505 = vpop.f32.mrb[0].mxu0
      %v506 = vpop.f32.mrb[0].mxu0
      %v507 = vadd.f32 %v216, %v506
      %v508 = vpop.f32.mrb[0].mxu0
      %509 = vmatprep.mubr.bf16.mxu0 0
      %510 = vmatmul.mubr.bf16.gmra.mrb[0].mxu0 %v353
      %v511 = vpop.f32.mrb[0].mxu0
      %v512 = vadd.f32 %v216, %v511
      %v513 = vpop.f32.mrb[0].mxu0
      %v514 = vpop.f32.mrb[0].mxu0
      %v515 = vadd.f32 %v216, %v514
      %v516 = vpop.f32.mrb[0].mxu0
      %517 = vmatprep.mubr.bf16.mxu0 0
      %518 = vmatmul.mubr.bf16.gmra.mrb[0].mxu0 %v356
      %v519 = vpop.f32.mrb[0].mxu0
      %v520 = vadd.f32 %v216, %v519
      %v521 = vpop.f32.mrb[0].mxu0
      %v522 = vpop.f32.mrb[0].mxu0
      %v523 = vadd.f32 %v216, %v522
      %v524 = vpop.f32.mrb[0].mxu0
      %525 = vdwg.mxu0
      %v526 = vmax.f32 %v400, 0.0
      %v527 = vmax.f32 %v403, 0.0
      %v528 = vmax.f32 %v408, 0.0
      %v529 = vmax.f32 %v411, 0.0
      %v530 = vmax.f32 %v416, 0.0
      %v531 = vmax.f32 %v419, 0.0
      %v532 = vmax.f32 %v424, 0.0
      %v533 = vmax.f32 %v427, 0.0
      %v534 = vmax.f32 %v432, 0.0
      %v535 = vmax.f32 %v435, 0.0
      %v536 = vmax.f32 %v440, 0.0
      %v537 = vmax.f32 %v443, 0.0
      %v538 = vmax.f32 %v448, 0.0
      %v539 = vmax.f32 %v451, 0.0
      %v540 = vmax.f32 %v456, 0.0
      %v541 = vmax.f32 %v459, 0.0
      %v542 = vmax.f32 %v464, 0.0
      %v543 = vmax.f32 %v467, 0.0
      %v544 = vmax.f32 %v472, 0.0
      %v545 = vmax.f32 %v475, 0.0
      %v546 = vmax.f32 %v480, 0.0
      %v547 = vmax.f32 %v483, 0.0
      %v548 = vmax.f32 %v488, 0.0
      %v549 = vmax.f32 %v491, 0.0
      %v550 = vmax.f32 %v496, 0.0
      %v551 = vmax.f32 %v499, 0.0
      %v552 = vmax.f32 %v504, 0.0
      %v553 = vmax.f32 %v507, 0.0
      %v554 = vmax.f32 %v512, 0.0
      %v555 = vmax.f32 %v515, 0.0
      %v556 = vmax.f32 %v520, 0.0
      %v557 = vmax.f32 %v523, 0.0
      %v558 = vpack.c.bf16 %v527, %v526
      %v559 = vpack.c.bf16 %v529, %v528
      %v560 = vpack.c.bf16 %v531, %v530
      %v561 = vpack.c.bf16 %v533, %v532
      %v562 = vpack.c.bf16 %v535, %v534
      %v563 = vpack.c.bf16 %v537, %v536
      %v564 = vpack.c.bf16 %v539, %v538
      %v565 = vpack.c.bf16 %v541, %v540
      %v566 = vpack.c.bf16 %v543, %v542
      %v567 = vpack.c.bf16 %v545, %v544
      %v568 = vpack.c.bf16 %v547, %v546
      %v569 = vpack.c.bf16 %v549, %v548
      %v570 = vpack.c.bf16 %v551, %v550
      %v571 = vpack.c.bf16 %v553, %v552
      %v572 = vpack.c.bf16 %v555, %v554
      %v573 = vpack.c.bf16 %v557, %v556
      %v590 = vunpack.c.l.b16 %v558
      %v591 = vunpack.c.h.b16 %v558
      %v592 = vunpack.c.l.b16 %v559
      %v593 = vunpack.c.h.b16 %v559
      %v594 = vunpack.c.l.b16 %v560
      %v595 = vunpack.c.h.b16 %v560
      %v596 = vunpack.c.l.b16 %v561
      %v597 = vunpack.c.h.b16 %v561
      %v598 = vunpack.c.l.b16 %v562
      %v599 = vunpack.c.h.b16 %v562
      %v600 = vunpack.c.l.b16 %v563
      %v601 = vunpack.c.h.b16 %v563
      %v602 = vunpack.c.l.b16 %v564
      %v603 = vunpack.c.h.b16 %v564
      %v604 = vunpack.c.l.b16 %v565
      %v605 = vunpack.c.h.b16 %v565
      %v606 = vunpack.c.l.b16 %v566
      %v607 = vunpack.c.h.b16 %v566
      %v608 = vunpack.c.l.b16 %v567
      %v609 = vunpack.c.h.b16 %v567
      %v610 = vunpack.c.l.b16 %v568
      %v611 = vunpack.c.h.b16 %v568
      %v612 = vunpack.c.l.b16 %v569
      %v613 = vunpack.c.h.b16 %v569
      %v614 = vunpack.c.l.b16 %v570
      %v615 = vunpack.c.h.b16 %v570
      %v616 = vunpack.c.l.b16 %v571
      %v617 = vunpack.c.h.b16 %v571
      %v618 = vunpack.c.l.b16 %v572
      %v619 = vunpack.c.h.b16 %v572
      %v620 = vunpack.c.l.b16 %v573
      %v621 = vunpack.c.h.b16 %v573
      %v622 = vpack.c.b16 %v590, %v590
      %v623 = vpack.c.b16 %v591, %v591
      %v624 = vpack.c.b16 %v592, %v592
      %v625 = vpack.c.b16 %v593, %v593
      %v626 = vpack.c.b16 %v594, %v594
      %v627 = vpack.c.b16 %v595, %v595
      %v628 = vpack.c.b16 %v596, %v596
      %v629 = vpack.c.b16 %v597, %v597
      %v630 = vpack.c.b16 %v598, %v598
      %v631 = vpack.c.b16 %v599, %v599
      %v632 = vpack.c.b16 %v600, %v600
      %v633 = vpack.c.b16 %v601, %v601
      %v634 = vpack.c.b16 %v602, %v602
      %v635 = vpack.c.b16 %v603, %v603
      %v636 = vpack.c.b16 %v604, %v604
      %v637 = vpack.c.b16 %v605, %v605
      %v638 = vpack.c.b16 %v606, %v606
      %v639 = vpack.c.b16 %v607, %v607
      %v640 = vpack.c.b16 %v608, %v608
      %v641 = vpack.c.b16 %v609, %v609
      %v642 = vpack.c.b16 %v610, %v610
      %v643 = vpack.c.b16 %v611, %v611
      %v644 = vpack.c.b16 %v612, %v612
      %v645 = vpack.c.b16 %v613, %v613
      %v646 = vpack.c.b16 %v614, %v614
      %v647 = vpack.c.b16 %v615, %v615
      %v648 = vpack.c.b16 %v616, %v616
      %v649 = vpack.c.b16 %v617, %v617
      %v650 = vpack.c.b16 %v618, %v618
      %v651 = vpack.c.b16 %v619, %v619
      %v652 = vpack.c.b16 %v620, %v620
      %v653 = vpack.c.b16 %v621, %v621
      %vm686 = vcmask 125952
      %687 = vst.msk [vmem:[%s172] sm:$0xf] %vm686, %v622
      %688 = vst.msk [vmem:[%s172 + $0x4] sm:$0xf] %vm686, %v623
      %689 = vst.msk [vmem:[%s172 + $0x8] sm:$0xf] %vm686, %v624
      %690 = vst.msk [vmem:[%s172 + $0xc] sm:$0xf] %vm686, %v625
      %691 = vst.msk [vmem:[%s172 + $0x10] sm:$0xf] %vm686, %v626
      %692 = vst.msk [vmem:[%s172 + $0x14] sm:$0xf] %vm686, %v627
      %693 = vst.msk [vmem:[%s172 + $0x18] sm:$0xf] %vm686, %v628
      %694 = vst.msk [vmem:[%s172 + $0x1c] sm:$0xf] %vm686, %v629
      %695 = vst.msk [vmem:[%s172 + $0x20] sm:$0xf] %vm686, %v630
      %696 = vst.msk [vmem:[%s172 + $0x24] sm:$0xf] %vm686, %v631
      %697 = vst.msk [vmem:[%s172 + $0x28] sm:$0xf] %vm686, %v632
      %698 = vst.msk [vmem:[%s172 + $0x2c] sm:$0xf] %vm686, %v633
      %699 = vst.msk [vmem:[%s172 + $0x30] sm:$0xf] %vm686, %v634
      %700 = vst.msk [vmem:[%s172 + $0x34] sm:$0xf] %vm686, %v635
      %701 = vst.msk [vmem:[%s172 + $0x38] sm:$0xf] %vm686, %v636
      %702 = vst.msk [vmem:[%s172 + $0x3c] sm:$0xf] %vm686, %v637
      %703 = vst.msk [vmem:[%s172 + $0x40] sm:$0xf] %vm686, %v638
      %704 = vst.msk [vmem:[%s172 + $0x44] sm:$0xf] %vm686, %v639
      %705 = vst.msk [vmem:[%s172 + $0x48] sm:$0xf] %vm686, %v640
      %706 = vst.msk [vmem:[%s172 + $0x4c] sm:$0xf] %vm686, %v641
      %707 = vst.msk [vmem:[%s172 + $0x50] sm:$0xf] %vm686, %v642
      %708 = vst.msk [vmem:[%s172 + $0x54] sm:$0xf] %vm686, %v643
      %709 = vst.msk [vmem:[%s172 + $0x58] sm:$0xf] %vm686, %v644
      %710 = vst.msk [vmem:[%s172 + $0x5c] sm:$0xf] %vm686, %v645
      %711 = vst.msk [vmem:[%s172 + $0x60] sm:$0xf] %vm686, %v646
      %712 = vst.msk [vmem:[%s172 + $0x64] sm:$0xf] %vm686, %v647
      %713 = vst.msk [vmem:[%s172 + $0x68] sm:$0xf] %vm686, %v648
      %714 = vst.msk [vmem:[%s172 + $0x6c] sm:$0xf] %vm686, %v649
      %715 = vst.msk [vmem:[%s172 + $0x70] sm:$0xf] %vm686, %v650
      %716 = vst.msk [vmem:[%s172 + $0x74] sm:$0xf] %vm686, %v651
      %717 = vst.msk [vmem:[%s172 + $0x78] sm:$0xf] %vm686, %v652
      %718 = vst.msk [vmem:[%s172 + $0x7c] sm:$0xf] %vm686, %v653
      %s719 = smul.u32 32, %s14
      %p720 = scmp.lt.s32.totalorder %s719, 63
      %s721 = scalar_select %p720, %s719, 63
      %s722 = smul.addr %s721, 4
      %s723 = scalar_lea.vmem %s3, %s722
      // Predicated region
      $region33: #{single_view_forward.11} parent=31 // pred_check
        %p724 = pneg %p100
      $region34: #{single_view_forward.11} parent=31 // pred_check_branch
        %726 = sbr.rel (%p724) target = $region36
      $region35: #{single_view_forward.11} parent=31 // pred_region
        %s727 = smul.u32 32, %s14
      $region36: #{single_view_forward.11} parent=31 // pred_fallthru
        _
    $region32: #{single_view_forward.11} parent=5 // pred_fallthru
      _
    %p728 = scmp.le.s32.totalorder 2, %s9
    // Predicated region
    $region37: #{single_view_forward.11} parent=5 // pred_check
      %p729 = pneg %p728
    $region38: #{single_view_forward.11} parent=5 // pred_check_branch
      %731 = sbr.rel (%p729) target = $region40
    $region39: #{single_view_forward.11} parent=5 // pred_region
      %s732 = ssub.s32 %s9, 2
      // Predicated region
      $region41: #{single_view_forward.11} parent=39 // pred_check
        %p733 = pneg %p106
      $region42: #{single_view_forward.11} parent=39 // pred_check_branch
        %735 = sbr.rel (%p733) target = $region44
      $region43: #{single_view_forward.11} parent=39 // pred_region
        %s736 = smul.u32 32, %s15
        %p737 = scmp.lt.s32.totalorder %s736, 63
        %s738 = scalar_select %p737, %s736, 63
        %s739 = smul.addr %s738, 4
        %s740 = scalar_lea.vmem %s3, %s739
      $region44: #{single_view_forward.11} parent=39 // pred_fallthru
        _
    $region40: #{single_view_forward.11} parent=5 // pred_fallthru
      _
  $region6: #{single_view_forward.11} parent=0 // loop_footer
    %s13 = sadd.s32 1, %s9
  $region7: #{single_view_forward.11} parent=0 // loop_footer_branch
    %8 = sbr.rel target = $region3
  $region8: #{single_view_forward.11} parent=0 // loop_exit
    _

// kernel: single_view_forward.12
$region0: #{single_view_forward.12}
  #allocation0 [shape = 'u32[]', space=smem, size = 0x4, offset = 0x4, fixed_abs, tag = 'smem constant byte address 0x4 - core index']
  #allocation1 [shape = 'u32[144,128]{1,0:T(1,128)}', space=vmem, size = 0x12000, scoped, tag = 'internal scratch']
  %s0 = inlined_call_operand.vmem [shape: bf16[128,144], index: 0, kind: input, shape index: {}]
  %s1 = inlined_call_operand.vmem [shape: bf16[144,24], index: 1, kind: input, shape index: {}]
  %s2 = inlined_call_operand.vmem [shape: f32[1,24], index: 2, kind: input, shape index: {}]
  %s3 = inlined_call_operand.vmem [shape: bf16[128,24], index: 3, kind: output, shape index: {}]
  %s4 = sld [smem:[#allocation0]]
  $region22: #{single_view_forward.12} parent=0
    _
  %s6 = ssub.s32 1, %s4
  %s7 = scalar_select 0, %s6, %s4
  // Predicated region
  $region2: #{single_view_forward.12} parent=0 // pred_check
    _
  $region3: #{single_view_forward.12} parent=0 // pred_check_branch
    %9 = sbr.rel (0) target = $region5
  $region4: #{single_view_forward.12} parent=0 // pred_region
    _
  $region5: #{single_view_forward.12} parent=0 // pred_fallthru
    _
  // Predicated region
  $region6: #{single_view_forward.12} parent=0 // pred_check
    _
  $region7: #{single_view_forward.12} parent=0 // pred_check_branch
    %11 = sbr.rel (0) target = $region9
  $region8: #{single_view_forward.12} parent=0 // pred_region
    _
  $region9: #{single_view_forward.12} parent=0 // pred_fallthru
    _
  // Predicated region
  $region10: #{single_view_forward.12} parent=0 // pred_check
    _
  $region11: #{single_view_forward.12} parent=0 // pred_check_branch
    %13 = sbr.rel (0) target = $region13
  $region12: #{single_view_forward.12} parent=0 // pred_region
    _
  $region13: #{single_view_forward.12} parent=0 // pred_fallthru
    _
  %v15 = vld [vmem:[%s0] sm:$0xff]
  %v16 = vld [vmem:[%s0 + $0x8] sm:$0xff]
  %v17 = vld [vmem:[%s0 + $0x10] sm:$0xff]
  %v18 = vld [vmem:[%s0 + $0x18] sm:$0xff]
  %v19 = vld [vmem:[%s0 + $0x20] sm:$0xff]
  %v20 = vld [vmem:[%s0 + $0x28] sm:$0xff]
  %v21 = vld [vmem:[%s0 + $0x30] sm:$0xff]
  %v22 = vld [vmem:[%s0 + $0x38] sm:$0xff]
  %v23 = vld [vmem:[%s0 + $0x40] sm:$0xff]
  %v24 = vld [vmem:[%s0 + $0x48] sm:$0xff]
  %v25 = vld [vmem:[%s0 + $0x50] sm:$0xff]
  %v26 = vld [vmem:[%s0 + $0x58] sm:$0xff]
  %v27 = vld [vmem:[%s0 + $0x60] sm:$0xff]
  %v28 = vld [vmem:[%s0 + $0x68] sm:$0xff]
  %v29 = vld [vmem:[%s0 + $0x70] sm:$0xff]
  %v30 = vld [vmem:[%s0 + $0x78] sm:$0xff]
  %v31 = vld [vmem:[%s1] sm:$0xf]
  %v32 = vld [vmem:[%s1 + $0x4] sm:$0xf]
  %v33 = vld [vmem:[%s1 + $0x8] sm:$0xf]
  %v34 = vld [vmem:[%s1 + $0xc] sm:$0xf]
  %v35 = vld [vmem:[%s1 + $0x10] sm:$0xf]
  %v36 = vld [vmem:[%s1 + $0x14] sm:$0xf]
  %v37 = vld [vmem:[%s1 + $0x18] sm:$0xf]
  %v38 = vld [vmem:[%s1 + $0x1c] sm:$0xf]
  %v39 = vld [vmem:[%s1 + $0x20] sm:$0xf]
  %v40 = vld [vmem:[%s1 + $0x24] sm:$0xf]
  %v41 = vld [vmem:[%s1 + $0x28] sm:$0xf]
  %v42 = vld [vmem:[%s1 + $0x2c] sm:$0xf]
  %v43 = vld [vmem:[%s1 + $0x30] sm:$0xf]
  %v44 = vld [vmem:[%s1 + $0x34] sm:$0xf]
  %v45 = vld [vmem:[%s1 + $0x38] sm:$0xf]
  %v46 = vld [vmem:[%s1 + $0x3c] sm:$0xf]
  %v47 = vld [vmem:[%s1 + $0x40] sm:$0xf]
  %v48 = vld [vmem:[%s1 + $0x44] sm:$0xf]
  %v49 = vld [vmem:[%s2] sm:$0x1]
  %v51 = vlaneseq
  %v52 = vshrl.u32 %v51, 7
  %v53 = vsub.s32 0, %v52
  %v54 = vrot.slane %v49, %v53
  %v72 = vunpack.c.l.b16 %v15
  %v73 = vunpack.c.h.b16 %v15
  %v74 = vunpack.c.l.b16 %v16
  %v75 = vunpack.c.h.b16 %v16
  %v76 = vunpack.c.l.b16 %v17
  %v77 = vunpack.c.h.b16 %v17
  %v78 = vunpack.c.l.b16 %v18
  %v79 = vunpack.c.h.b16 %v18
  %v80 = vunpack.c.l.b16 %v19
  %v81 = vunpack.c.h.b16 %v19
  %v82 = vunpack.c.l.b16 %v20
  %v83 = vunpack.c.h.b16 %v20
  %v84 = vunpack.c.l.b16 %v21
  %v85 = vunpack.c.h.b16 %v21
  %v86 = vunpack.c.l.b16 %v22
  %v87 = vunpack.c.h.b16 %v22
  %v88 = vunpack.c.l.b16 %v23
  %v89 = vunpack.c.h.b16 %v23
  %v90 = vunpack.c.l.b16 %v24
  %v91 = vunpack.c.h.b16 %v24
  %v92 = vunpack.c.l.b16 %v25
  %v93 = vunpack.c.h.b16 %v25
  %v94 = vunpack.c.l.b16 %v26
  %v95 = vunpack.c.h.b16 %v26
  %v96 = vunpack.c.l.b16 %v27
  %v97 = vunpack.c.h.b16 %v27
  %v98 = vunpack.c.l.b16 %v28
  %v99 = vunpack.c.h.b16 %v28
  %v100 = vunpack.c.l.b16 %v29
  %v101 = vunpack.c.h.b16 %v29
  %v102 = vunpack.c.l.b16 %v30
  %v103 = vunpack.c.h.b16 %v30
  %v104 = vpack.c.b16 %v74, %v72
  %v105 = vpack.c.b16 %v75, %v73
  %v106 = vpack.c.b16 %v78, %v76
  %v107 = vpack.c.b16 %v79, %v77
  %v108 = vpack.c.b16 %v82, %v80
  %v109 = vpack.c.b16 %v83, %v81
  %v110 = vpack.c.b16 %v86, %v84
  %v111 = vpack.c.b16 %v87, %v85
  %v112 = vpack.c.b16 %v90, %v88
  %v113 = vpack.c.b16 %v91, %v89
  %v114 = vpack.c.b16 %v94, %v92
  %v115 = vpack.c.b16 %v95, %v93
  %v116 = vpack.c.b16 %v98, %v96
  %v117 = vpack.c.b16 %v99, %v97
  %v118 = vpack.c.b16 %v102, %v100
  %v119 = vpack.c.b16 %v103, %v101
  %v146 = vunpack.c.l.b16 %v31
  %v147 = vunpack.c.l.b16 %v32
  %v148 = vunpack.c.l.b16 %v33
  %v149 = vunpack.c.l.b16 %v34
  %v150 = vunpack.c.l.b16 %v35
  %v151 = vunpack.c.l.b16 %v36
  %v152 = vunpack.c.l.b16 %v37
  %v153 = vunpack.c.l.b16 %v38
  %v154 = vunpack.c.l.b16 %v39
  %v155 = vunpack.c.l.b16 %v40
  %v156 = vunpack.c.l.b16 %v41
  %v157 = vunpack.c.l.b16 %v42
  %v158 = vunpack.c.l.b16 %v43
  %v159 = vunpack.c.l.b16 %v44
  %v160 = vunpack.c.l.b16 %v45
  %v161 = vunpack.c.l.b16 %v46
  %v162 = vunpack.c.l.b16 %v47
  %v163 = vunpack.c.l.b16 %v48
  %v164 = vpack.c.b16 %v147, %v146
  %v165 = vpack.c.b16 %v149, %v148
  %v166 = vpack.c.b16 %v151, %v150
  %v167 = vpack.c.b16 %v153, %v152
  %v168 = vpack.c.b16 %v155, %v154
  %v169 = vpack.c.b16 %v157, %v156
  %v170 = vpack.c.b16 %v159, %v158
  %v171 = vpack.c.b16 %v161, %v160
  %v172 = vpack.c.b16 %v163, %v162
  %vm182 = vcmask 130048
  %v184 = vsel %vm182, %v105, 0
  %v187 = vsel %vm182, %v107, 0
  %v190 = vsel %vm182, %v109, 0
  %v193 = vsel %vm182, %v111, 0
  %v196 = vsel %vm182, %v113, 0
  %v199 = vsel %vm182, %v115, 0
  %v202 = vsel %vm182, %v117, 0
  %v205 = vsel %vm182, %v119, 0
  %207 = vmatprep.subr.bf16.mxu0 0
  %208 = vmatpush1.bf16.msra.mxu0 %v164
  %209 = vmatprep.subr.bf16.mxu0 0
  %210 = vmatpush1.bf16.msra.mxu0 %v165
  %211 = vmatprep.subr.bf16.mxu0 0
  %212 = vmatpush1.bf16.msra.mxu0 %v166
  %213 = vmatprep.subr.bf16.mxu0 0
  %214 = vmatpush1.bf16.msra.mxu0 %v167
  %215 = vmatprep.subr.bf16.mxu0 0
  %216 = vmatpush1.bf16.msra.mxu0 %v168
  %217 = vmatprep.subr.bf16.mxu0 0
  %218 = vmatpush1.bf16.msra.mxu0 %v169
  %219 = vmatprep.subr.bf16.mxu0 0
  %220 = vmatpush1.bf16.msra.mxu0 %v170
  %221 = vmatprep.subr.bf16.mxu0 0
  %222 = vmatpush1.bf16.msra.mxu0 %v171
  %223 = vmatprep.subr.bf16.mxu0 0
  %224 = vmatpush1.bf16.msra.mxu0 %v172
  %225 = vmatprep.subr.bf16.mxu0 0
  %226 = vmatpush1.bf16.msra.mxu0 0
  %227 = vmatprep.subr.bf16.mxu0 0
  %228 = vmatpush1.bf16.msra.mxu0 0
  %229 = vmatprep.subr.bf16.mxu0 0
  %230 = vmatpush1.bf16.msra.mxu0 0
  %231 = vmatprep.subr.bf16.mxu0 0
  %232 = vmatpush1.bf16.msra.mxu0 0
  %233 = vmatprep.subr.bf16.mxu0 0
  %234 = vmatpush1.bf16.msra.mxu0 0
  %235 = vmatprep.subr.bf16.mxu0 0
  %236 = vmatpush1.bf16.msra.mxu0 0
  %237 = vmatprep.subr.bf16.mxu0 0
  %238 = vmatpush1.bf16.msra.mxu0 0
  %239 = vmatprep.mubr.bf16.mxu0 %v184
  %240 = vmatmul.mubr.bf16.gmra.mrb[0].mxu0 %v104
  %v241 = vpop.f32.mrb[0].mxu0
  %v242 = vadd.f32 %v54, %v241
  %v243 = vpop.f32.mrb[0].mxu0
  %v244 = vpop.f32.mrb[0].mxu0
  %v245 = vadd.f32 %v54, %v244
  %v246 = vpop.f32.mrb[0].mxu0
  %247 = vmatprep.mubr.bf16.mxu0 %v187
  %248 = vmatmul.mubr.bf16.gmra.mrb[0].mxu0 %v106
  %v249 = vpop.f32.mrb[0].mxu0
  %v250 = vadd.f32 %v54, %v249
  %v251 = vpop.f32.mrb[0].mxu0
  %v252 = vpop.f32.mrb[0].mxu0
  %v253 = vadd.f32 %v54, %v252
  %v254 = vpop.f32.mrb[0].mxu0
  %255 = vmatprep.mubr.bf16.mxu0 %v190
  %256 = vmatmul.mubr.bf16.gmra.mrb[0].mxu0 %v108
  %v257 = vpop.f32.mrb[0].mxu0
  %v258 = vadd.f32 %v54, %v257
  %v259 = vpop.f32.mrb[0].mxu0
  %v260 = vpop.f32.mrb[0].mxu0
  %v261 = vadd.f32 %v54, %v260
  %v262 = vpop.f32.mrb[0].mxu0
  %263 = vmatprep.mubr.bf16.mxu0 %v193
  %264 = vmatmul.mubr.bf16.gmra.mrb[0].mxu0 %v110
  %v265 = vpop.f32.mrb[0].mxu0
  %v266 = vadd.f32 %v54, %v265
  %v267 = vpop.f32.mrb[0].mxu0
  %v268 = vpop.f32.mrb[0].mxu0
  %v269 = vadd.f32 %v54, %v268
  %v270 = vpop.f32.mrb[0].mxu0
  %271 = vmatprep.mubr.bf16.mxu0 %v196
  %272 = vmatmul.mubr.bf16.gmra.mrb[0].mxu0 %v112
  %v273 = vpop.f32.mrb[0].mxu0
  %v274 = vadd.f32 %v54, %v273
  %v275 = vpop.f32.mrb[0].mxu0
  %v276 = vpop.f32.mrb[0].mxu0
  %v277 = vadd.f32 %v54, %v276
  %v278 = vpop.f32.mrb[0].mxu0
  %279 = vmatprep.mubr.bf16.mxu0 %v199
  %280 = vmatmul.mubr.bf16.gmra.mrb[0].mxu0 %v114
  %v281 = vpop.f32.mrb[0].mxu0
  %v282 = vadd.f32 %v54, %v281
  %v283 = vpop.f32.mrb[0].mxu0
  %v284 = vpop.f32.mrb[0].mxu0
  %v285 = vadd.f32 %v54, %v284
  %v286 = vpop.f32.mrb[0].mxu0
  %287 = vmatprep.mubr.bf16.mxu0 %v202
  %288 = vmatmul.mubr.bf16.gmra.mrb[0].mxu0 %v116
  %v289 = vpop.f32.mrb[0].mxu0
  %v290 = vadd.f32 %v54, %v289
  %v291 = vpop.f32.mrb[0].mxu0
  %v292 = vpop.f32.mrb[0].mxu0
  %v293 = vadd.f32 %v54, %v292
  %v294 = vpop.f32.mrb[0].mxu0
  %295 = vmatprep.mubr.bf16.mxu0 %v205
  %296 = vmatmul.mubr.bf16.gmra.mrb[0].mxu0 %v118
  %v297 = vpop.f32.mrb[0].mxu0
  %v298 = vadd.f32 %v54, %v297
  %v299 = vpop.f32.mrb[0].mxu0
  %v300 = vpop.f32.mrb[0].mxu0
  %v301 = vadd.f32 %v54, %v300
  %v302 = vpop.f32.mrb[0].mxu0
  %303 = vdwg.mxu0
  %v304 = vmax.f32 %v242, 0.0
  %v305 = vmax.f32 %v245, 0.0
  %v306 = vmax.f32 %v250, 0.0
  %v307 = vmax.f32 %v253, 0.0
  %v308 = vmax.f32 %v258, 0.0
  %v309 = vmax.f32 %v261, 0.0
  %v310 = vmax.f32 %v266, 0.0
  %v311 = vmax.f32 %v269, 0.0
  %v312 = vmax.f32 %v274, 0.0
  %v313 = vmax.f32 %v277, 0.0
  %v314 = vmax.f32 %v282, 0.0
  %v315 = vmax.f32 %v285, 0.0
  %v316 = vmax.f32 %v290, 0.0
  %v317 = vmax.f32 %v293, 0.0
  %v318 = vmax.f32 %v298, 0.0
  %v319 = vmax.f32 %v301, 0.0
  %v320 = vpack.c.bf16 %v305, %v304
  %v321 = vpack.c.bf16 %v307, %v306
  %v322 = vpack.c.bf16 %v309, %v308
  %v323 = vpack.c.bf16 %v311, %v310
  %v324 = vpack.c.bf16 %v313, %v312
  %v325 = vpack.c.bf16 %v315, %v314
  %v326 = vpack.c.bf16 %v317, %v316
  %v327 = vpack.c.bf16 %v319, %v318
  %v336 = vunpack.c.l.b16 %v320
  %v337 = vunpack.c.h.b16 %v320
  %v338 = vunpack.c.l.b16 %v321
  %v339 = vunpack.c.h.b16 %v321
  %v340 = vunpack.c.l.b16 %v322
  %v341 = vunpack.c.h.b16 %v322
  %v342 = vunpack.c.l.b16 %v323
  %v343 = vunpack.c.h.b16 %v323
  %v344 = vunpack.c.l.b16 %v324
  %v345 = vunpack.c.h.b16 %v324
  %v346 = vunpack.c.l.b16 %v325
  %v347 = vunpack.c.h.b16 %v325
  %v348 = vunpack.c.l.b16 %v326
  %v349 = vunpack.c.h.b16 %v326
  %v350 = vunpack.c.l.b16 %v327
  %v351 = vunpack.c.h.b16 %v327
  %v352 = vpack.c.b16 %v336, %v336
  %v353 = vpack.c.b16 %v337, %v337
  %v354 = vpack.c.b16 %v338, %v338
  %v355 = vpack.c.b16 %v339, %v339
  %v356 = vpack.c.b16 %v340, %v340
  %v357 = vpack.c.b16 %v341, %v341
  %v358 = vpack.c.b16 %v342, %v342
  %v359 = vpack.c.b16 %v343, %v343
  %v360 = vpack.c.b16 %v344, %v344
  %v361 = vpack.c.b16 %v345, %v345
  %v362 = vpack.c.b16 %v346, %v346
  %v363 = vpack.c.b16 %v347, %v347
  %v364 = vpack.c.b16 %v348, %v348
  %v365 = vpack.c.b16 %v349, %v349
  %v366 = vpack.c.b16 %v350, %v350
  %v367 = vpack.c.b16 %v351, %v351
  %vm384 = vcmask 191488
  %385 = vst.msk [vmem:[%s3] sm:$0xf] %vm384, %v352
  %386 = vst.msk [vmem:[%s3 + $0x4] sm:$0xf] %vm384, %v353
  %387 = vst.msk [vmem:[%s3 + $0x8] sm:$0xf] %vm384, %v354
  %388 = vst.msk [vmem:[%s3 + $0xc] sm:$0xf] %vm384, %v355
  %389 = vst.msk [vmem:[%s3 + $0x10] sm:$0xf] %vm384, %v356
  %390 = vst.msk [vmem:[%s3 + $0x14] sm:$0xf] %vm384, %v357
  %391 = vst.msk [vmem:[%s3 + $0x18] sm:$0xf] %vm384, %v358
  %392 = vst.msk [vmem:[%s3 + $0x1c] sm:$0xf] %vm384, %v359
  %393 = vst.msk [vmem:[%s3 + $0x20] sm:$0xf] %vm384, %v360
  %394 = vst.msk [vmem:[%s3 + $0x24] sm:$0xf] %vm384, %v361
  %395 = vst.msk [vmem:[%s3 + $0x28] sm:$0xf] %vm384, %v362
  %396 = vst.msk [vmem:[%s3 + $0x2c] sm:$0xf] %vm384, %v363
  %397 = vst.msk [vmem:[%s3 + $0x30] sm:$0xf] %vm384, %v364
  %398 = vst.msk [vmem:[%s3 + $0x34] sm:$0xf] %vm384, %v365
  %399 = vst.msk [vmem:[%s3 + $0x38] sm:$0xf] %vm384, %v366
  %400 = vst.msk [vmem:[%s3 + $0x3c] sm:$0xf] %vm384, %v367
  // Predicated region
  $region14: #{single_view_forward.12} parent=0 // pred_check
    _
  $region15: #{single_view_forward.12} parent=0 // pred_check_branch
    %402 = sbr.rel (0) target = $region17
  $region16: #{single_view_forward.12} parent=0 // pred_region
    _
  $region17: #{single_view_forward.12} parent=0 // pred_fallthru
    _
  // Predicated region
  $region18: #{single_view_forward.12} parent=0 // pred_check
    _
  $region19: #{single_view_forward.12} parent=0 // pred_check_branch
    %404 = sbr.rel (0) target = $region21
  $region20: #{single_view_forward.12} parent=0 // pred_region
    _
  $region21: #{single_view_forward.12} parent=0 // pred_fallthru
    _

// kernel: single_view_forward.13
$region0: #{single_view_forward.13}
  #allocation0 [shape = 'u32[]', space=smem, size = 0x4, offset = 0x4, fixed_abs, tag = 'smem constant byte address 0x4 - core index']
  #allocation1 [shape = 'u32[144,128]{1,0:T(1,128)}', space=vmem, size = 0x12000, scoped, tag = 'internal scratch']
  %s0 = inlined_call_operand.vmem [shape: bf16[32,216], index: 0, kind: input, shape index: {}]
  %s1 = inlined_call_operand.vmem [shape: bf16[216,32], index: 1, kind: input, shape index: {}]
  %s2 = inlined_call_operand.vmem [shape: f32[1,32], index: 2, kind: input, shape index: {}]
  %s3 = inlined_call_operand.vmem [shape: bf16[32,32], index: 3, kind: output, shape index: {}]
  %s4 = sld [smem:[#allocation0]]
  $region22: #{single_view_forward.13} parent=0
    _
  %s6 = ssub.s32 1, %s4
  %s7 = scalar_select 0, %s6, %s4
  // Predicated region
  $region2: #{single_view_forward.13} parent=0 // pred_check
    _
  $region3: #{single_view_forward.13} parent=0 // pred_check_branch
    %9 = sbr.rel (0) target = $region5
  $region4: #{single_view_forward.13} parent=0 // pred_region
    _
  $region5: #{single_view_forward.13} parent=0 // pred_fallthru
    _
  // Predicated region
  $region6: #{single_view_forward.13} parent=0 // pred_check
    _
  $region7: #{single_view_forward.13} parent=0 // pred_check_branch
    %11 = sbr.rel (0) target = $region9
  $region8: #{single_view_forward.13} parent=0 // pred_region
    _
  $region9: #{single_view_forward.13} parent=0 // pred_fallthru
    _
  // Predicated region
  $region10: #{single_view_forward.13} parent=0 // pred_check
    _
  $region11: #{single_view_forward.13} parent=0 // pred_check_branch
    %13 = sbr.rel (0) target = $region13
  $region12: #{single_view_forward.13} parent=0 // pred_region
    _
  $region13: #{single_view_forward.13} parent=0 // pred_fallthru
    _
  %v15 = vld [vmem:[%s0] sm:$0xff]
  %v16 = vld [vmem:[%s0 + $0x8] sm:$0xff]
  %v17 = vld [vmem:[%s0 + $0x10] sm:$0xff]
  %v18 = vld [vmem:[%s0 + $0x18] sm:$0xff]
  %v19 = vld [vmem:[%s1] sm:$0xf]
  %v20 = vld [vmem:[%s1 + $0x4] sm:$0xf]
  %v21 = vld [vmem:[%s1 + $0x8] sm:$0xf]
  %v22 = vld [vmem:[%s1 + $0xc] sm:$0xf]
  %v23 = vld [vmem:[%s1 + $0x10] sm:$0xf]
  %v24 = vld [vmem:[%s1 + $0x14] sm:$0xf]
  %v25 = vld [vmem:[%s1 + $0x18] sm:$0xf]
  %v26 = vld [vmem:[%s1 + $0x1c] sm:$0xf]
  %v27 = vld [vmem:[%s1 + $0x20] sm:$0xf]
  %v28 = vld [vmem:[%s1 + $0x24] sm:$0xf]
  %v29 = vld [vmem:[%s1 + $0x28] sm:$0xf]
  %v30 = vld [vmem:[%s1 + $0x2c] sm:$0xf]
  %v31 = vld [vmem:[%s1 + $0x30] sm:$0xf]
  %v32 = vld [vmem:[%s1 + $0x34] sm:$0xf]
  %v33 = vld [vmem:[%s1 + $0x38] sm:$0xf]
  %v34 = vld [vmem:[%s1 + $0x3c] sm:$0xf]
  %v35 = vld [vmem:[%s1 + $0x40] sm:$0xf]
  %v36 = vld [vmem:[%s1 + $0x44] sm:$0xf]
  %v37 = vld [vmem:[%s1 + $0x48] sm:$0xf]
  %v38 = vld [vmem:[%s1 + $0x4c] sm:$0xf]
  %v39 = vld [vmem:[%s1 + $0x50] sm:$0xf]
  %v40 = vld [vmem:[%s1 + $0x54] sm:$0xf]
  %v41 = vld [vmem:[%s1 + $0x58] sm:$0xf]
  %v42 = vld [vmem:[%s1 + $0x5c] sm:$0xf]
  %v43 = vld [vmem:[%s1 + $0x60] sm:$0xf]
  %v44 = vld [vmem:[%s1 + $0x64] sm:$0xf]
  %v45 = vld [vmem:[%s1 + $0x68] sm:$0xf]
  %v46 = vld [vmem:[%s2] sm:$0x1]
  %v48 = vlaneseq
  %v49 = vshrl.u32 %v48, 7
  %v50 = vsub.s32 0, %v49
  %v51 = vrot.slane %v46, %v50
  %v57 = vunpack.c.l.b16 %v15
  %v58 = vunpack.c.h.b16 %v15
  %v59 = vunpack.c.l.b16 %v16
  %v60 = vunpack.c.h.b16 %v16
  %v61 = vunpack.c.l.b16 %v17
  %v62 = vunpack.c.h.b16 %v17
  %v63 = vunpack.c.l.b16 %v18
  %v64 = vunpack.c.h.b16 %v18
  %v65 = vpack.c.b16 %v59, %v57
  %v66 = vpack.c.b16 %v60, %v58
  %v67 = vpack.c.b16 %v63, %v61
  %v68 = vpack.c.b16 %v64, %v62
  %v98 = vunpack.c.l.b16 %v19
  %v99 = vunpack.c.l.b16 %v20
  %v100 = vunpack.c.l.b16 %v21
  %v101 = vunpack.c.l.b16 %v22
  %v102 = vunpack.c.l.b16 %v23
  %v103 = vunpack.c.l.b16 %v24
  %v104 = vunpack.c.l.b16 %v25
  %v105 = vunpack.c.l.b16 %v26
  %v106 = vunpack.c.l.b16 %v27
  %v107 = vunpack.c.l.b16 %v28
  %v108 = vunpack.c.l.b16 %v29
  %v109 = vunpack.c.l.b16 %v30
  %v110 = vunpack.c.l.b16 %v31
  %v111 = vunpack.c.l.b16 %v32
  %v112 = vunpack.c.l.b16 %v33
  %v113 = vunpack.c.l.b16 %v34
  %v114 = vunpack.c.l.b16 %v35
  %v115 = vunpack.c.l.b16 %v36
  %v116 = vunpack.c.l.b16 %v37
  %v117 = vunpack.c.l.b16 %v38
  %v118 = vunpack.c.l.b16 %v39
  %v119 = vunpack.c.l.b16 %v40
  %v120 = vunpack.c.l.b16 %v41
  %v121 = vunpack.c.l.b16 %v42
  %v122 = vunpack.c.l.b16 %v43
  %v123 = vunpack.c.l.b16 %v44
  %v124 = vunpack.c.l.b16 %v45
  %v125 = vpack.c.b16 %v99, %v98
  %v126 = vpack.c.b16 %v101, %v100
  %v127 = vpack.c.b16 %v103, %v102
  %v128 = vpack.c.b16 %v105, %v104
  %v129 = vpack.c.b16 %v107, %v106
  %v130 = vpack.c.b16 %v109, %v108
  %v131 = vpack.c.b16 %v111, %v110
  %v132 = vpack.c.b16 %v113, %v112
  %v133 = vpack.c.b16 %v115, %v114
  %v134 = vpack.c.b16 %v117, %v116
  %v135 = vpack.c.b16 %v119, %v118
  %v136 = vpack.c.b16 %v121, %v120
  %v137 = vpack.c.b16 %v123, %v122
  %v138 = vpack.c.b16 %v124, %v124
  %vm152 = vcmask 719872
  %v154 = vsel %vm152, %v66, 0
  %v157 = vsel %vm152, %v68, 0
  %vm159 = vcmask 1043456
  %v161 = vsel %vm159, %v138, 0
  %163 = vmatprep.subr.bf16.mxu0 0
  %164 = vmatpush1.bf16.msra.mxu0 %v125
  %165 = vmatprep.subr.bf16.mxu0 0
  %166 = vmatpush1.bf16.msra.mxu0 %v126
  %167 = vmatprep.subr.bf16.mxu0 0
  %168 = vmatpush1.bf16.msra.mxu0 %v127
  %169 = vmatprep.subr.bf16.mxu0 0
  %170 = vmatpush1.bf16.msra.mxu0 %v128
  %171 = vmatprep.subr.bf16.mxu0 0
  %172 = vmatpush1.bf16.msra.mxu0 %v129
  %173 = vmatprep.subr.bf16.mxu0 0
  %174 = vmatpush1.bf16.msra.mxu0 %v130
  %175 = vmatprep.subr.bf16.mxu0 0
  %176 = vmatpush1.bf16.msra.mxu0 %v131
  %177 = vmatprep.subr.bf16.mxu0 0
  %178 = vmatpush1.bf16.msra.mxu0 %v132
  %179 = vmatprep.subr.bf16.mxu0 0
  %180 = vmatpush1.bf16.msra.mxu0 %v133
  %181 = vmatprep.subr.bf16.mxu0 0
  %182 = vmatpush1.bf16.msra.mxu0 %v134
  %183 = vmatprep.subr.bf16.mxu0 0
  %184 = vmatpush1.bf16.msra.mxu0 %v135
  %185 = vmatprep.subr.bf16.mxu0 0
  %186 = vmatpush1.bf16.msra.mxu0 %v136
  %187 = vmatprep.subr.bf16.mxu0 0
  %188 = vmatpush1.bf16.msra.mxu0 %v137
  %189 = vmatprep.subr.bf16.mxu0 0
  %190 = vmatpush1.bf16.msra.mxu0 %v161
  %191 = vmatprep.subr.bf16.mxu0 0
  %192 = vmatpush1.bf16.msra.mxu0 0
  %193 = vmatprep.subr.bf16.mxu0 0
  %194 = vmatpush1.bf16.msra.mxu0 0
  %195 = vmatprep.mubr.bf16.mxu0 %v154
  %196 = vmatmul.mubr.bf16.gmra.mrb[0].mxu0 %v65
  %v197 = vpop.f32.mrb[0].mxu0
  %v198 = vadd.f32 %v51, %v197
  %v199 = vpop.f32.mrb[0].mxu0
  %v200 = vpop.f32.mrb[0].mxu0
  %v201 = vadd.f32 %v51, %v200
  %v202 = vpop.f32.mrb[0].mxu0
  %203 = vmatprep.mubr.bf16.mxu0 %v157
  %204 = vmatmul.mubr.bf16.gmra.mrb[0].mxu0 %v67
  %v205 = vpop.f32.mrb[0].mxu0
  %v206 = vadd.f32 %v51, %v205
  %v207 = vpop.f32.mrb[0].mxu0
  %v208 = vpop.f32.mrb[0].mxu0
  %v209 = vadd.f32 %v51, %v208
  %v210 = vpop.f32.mrb[0].mxu0
  %211 = vdwg.mxu0
  %v212 = vmax.f32 %v198, 0.0
  %v213 = vmax.f32 %v201, 0.0
  %v214 = vmax.f32 %v206, 0.0
  %v215 = vmax.f32 %v209, 0.0
  %v216 = vpack.c.bf16 %v213, %v212
  %v217 = vpack.c.bf16 %v215, %v214
  %v220 = vunpack.c.l.b16 %v216
  %v221 = vunpack.c.h.b16 %v216
  %v222 = vunpack.c.l.b16 %v217
  %v223 = vunpack.c.h.b16 %v217
  %v224 = vpack.c.b16 %v220, %v220
  %v225 = vpack.c.b16 %v221, %v221
  %v226 = vpack.c.b16 %v222, %v222
  %v227 = vpack.c.b16 %v223, %v223
  %vm232 = vcmask 257024
  %233 = vst.msk [vmem:[%s3] sm:$0xf] %vm232, %v224
  %234 = vst.msk [vmem:[%s3 + $0x4] sm:$0xf] %vm232, %v225
  %235 = vst.msk [vmem:[%s3 + $0x8] sm:$0xf] %vm232, %v226
  %236 = vst.msk [vmem:[%s3 + $0xc] sm:$0xf] %vm232, %v227
  // Predicated region
  $region14: #{single_view_forward.13} parent=0 // pred_check
    _
  $region15: #{single_view_forward.13} parent=0 // pred_check_branch
    %238 = sbr.rel (0) target = $region17
  $region16: #{single_view_forward.13} parent=0 // pred_region
    _
  $region17: #{single_view_forward.13} parent=0 // pred_fallthru
    _
  // Predicated region
  $region18: #{single_view_forward.13} parent=0 // pred_check
    _
  $region19: #{single_view_forward.13} parent=0 // pred_check_branch
    %240 = sbr.rel (0) target = $region21
  $region20: #{single_view_forward.13} parent=0 // pred_region
    _
  $region21: #{single_view_forward.13} parent=0 // pred_fallthru
    _

// kernel: single_view_forward.14
$region0: #{single_view_forward.14}
  #allocation0 [shape = 'u32[]', space=smem, size = 0x4, offset = 0x4, fixed_abs, tag = 'smem constant byte address 0x4 - core index']
  #allocation1 [shape = 'u32[144,128]{1,0:T(1,128)}', space=vmem, size = 0x12000, scoped, tag = 'internal scratch']
  %s0 = inlined_call_operand.vmem [shape: bf16[8,288], index: 0, kind: input, shape index: {}]
  %s1 = inlined_call_operand.vmem [shape: bf16[288,96], index: 1, kind: input, shape index: {}]
  %s2 = inlined_call_operand.vmem [shape: f32[1,96], index: 2, kind: input, shape index: {}]
  %s3 = inlined_call_operand.vmem [shape: bf16[8,96], index: 3, kind: output, shape index: {}]
  %s4 = sld [smem:[#allocation0]]
  $region22: #{single_view_forward.14} parent=0
    _
  %s6 = ssub.s32 1, %s4
  %s7 = scalar_select 0, %s6, %s4
  // Predicated region
  $region2: #{single_view_forward.14} parent=0 // pred_check
    _
  $region3: #{single_view_forward.14} parent=0 // pred_check_branch
    %9 = sbr.rel (0) target = $region5
  $region4: #{single_view_forward.14} parent=0 // pred_region
    _
  $region5: #{single_view_forward.14} parent=0 // pred_fallthru
    _
  // Predicated region
  $region6: #{single_view_forward.14} parent=0 // pred_check
    _
  $region7: #{single_view_forward.14} parent=0 // pred_check_branch
    %11 = sbr.rel (0) target = $region9
  $region8: #{single_view_forward.14} parent=0 // pred_region
    _
  $region9: #{single_view_forward.14} parent=0 // pred_fallthru
    _
  // Predicated region
  $region10: #{single_view_forward.14} parent=0 // pred_check
    _
  $region11: #{single_view_forward.14} parent=0 // pred_check_branch
    %13 = sbr.rel (0) target = $region13
  $region12: #{single_view_forward.14} parent=0 // pred_region
    _
  $region13: #{single_view_forward.14} parent=0 // pred_fallthru
    _
  %v15 = vld [vmem:[%s0] sm:$0xff]
  %v16 = vld [vmem:[%s0 + $0x8] sm:$0xf]
  %v17 = vld [vmem:[%s1] sm:$0xf]
  %v18 = vld [vmem:[%s1 + $0x4] sm:$0xf]
  %v19 = vld [vmem:[%s1 + $0x8] sm:$0xf]
  %v20 = vld [vmem:[%s1 + $0xc] sm:$0xf]
  %v21 = vld [vmem:[%s1 + $0x10] sm:$0xf]
  %v22 = vld [vmem:[%s1 + $0x14] sm:$0xf]
  %v23 = vld [vmem:[%s1 + $0x18] sm:$0xf]
  %v24 = vld [vmem:[%s1 + $0x1c] sm:$0xf]
  %v25 = vld [vmem:[%s1 + $0x20] sm:$0xf]
  %v26 = vld [vmem:[%s1 + $0x24] sm:$0xf]
  %v27 = vld [vmem:[%s1 + $0x28] sm:$0xf]
  %v28 = vld [vmem:[%s1 + $0x2c] sm:$0xf]
  %v29 = vld [vmem:[%s1 + $0x30] sm:$0xf]
  %v30 = vld [vmem:[%s1 + $0x34] sm:$0xf]
  %v31 = vld [vmem:[%s1 + $0x38] sm:$0xf]
  %v32 = vld [vmem:[%s1 + $0x3c] sm:$0xf]
  %v33 = vld [vmem:[%s1 + $0x40] sm:$0xf]
  %v34 = vld [vmem:[%s1 + $0x44] sm:$0xf]
  %v35 = vld [vmem:[%s1 + $0x48] sm:$0xf]
  %v36 = vld [vmem:[%s1 + $0x4c] sm:$0xf]
  %v37 = vld [vmem:[%s1 + $0x50] sm:$0xf]
  %v38 = vld [vmem:[%s1 + $0x54] sm:$0xf]
  %v39 = vld [vmem:[%s1 + $0x58] sm:$0xf]
  %v40 = vld [vmem:[%s1 + $0x5c] sm:$0xf]
  %v41 = vld [vmem:[%s1 + $0x60] sm:$0xf]
  %v42 = vld [vmem:[%s1 + $0x64] sm:$0xf]
  %v43 = vld [vmem:[%s1 + $0x68] sm:$0xf]
  %v44 = vld [vmem:[%s1 + $0x6c] sm:$0xf]
  %v45 = vld [vmem:[%s1 + $0x70] sm:$0xf]
  %v46 = vld [vmem:[%s1 + $0x74] sm:$0xf]
  %v47 = vld [vmem:[%s1 + $0x78] sm:$0xf]
  %v48 = vld [vmem:[%s1 + $0x7c] sm:$0xf]
  %v49 = vld [vmem:[%s1 + $0x80] sm:$0xf]
  %v50 = vld [vmem:[%s1 + $0x84] sm:$0xf]
  %v51 = vld [vmem:[%s1 + $0x88] sm:$0xf]
  %v52 = vld [vmem:[%s1 + $0x8c] sm:$0xf]
  %v53 = vld [vmem:[%s2] sm:$0x1]
  %v55 = vlaneseq
  %v56 = vshrl.u32 %v55, 7
  %v57 = vsub.s32 0, %v56
  %v58 = vrot.slane %v53, %v57
  %v62 = vunpack.c.l.b16 %v15
  %v63 = vunpack.c.h.b16 %v15
  %v64 = vunpack.c.l.b16 %v16
  %v65 = vpack.c.b16 %v62, %v62
  %v66 = vpack.c.b16 %v63, %v63
  %v67 = vpack.c.b16 %v64, %v64
  %v106 = vunpack.c.l.b16 %v17
  %v107 = vunpack.c.l.b16 %v18
  %v108 = vunpack.c.l.b16 %v19
  %v109 = vunpack.c.l.b16 %v20
  %v110 = vunpack.c.l.b16 %v21
  %v111 = vunpack.c.l.b16 %v22
  %v112 = vunpack.c.l.b16 %v23
  %v113 = vunpack.c.l.b16 %v24
  %v114 = vunpack.c.l.b16 %v25
  %v115 = vunpack.c.l.b16 %v26
  %v116 = vunpack.c.l.b16 %v27
  %v117 = vunpack.c.l.b16 %v28
  %v118 = vunpack.c.l.b16 %v29
  %v119 = vunpack.c.l.b16 %v30
  %v120 = vunpack.c.l.b16 %v31
  %v121 = vunpack.c.l.b16 %v32
  %v122 = vunpack.c.l.b16 %v33
  %v123 = vunpack.c.l.b16 %v34
  %v124 = vunpack.c.l.b16 %v35
  %v125 = vunpack.c.l.b16 %v36
  %v126 = vunpack.c.l.b16 %v37
  %v127 = vunpack.c.l.b16 %v38
  %v128 = vunpack.c.l.b16 %v39
  %v129 = vunpack.c.l.b16 %v40
  %v130 = vunpack.c.l.b16 %v41
  %v131 = vunpack.c.l.b16 %v42
  %v132 = vunpack.c.l.b16 %v43
  %v133 = vunpack.c.l.b16 %v44
  %v134 = vunpack.c.l.b16 %v45
  %v135 = vunpack.c.l.b16 %v46
  %v136 = vunpack.c.l.b16 %v47
  %v137 = vunpack.c.l.b16 %v48
  %v138 = vunpack.c.l.b16 %v49
  %v139 = vunpack.c.l.b16 %v50
  %v140 = vunpack.c.l.b16 %v51
  %v141 = vunpack.c.l.b16 %v52
  %v142 = vpack.c.b16 %v107, %v106
  %v143 = vpack.c.b16 %v109, %v108
  %v144 = vpack.c.b16 %v111, %v110
  %v145 = vpack.c.b16 %v113, %v112
  %v146 = vpack.c.b16 %v115, %v114
  %v147 = vpack.c.b16 %v117, %v116
  %v148 = vpack.c.b16 %v119, %v118
  %v149 = vpack.c.b16 %v121, %v120
  %v150 = vpack.c.b16 %v123, %v122
  %v151 = vpack.c.b16 %v125, %v124
  %v152 = vpack.c.b16 %v127, %v126
  %v153 = vpack.c.b16 %v129, %v128
  %v154 = vpack.c.b16 %v131, %v130
  %v155 = vpack.c.b16 %v133, %v132
  %v156 = vpack.c.b16 %v135, %v134
  %v157 = vpack.c.b16 %v137, %v136
  %v158 = vpack.c.b16 %v139, %v138
  %v159 = vpack.c.b16 %v141, %v140
  %vm178 = vcmask 261120
  %v180 = vsel %vm178, %v67, 0
  %182 = vmatprep.subr.bf16.mxu0 0
  %183 = vmatpush1.bf16.msra.mxu0 %v142
  %184 = vmatprep.subr.bf16.mxu0 0
  %185 = vmatpush1.bf16.msra.mxu0 %v143
  %186 = vmatprep.subr.bf16.mxu0 0
  %187 = vmatpush1.bf16.msra.mxu0 %v144
  %188 = vmatprep.subr.bf16.mxu0 0
  %189 = vmatpush1.bf16.msra.mxu0 %v145
  %190 = vmatprep.subr.bf16.mxu0 0
  %191 = vmatpush1.bf16.msra.mxu0 %v146
  %192 = vmatprep.subr.bf16.mxu0 0
  %193 = vmatpush1.bf16.msra.mxu0 %v147
  %194 = vmatprep.subr.bf16.mxu0 0
  %195 = vmatpush1.bf16.msra.mxu0 %v148
  %196 = vmatprep.subr.bf16.mxu0 0
  %197 = vmatpush1.bf16.msra.mxu0 %v149
  %198 = vmatprep.subr.bf16.mxu0 0
  %199 = vmatpush1.bf16.msra.mxu0 %v150
  %200 = vmatprep.subr.bf16.mxu0 0
  %201 = vmatpush1.bf16.msra.mxu0 %v151
  %202 = vmatprep.subr.bf16.mxu0 0
  %203 = vmatpush1.bf16.msra.mxu0 %v152
  %204 = vmatprep.subr.bf16.mxu0 0
  %205 = vmatpush1.bf16.msra.mxu0 %v153
  %206 = vmatprep.subr.bf16.mxu0 0
  %207 = vmatpush1.bf16.msra.mxu0 %v154
  %208 = vmatprep.subr.bf16.mxu0 0
  %209 = vmatpush1.bf16.msra.mxu0 %v155
  %210 = vmatprep.subr.bf16.mxu0 0
  %211 = vmatpush1.bf16.msra.mxu0 %v156
  %212 = vmatprep.subr.bf16.mxu0 0
  %213 = vmatpush1.bf16.msra.mxu0 %v157
  %214 = vmatprep.mubr.bf16.mxu0 %v66
  %215 = vmatmul.mubr.bf16.gmra.mrb[0].mxu0 %v65
  %v216 = vpop.f32.mrb[0].mxu0
  %v217 = vadd.f32 %v58, %v216
  %v218 = vpop.f32.mrb[0].mxu0
  %v219 = vpop.f32.mrb[0].mxu0
  %v220 = vpop.f32.mrb[0].mxu0
  %221 = vdwg.mxu0
  %222 = vmatprep.subr.bf16.mxu0 0
  %223 = vmatpush1.bf16.msra.mxu0 %v158
  %224 = vmatprep.subr.bf16.mxu0 0
  %225 = vmatpush1.bf16.msra.mxu0 %v159
  %226 = vmatprep.subr.bf16.mxu0 0
  %227 = vmatpush1.bf16.msra.mxu0 0
  %228 = vmatprep.subr.bf16.mxu0 0
  %229 = vmatpush1.bf16.msra.mxu0 0
  %230 = vmatprep.subr.bf16.mxu0 0
  %231 = vmatpush1.bf16.msra.mxu0 0
  %232 = vmatprep.subr.bf16.mxu0 0
  %233 = vmatpush1.bf16.msra.mxu0 0
  %234 = vmatprep.subr.bf16.mxu0 0
  %235 = vmatpush1.bf16.msra.mxu0 0
  %236 = vmatprep.subr.bf16.mxu0 0
  %237 = vmatpush1.bf16.msra.mxu0 0
  %238 = vmatprep.subr.bf16.mxu0 0
  %239 = vmatpush1.bf16.msra.mxu0 0
  %240 = vmatprep.subr.bf16.mxu0 0
  %241 = vmatpush1.bf16.msra.mxu0 0
  %242 = vmatprep.subr.bf16.mxu0 0
  %243 = vmatpush1.bf16.msra.mxu0 0
  %244 = vmatprep.subr.bf16.mxu0 0
  %245 = vmatpush1.bf16.msra.mxu0 0
  %246 = vmatprep.subr.bf16.mxu0 0
  %247 = vmatpush1.bf16.msra.mxu0 0
  %248 = vmatprep.subr.bf16.mxu0 0
  %249 = vmatpush1.bf16.msra.mxu0 0
  %250 = vmatprep.subr.bf16.mxu0 0
  %251 = vmatpush1.bf16.msra.mxu0 0
  %252 = vmatprep.subr.bf16.mxu0 0
  %253 = vmatpush1.bf16.msra.mxu0 0
  %254 = vmatprep.mubr.bf16.mxu0 0
  %255 = vmatmul.mubr.bf16.gmra.mrb[0].mxu0 %v180
  %v256 = vpop.f32.mrb[0].mxu0
  %v257 = vadd.f32 %v217, %v256
  %v258 = vpop.f32.mrb[0].mxu0
  %v259 = vpop.f32.mrb[0].mxu0
  %v260 = vpop.f32.mrb[0].mxu0
  %261 = vdwg.mxu0
  %v262 = vmax.f32 %v257, 0.0
  %v263 = vpack.c.bf16 %v262, %v262
  %vm264 = vcmask 781312
  %265 = vst.msk [vmem:[%s3] sm:$0xf] %vm264, %v263
  // Predicated region
  $region14: #{single_view_forward.14} parent=0 // pred_check
    _
  $region15: #{single_view_forward.14} parent=0 // pred_check_branch
    %267 = sbr.rel (0) target = $region17
  $region16: #{single_view_forward.14} parent=0 // pred_region
    _
  $region17: #{single_view_forward.14} parent=0 // pred_fallthru
    _
  // Predicated region
  $region18: #{single_view_forward.14} parent=0 // pred_check
    _
  $region19: #{single_view_forward.14} parent=0 // pred_check_branch
    %269 = sbr.rel (0) target = $region21
  $region20: #{single_view_forward.14} parent=0 // pred_region
    _
  $region21: #{single_view_forward.14} parent=0 // pred_fallthru
    _

// kernel: single_view_forward.15
$region0: #{single_view_forward.15}
  #allocation0 [shape = 'u32[]', space=smem, size = 0x4, offset = 0x4, fixed_abs, tag = 'smem constant byte address 0x4 - core index']
  #allocation1 [shape = 'u32[144,128]{1,0:T(1,128)}', space=vmem, size = 0x12000, scoped, tag = 'internal scratch']
  %s0 = inlined_call_operand.vmem [shape: bf16[2,864], index: 0, kind: input, shape index: {}]
  %s1 = inlined_call_operand.vmem [shape: bf16[864,64], index: 1, kind: input, shape index: {}]
  %s2 = inlined_call_operand.vmem [shape: f32[1,64], index: 2, kind: input, shape index: {}]
  %s3 = inlined_call_operand.vmem [shape: bf16[2,64], index: 3, kind: output, shape index: {}]
  %s4 = sld [smem:[#allocation0]]
  $region22: #{single_view_forward.15} parent=0
    _
  %s6 = ssub.s32 1, %s4
  %s7 = scalar_select 0, %s6, %s4
  // Predicated region
  $region2: #{single_view_forward.15} parent=0 // pred_check
    _
  $region3: #{single_view_forward.15} parent=0 // pred_check_branch
    %9 = sbr.rel (0) target = $region5
  $region4: #{single_view_forward.15} parent=0 // pred_region
    _
  $region5: #{single_view_forward.15} parent=0 // pred_fallthru
    _
  // Predicated region
  $region6: #{single_view_forward.15} parent=0 // pred_check
    _
  $region7: #{single_view_forward.15} parent=0 // pred_check_branch
    %11 = sbr.rel (0) target = $region9
  $region8: #{single_view_forward.15} parent=0 // pred_region
    _
  $region9: #{single_view_forward.15} parent=0 // pred_fallthru
    _
  // Predicated region
  $region10: #{single_view_forward.15} parent=0 // pred_check
    _
  $region11: #{single_view_forward.15} parent=0 // pred_check_branch
    %13 = sbr.rel (0) target = $region13
  $region12: #{single_view_forward.15} parent=0 // pred_region
    _
  $region13: #{single_view_forward.15} parent=0 // pred_fallthru
    _
  %v15 = vld [vmem:[%s0] sm:$0x7f]
  %v16 = vld [vmem:[%s1] sm:$0xf]
  %v17 = vld [vmem:[%s1 + $0x4] sm:$0xf]
  %v18 = vld [vmem:[%s1 + $0x8] sm:$0xf]
  %v19 = vld [vmem:[%s1 + $0xc] sm:$0xf]
  %v20 = vld [vmem:[%s1 + $0x10] sm:$0xf]
  %v21 = vld [vmem:[%s1 + $0x14] sm:$0xf]
  %v22 = vld [vmem:[%s1 + $0x18] sm:$0xf]
  %v23 = vld [vmem:[%s1 + $0x1c] sm:$0xf]
  %v24 = vld [vmem:[%s1 + $0x20] sm:$0xf]
  %v25 = vld [vmem:[%s1 + $0x24] sm:$0xf]
  %v26 = vld [vmem:[%s1 + $0x28] sm:$0xf]
  %v27 = vld [vmem:[%s1 + $0x2c] sm:$0xf]
  %v28 = vld [vmem:[%s1 + $0x30] sm:$0xf]
  %v29 = vld [vmem:[%s1 + $0x34] sm:$0xf]
  %v30 = vld [vmem:[%s1 + $0x38] sm:$0xf]
  %v31 = vld [vmem:[%s1 + $0x3c] sm:$0xf]
  %v32 = vld [vmem:[%s1 + $0x40] sm:$0xf]
  %v33 = vld [vmem:[%s1 + $0x44] sm:$0xf]
  %v34 = vld [vmem:[%s1 + $0x48] sm:$0xf]
  %v35 = vld [vmem:[%s1 + $0x4c] sm:$0xf]
  %v36 = vld [vmem:[%s1 + $0x50] sm:$0xf]
  %v37 = vld [vmem:[%s1 + $0x54] sm:$0xf]
  %v38 = vld [vmem:[%s1 + $0x58] sm:$0xf]
  %v39 = vld [vmem:[%s1 + $0x5c] sm:$0xf]
  %v40 = vld [vmem:[%s1 + $0x60] sm:$0xf]
  %v41 = vld [vmem:[%s1 + $0x64] sm:$0xf]
  %v42 = vld [vmem:[%s1 + $0x68] sm:$0xf]
  %v43 = vld [vmem:[%s1 + $0x6c] sm:$0xf]
  %v44 = vld [vmem:[%s1 + $0x70] sm:$0xf]
  %v45 = vld [vmem:[%s1 + $0x74] sm:$0xf]
  %v46 = vld [vmem:[%s1 + $0x78] sm:$0xf]
  %v47 = vld [vmem:[%s1 + $0x7c] sm:$0xf]
  %v48 = vld [vmem:[%s1 + $0x80] sm:$0xf]
  %v49 = vld [vmem:[%s1 + $0x84] sm:$0xf]
  %v50 = vld [vmem:[%s1 + $0x88] sm:$0xf]
  %v51 = vld [vmem:[%s1 + $0x8c] sm:$0xf]
  %v52 = vld [vmem:[%s1 + $0x90] sm:$0xf]
  %v53 = vld [vmem:[%s1 + $0x94] sm:$0xf]
  %v54 = vld [vmem:[%s1 + $0x98] sm:$0xf]
  %v55 = vld [vmem:[%s1 + $0x9c] sm:$0xf]
  %v56 = vld [vmem:[%s1 + $0xa0] sm:$0xf]
  %v57 = vld [vmem:[%s1 + $0xa4] sm:$0xf]
  %v58 = vld [vmem:[%s1 + $0xa8] sm:$0xf]
  %v59 = vld [vmem:[%s1 + $0xac] sm:$0xf]
  %v60 = vld [vmem:[%s1 + $0xb0] sm:$0xf]
  %v61 = vld [vmem:[%s1 + $0xb4] sm:$0xf]
  %v62 = vld [vmem:[%s1 + $0xb8] sm:$0xf]
  %v63 = vld [vmem:[%s1 + $0xbc] sm:$0xf]
  %v64 = vld [vmem:[%s1 + $0xc0] sm:$0xf]
  %v65 = vld [vmem:[%s1 + $0xc4] sm:$0xf]
  %v66 = vld [vmem:[%s1 + $0xc8] sm:$0xf]
  %v67 = vld [vmem:[%s1 + $0xcc] sm:$0xf]
  %v68 = vld [vmem:[%s1 + $0xd0] sm:$0xf]
  %v69 = vld [vmem:[%s1 + $0xd4] sm:$0xf]
  %v70 = vld [vmem:[%s1 + $0xd8] sm:$0xf]
  %v71 = vld [vmem:[%s1 + $0xdc] sm:$0xf]
  %v72 = vld [vmem:[%s1 + $0xe0] sm:$0xf]
  %v73 = vld [vmem:[%s1 + $0xe4] sm:$0xf]
  %v74 = vld [vmem:[%s1 + $0xe8] sm:$0xf]
  %v75 = vld [vmem:[%s1 + $0xec] sm:$0xf]
  %v76 = vld [vmem:[%s1 + $0xf0] sm:$0xf]
  %v77 = vld [vmem:[%s1 + $0xf4] sm:$0xf]
  %v78 = vld [vmem:[%s1 + $0xf8] sm:$0xf]
  %v79 = vld [vmem:[%s1 + $0xfc] sm:$0xf]
  %v80 = vld [vmem:[%s1 + $0x100] sm:$0xf]
  %v81 = vld [vmem:[%s1 + $0x104] sm:$0xf]
  %v82 = vld [vmem:[%s1 + $0x108] sm:$0xf]
  %v83 = vld [vmem:[%s1 + $0x10c] sm:$0xf]
  %v84 = vld [vmem:[%s1 + $0x110] sm:$0xf]
  %v85 = vld [vmem:[%s1 + $0x114] sm:$0xf]
  %v86 = vld [vmem:[%s1 + $0x118] sm:$0xf]
  %v87 = vld [vmem:[%s1 + $0x11c] sm:$0xf]
  %v88 = vld [vmem:[%s1 + $0x120] sm:$0xf]
  %v89 = vld [vmem:[%s1 + $0x124] sm:$0xf]
  %v90 = vld [vmem:[%s1 + $0x128] sm:$0xf]
  %v91 = vld [vmem:[%s1 + $0x12c] sm:$0xf]
  %v92 = vld [vmem:[%s1 + $0x130] sm:$0xf]
  %v93 = vld [vmem:[%s1 + $0x134] sm:$0xf]
  %v94 = vld [vmem:[%s1 + $0x138] sm:$0xf]
  %v95 = vld [vmem:[%s1 + $0x13c] sm:$0xf]
  %v96 = vld [vmem:[%s1 + $0x140] sm:$0xf]
  %v97 = vld [vmem:[%s1 + $0x144] sm:$0xf]
  %v98 = vld [vmem:[%s1 + $0x148] sm:$0xf]
  %v99 = vld [vmem:[%s1 + $0x14c] sm:$0xf]
  %v100 = vld [vmem:[%s1 + $0x150] sm:$0xf]
  %v101 = vld [vmem:[%s1 + $0x154] sm:$0xf]
  %v102 = vld [vmem:[%s1 + $0x158] sm:$0xf]
  %v103 = vld [vmem:[%s1 + $0x15c] sm:$0xf]
  %v104 = vld [vmem:[%s1 + $0x160] sm:$0xf]
  %v105 = vld [vmem:[%s1 + $0x164] sm:$0xf]
  %v106 = vld [vmem:[%s1 + $0x168] sm:$0xf]
  %v107 = vld [vmem:[%s1 + $0x16c] sm:$0xf]
  %v108 = vld [vmem:[%s1 + $0x170] sm:$0xf]
  %v109 = vld [vmem:[%s1 + $0x174] sm:$0xf]
  %v110 = vld [vmem:[%s1 + $0x178] sm:$0xf]
  %v111 = vld [vmem:[%s1 + $0x17c] sm:$0xf]
  %v112 = vld [vmem:[%s1 + $0x180] sm:$0xf]
  %v113 = vld [vmem:[%s1 + $0x184] sm:$0xf]
  %v114 = vld [vmem:[%s1 + $0x188] sm:$0xf]
  %v115 = vld [vmem:[%s1 + $0x18c] sm:$0xf]
  %v116 = vld [vmem:[%s1 + $0x190] sm:$0xf]
  %v117 = vld [vmem:[%s1 + $0x194] sm:$0xf]
  %v118 = vld [vmem:[%s1 + $0x198] sm:$0xf]
  %v119 = vld [vmem:[%s1 + $0x19c] sm:$0xf]
  %v120 = vld [vmem:[%s1 + $0x1a0] sm:$0xf]
  %v121 = vld [vmem:[%s1 + $0x1a4] sm:$0xf]
  %v122 = vld [vmem:[%s1 + $0x1a8] sm:$0xf]
  %v123 = vld [vmem:[%s1 + $0x1ac] sm:$0xf]
  %v124 = vld [vmem:[%s2] sm:$0x1]
  %v126 = vlaneseq
  %v127 = vshrl.u32 %v126, 7
  %v128 = vsub.s32 0, %v127
  %v129 = vrot.slane %v124, %v128
  %v132 = vcombine.high %v15, %v15
  %v134 = vunpack.c.l.s4 1966171168
  %v135 = vunpack.c.0.s8 %v134
  %v136 = vlaneseq
  %v137 = vshrl.u32 %v136, 7
  %v138 = vsub.s32 %v135, %v137
  %v139 = vrot.slane %v15, %v138
  %v141 = vunpack.c.l.s4 1966171168
  %v142 = vunpack.c.0.s8 %v141
  %v143 = vlaneseq
  %v144 = vshrl.u32 %v143, 7
  %v145 = vsub.s32 %v142, %v144
  %v146 = vrot.slane %v132, %v145
  %v147 = vcombine.high %v139, %v139
  %v148 = vcombine.high %v146, %v146
  %v150 = vunpack.c.l.s4 1966171168
  %v151 = vunpack.c.0.s8 %v150
  %v152 = vlaneseq
  %v153 = vshrl.u32 %v152, 7
  %v154 = vsub.s32 %v151, %v153
  %v155 = vrot.slane %v139, %v154
  %v157 = vunpack.c.l.s4 1966171168
  %v158 = vunpack.c.0.s8 %v157
  %v159 = vlaneseq
  %v160 = vshrl.u32 %v159, 7
  %v161 = vsub.s32 %v158, %v160
  %v162 = vrot.slane %v146, %v161
  %v164 = vunpack.c.l.s4 1966171168
  %v165 = vunpack.c.0.s8 %v164
  %v166 = vlaneseq
  %v167 = vshrl.u32 %v166, 7
  %v168 = vsub.s32 %v165, %v167
  %v169 = vrot.slane %v147, %v168
  %v171 = vunpack.c.l.s4 1966171168
  %v172 = vunpack.c.0.s8 %v171
  %v173 = vlaneseq
  %v174 = vshrl.u32 %v173, 7
  %v175 = vsub.s32 %v172, %v174
  %v176 = vrot.slane %v148, %v175
  %v177 = vcombine.high %v155, %v155
  %v178 = vcombine.high %v162, %v162
  %v179 = vcombine.high %v169, %v169
  %v294 = vunpack.c.l.b16 %v16
  %v295 = vunpack.c.l.b16 %v17
  %v296 = vunpack.c.l.b16 %v18
  %v297 = vunpack.c.l.b16 %v19
  %v298 = vunpack.c.l.b16 %v20
  %v299 = vunpack.c.l.b16 %v21
  %v300 = vunpack.c.l.b16 %v22
  %v301 = vunpack.c.l.b16 %v23
  %v302 = vunpack.c.l.b16 %v24
  %v303 = vunpack.c.l.b16 %v25
  %v304 = vunpack.c.l.b16 %v26
  %v305 = vunpack.c.l.b16 %v27
  %v306 = vunpack.c.l.b16 %v28
  %v307 = vunpack.c.l.b16 %v29
  %v308 = vunpack.c.l.b16 %v30
  %v309 = vunpack.c.l.b16 %v31
  %v310 = vunpack.c.l.b16 %v32
  %v311 = vunpack.c.l.b16 %v33
  %v312 = vunpack.c.l.b16 %v34
  %v313 = vunpack.c.l.b16 %v35
  %v314 = vunpack.c.l.b16 %v36
  %v315 = vunpack.c.l.b16 %v37
  %v316 = vunpack.c.l.b16 %v38
  %v317 = vunpack.c.l.b16 %v39
  %v318 = vunpack.c.l.b16 %v40
  %v319 = vunpack.c.l.b16 %v41
  %v320 = vunpack.c.l.b16 %v42
  %v321 = vunpack.c.l.b16 %v43
  %v322 = vunpack.c.l.b16 %v44
  %v323 = vunpack.c.l.b16 %v45
  %v324 = vunpack.c.l.b16 %v46
  %v325 = vunpack.c.l.b16 %v47
  %v326 = vunpack.c.l.b16 %v48
  %v327 = vunpack.c.l.b16 %v49
  %v328 = vunpack.c.l.b16 %v50
  %v329 = vunpack.c.l.b16 %v51
  %v330 = vunpack.c.l.b16 %v52
  %v331 = vunpack.c.l.b16 %v53
  %v332 = vunpack.c.l.b16 %v54
  %v333 = vunpack.c.l.b16 %v55
  %v334 = vunpack.c.l.b16 %v56
  %v335 = vunpack.c.l.b16 %v57
  %v336 = vunpack.c.l.b16 %v58
  %v337 = vunpack.c.l.b16 %v59
  %v338 = vunpack.c.l.b16 %v60
  %v339 = vunpack.c.l.b16 %v61
  %v340 = vunpack.c.l.b16 %v62
  %v341 = vunpack.c.l.b16 %v63
  %v342 = vunpack.c.l.b16 %v64
  %v343 = vunpack.c.l.b16 %v65
  %v344 = vunpack.c.l.b16 %v66
  %v345 = vunpack.c.l.b16 %v67
  %v346 = vunpack.c.l.b16 %v68
  %v347 = vunpack.c.l.b16 %v69
  %v348 = vunpack.c.l.b16 %v70
  %v349 = vunpack.c.l.b16 %v71
  %v350 = vunpack.c.l.b16 %v72
  %v351 = vunpack.c.l.b16 %v73
  %v352 = vunpack.c.l.b16 %v74
  %v353 = vunpack.c.l.b16 %v75
  %v354 = vunpack.c.l.b16 %v76
  %v355 = vunpack.c.l.b16 %v77
  %v356 = vunpack.c.l.b16 %v78
  %v357 = vunpack.c.l.b16 %v79
  %v358 = vunpack.c.l.b16 %v80
  %v359 = vunpack.c.l.b16 %v81
  %v360 = vunpack.c.l.b16 %v82
  %v361 = vunpack.c.l.b16 %v83
  %v362 = vunpack.c.l.b16 %v84
  %v363 = vunpack.c.l.b16 %v85
  %v364 = vunpack.c.l.b16 %v86
  %v365 = vunpack.c.l.b16 %v87
  %v366 = vunpack.c.l.b16 %v88
  %v367 = vunpack.c.l.b16 %v89
  %v368 = vunpack.c.l.b16 %v90
  %v369 = vunpack.c.l.b16 %v91
  %v370 = vunpack.c.l.b16 %v92
  %v371 = vunpack.c.l.b16 %v93
  %v372 = vunpack.c.l.b16 %v94
  %v373 = vunpack.c.l.b16 %v95
  %v374 = vunpack.c.l.b16 %v96
  %v375 = vunpack.c.l.b16 %v97
  %v376 = vunpack.c.l.b16 %v98
  %v377 = vunpack.c.l.b16 %v99
  %v378 = vunpack.c.l.b16 %v100
  %v379 = vunpack.c.l.b16 %v101
  %v380 = vunpack.c.l.b16 %v102
  %v381 = vunpack.c.l.b16 %v103
  %v382 = vunpack.c.l.b16 %v104
  %v383 = vunpack.c.l.b16 %v105
  %v384 = vunpack.c.l.b16 %v106
  %v385 = vunpack.c.l.b16 %v107
  %v386 = vunpack.c.l.b16 %v108
  %v387 = vunpack.c.l.b16 %v109
  %v388 = vunpack.c.l.b16 %v110
  %v389 = vunpack.c.l.b16 %v111
  %v390 = vunpack.c.l.b16 %v112
  %v391 = vunpack.c.l.b16 %v113
  %v392 = vunpack.c.l.b16 %v114
  %v393 = vunpack.c.l.b16 %v115
  %v394 = vunpack.c.l.b16 %v116
  %v395 = vunpack.c.l.b16 %v117
  %v396 = vunpack.c.l.b16 %v118
  %v397 = vunpack.c.l.b16 %v119
  %v398 = vunpack.c.l.b16 %v120
  %v399 = vunpack.c.l.b16 %v121
  %v400 = vunpack.c.l.b16 %v122
  %v401 = vunpack.c.l.b16 %v123
  %v402 = vpack.c.b16 %v295, %v294
  %v403 = vpack.c.b16 %v297, %v296
  %v404 = vpack.c.b16 %v299, %v298
  %v405 = vpack.c.b16 %v301, %v300
  %v406 = vpack.c.b16 %v303, %v302
  %v407 = vpack.c.b16 %v305, %v304
  %v408 = vpack.c.b16 %v307, %v306
  %v409 = vpack.c.b16 %v309, %v308
  %v410 = vpack.c.b16 %v311, %v310
  %v411 = vpack.c.b16 %v313, %v312
  %v412 = vpack.c.b16 %v315, %v314
  %v413 = vpack.c.b16 %v317, %v316
  %v414 = vpack.c.b16 %v319, %v318
  %v415 = vpack.c.b16 %v321, %v320
  %v416 = vpack.c.b16 %v323, %v322
  %v417 = vpack.c.b16 %v325, %v324
  %v418 = vpack.c.b16 %v327, %v326
  %v419 = vpack.c.b16 %v329, %v328
  %v420 = vpack.c.b16 %v331, %v330
  %v421 = vpack.c.b16 %v333, %v332
  %v422 = vpack.c.b16 %v335, %v334
  %v423 = vpack.c.b16 %v337, %v336
  %v424 = vpack.c.b16 %v339, %v338
  %v425 = vpack.c.b16 %v341, %v340
  %v426 = vpack.c.b16 %v343, %v342
  %v427 = vpack.c.b16 %v345, %v344
  %v428 = vpack.c.b16 %v347, %v346
  %v429 = vpack.c.b16 %v349, %v348
  %v430 = vpack.c.b16 %v351, %v350
  %v431 = vpack.c.b16 %v353, %v352
  %v432 = vpack.c.b16 %v355, %v354
  %v433 = vpack.c.b16 %v357, %v356
  %v434 = vpack.c.b16 %v359, %v358
  %v435 = vpack.c.b16 %v361, %v360
  %v436 = vpack.c.b16 %v363, %v362
  %v437 = vpack.c.b16 %v365, %v364
  %v438 = vpack.c.b16 %v367, %v366
  %v439 = vpack.c.b16 %v369, %v368
  %v440 = vpack.c.b16 %v371, %v370
  %v441 = vpack.c.b16 %v373, %v372
  %v442 = vpack.c.b16 %v375, %v374
  %v443 = vpack.c.b16 %v377, %v376
  %v444 = vpack.c.b16 %v379, %v378
  %v445 = vpack.c.b16 %v381, %v380
  %v446 = vpack.c.b16 %v383, %v382
  %v447 = vpack.c.b16 %v385, %v384
  %v448 = vpack.c.b16 %v387, %v386
  %v449 = vpack.c.b16 %v389, %v388
  %v450 = vpack.c.b16 %v391, %v390
  %v451 = vpack.c.b16 %v393, %v392
  %v452 = vpack.c.b16 %v395, %v394
  %v453 = vpack.c.b16 %v397, %v396
  %v454 = vpack.c.b16 %v399, %v398
  %v455 = vpack.c.b16 %v401, %v400
  %vm510 = vcmask 785408
  %v512 = vsel %vm510, %v178, 0
  %514 = vmatprep.subr.bf16.mxu0 0
  %515 = vmatpush1.bf16.msra.mxu0 %v402
  %516 = vmatprep.subr.bf16.mxu0 0
  %517 = vmatpush1.bf16.msra.mxu0 %v403
  %518 = vmatprep.subr.bf16.mxu0 0
  %519 = vmatpush1.bf16.msra.mxu0 %v404
  %520 = vmatprep.subr.bf16.mxu0 0
  %521 = vmatpush1.bf16.msra.mxu0 %v405
  %522 = vmatprep.subr.bf16.mxu0 0
  %523 = vmatpush1.bf16.msra.mxu0 %v406
  %524 = vmatprep.subr.bf16.mxu0 0
  %525 = vmatpush1.bf16.msra.mxu0 %v407
  %526 = vmatprep.subr.bf16.mxu0 0
  %527 = vmatpush1.bf16.msra.mxu0 %v408
  %528 = vmatprep.subr.bf16.mxu0 0
  %529 = vmatpush1.bf16.msra.mxu0 %v409
  %530 = vmatprep.subr.bf16.mxu0 0
  %531 = vmatpush1.bf16.msra.mxu0 %v410
  %532 = vmatprep.subr.bf16.mxu0 0
  %533 = vmatpush1.bf16.msra.mxu0 %v411
  %534 = vmatprep.subr.bf16.mxu0 0
  %535 = vmatpush1.bf16.msra.mxu0 %v412
  %536 = vmatprep.subr.bf16.mxu0 0
  %537 = vmatpush1.bf16.msra.mxu0 %v413
  %538 = vmatprep.subr.bf16.mxu0 0
  %539 = vmatpush1.bf16.msra.mxu0 %v414
  %540 = vmatprep.subr.bf16.mxu0 0
  %541 = vmatpush1.bf16.msra.mxu0 %v415
  %542 = vmatprep.subr.bf16.mxu0 0
  %543 = vmatpush1.bf16.msra.mxu0 %v416
  %544 = vmatprep.subr.bf16.mxu0 0
  %545 = vmatpush1.bf16.msra.mxu0 %v417
  %546 = vmatprep.mubr.bf16.mxu0 %v169
  %547 = vmatmul.mubr.bf16.gmra.mrb[0].mxu0 %v155
  %v548 = vpop.f32.mrb[0].mxu0
  %v549 = vadd.f32 %v129, %v548
  %v550 = vpop.f32.mrb[0].mxu0
  %v551 = vpop.f32.mrb[0].mxu0
  %v552 = vpop.f32.mrb[0].mxu0
  %553 = vdwg.mxu0
  %554 = vmatprep.subr.bf16.mxu0 0
  %555 = vmatpush1.bf16.msra.mxu0 %v418
  %556 = vmatprep.subr.bf16.mxu0 0
  %557 = vmatpush1.bf16.msra.mxu0 %v419
  %558 = vmatprep.subr.bf16.mxu0 0
  %559 = vmatpush1.bf16.msra.mxu0 %v420
  %560 = vmatprep.subr.bf16.mxu0 0
  %561 = vmatpush1.bf16.msra.mxu0 %v421
  %562 = vmatprep.subr.bf16.mxu0 0
  %563 = vmatpush1.bf16.msra.mxu0 %v422
  %564 = vmatprep.subr.bf16.mxu0 0
  %565 = vmatpush1.bf16.msra.mxu0 %v423
  %566 = vmatprep.subr.bf16.mxu0 0
  %567 = vmatpush1.bf16.msra.mxu0 %v424
  %568 = vmatprep.subr.bf16.mxu0 0
  %569 = vmatpush1.bf16.msra.mxu0 %v425
  %570 = vmatprep.subr.bf16.mxu0 0
  %571 = vmatpush1.bf16.msra.mxu0 %v426
  %572 = vmatprep.subr.bf16.mxu0 0
  %573 = vmatpush1.bf16.msra.mxu0 %v427
  %574 = vmatprep.subr.bf16.mxu0 0
  %575 = vmatpush1.bf16.msra.mxu0 %v428
  %576 = vmatprep.subr.bf16.mxu0 0
  %577 = vmatpush1.bf16.msra.mxu0 %v429
  %578 = vmatprep.subr.bf16.mxu0 0
  %579 = vmatpush1.bf16.msra.mxu0 %v430
  %580 = vmatprep.subr.bf16.mxu0 0
  %581 = vmatpush1.bf16.msra.mxu0 %v431
  %582 = vmatprep.subr.bf16.mxu0 0
  %583 = vmatpush1.bf16.msra.mxu0 %v432
  %584 = vmatprep.subr.bf16.mxu0 0
  %585 = vmatpush1.bf16.msra.mxu0 %v433
  %586 = vmatprep.mubr.bf16.mxu0 %v179
  %587 = vmatmul.mubr.bf16.gmra.mrb[0].mxu0 %v177
  %v588 = vpop.f32.mrb[0].mxu0
  %v589 = vadd.f32 %v549, %v588
  %v590 = vpop.f32.mrb[0].mxu0
  %v591 = vpop.f32.mrb[0].mxu0
  %v592 = vpop.f32.mrb[0].mxu0
  %593 = vdwg.mxu0
  %594 = vmatprep.subr.bf16.mxu0 0
  %595 = vmatpush1.bf16.msra.mxu0 %v434
  %596 = vmatprep.subr.bf16.mxu0 0
  %597 = vmatpush1.bf16.msra.mxu0 %v435
  %598 = vmatprep.subr.bf16.mxu0 0
  %599 = vmatpush1.bf16.msra.mxu0 %v436
  %600 = vmatprep.subr.bf16.mxu0 0
  %601 = vmatpush1.bf16.msra.mxu0 %v437
  %602 = vmatprep.subr.bf16.mxu0 0
  %603 = vmatpush1.bf16.msra.mxu0 %v438
  %604 = vmatprep.subr.bf16.mxu0 0
  %605 = vmatpush1.bf16.msra.mxu0 %v439
  %606 = vmatprep.subr.bf16.mxu0 0
  %607 = vmatpush1.bf16.msra.mxu0 %v440
  %608 = vmatprep.subr.bf16.mxu0 0
  %609 = vmatpush1.bf16.msra.mxu0 %v441
  %610 = vmatprep.subr.bf16.mxu0 0
  %611 = vmatpush1.bf16.msra.mxu0 %v442
  %612 = vmatprep.subr.bf16.mxu0 0
  %613 = vmatpush1.bf16.msra.mxu0 %v443
  %614 = vmatprep.subr.bf16.mxu0 0
  %615 = vmatpush1.bf16.msra.mxu0 %v444
  %616 = vmatprep.subr.bf16.mxu0 0
  %617 = vmatpush1.bf16.msra.mxu0 %v445
  %618 = vmatprep.subr.bf16.mxu0 0
  %619 = vmatpush1.bf16.msra.mxu0 %v446
  %620 = vmatprep.subr.bf16.mxu0 0
  %621 = vmatpush1.bf16.msra.mxu0 %v447
  %622 = vmatprep.subr.bf16.mxu0 0
  %623 = vmatpush1.bf16.msra.mxu0 %v448
  %624 = vmatprep.subr.bf16.mxu0 0
  %625 = vmatpush1.bf16.msra.mxu0 %v449
  %626 = vmatprep.mubr.bf16.mxu0 %v176
  %627 = vmatmul.mubr.bf16.gmra.mrb[0].mxu0 %v162
  %v628 = vpop.f32.mrb[0].mxu0
  %v629 = vadd.f32 %v589, %v628
  %v630 = vpop.f32.mrb[0].mxu0
  %v631 = vpop.f32.mrb[0].mxu0
  %v632 = vpop.f32.mrb[0].mxu0
  %633 = vdwg.mxu0
  %634 = vmatprep.subr.bf16.mxu0 0
  %635 = vmatpush1.bf16.msra.mxu0 %v450
  %636 = vmatprep.subr.bf16.mxu0 0
  %637 = vmatpush1.bf16.msra.mxu0 %v451
  %638 = vmatprep.subr.bf16.mxu0 0
  %639 = vmatpush1.bf16.msra.mxu0 %v452
  %640 = vmatprep.subr.bf16.mxu0 0
  %641 = vmatpush1.bf16.msra.mxu0 %v453
  %642 = vmatprep.subr.bf16.mxu0 0
  %643 = vmatpush1.bf16.msra.mxu0 %v454
  %644 = vmatprep.subr.bf16.mxu0 0
  %645 = vmatpush1.bf16.msra.mxu0 %v455
  %646 = vmatprep.subr.bf16.mxu0 0
  %647 = vmatpush1.bf16.msra.mxu0 0
  %648 = vmatprep.subr.bf16.mxu0 0
  %649 = vmatpush1.bf16.msra.mxu0 0
  %650 = vmatprep.subr.bf16.mxu0 0
  %651 = vmatpush1.bf16.msra.mxu0 0
  %652 = vmatprep.subr.bf16.mxu0 0
  %653 = vmatpush1.bf16.msra.mxu0 0
  %654 = vmatprep.subr.bf16.mxu0 0
  %655 = vmatpush1.bf16.msra.mxu0 0
  %656 = vmatprep.subr.bf16.mxu0 0
  %657 = vmatpush1.bf16.msra.mxu0 0
  %658 = vmatprep.subr.bf16.mxu0 0
  %659 = vmatpush1.bf16.msra.mxu0 0
  %660 = vmatprep.subr.bf16.mxu0 0
  %661 = vmatpush1.bf16.msra.mxu0 0
  %662 = vmatprep.subr.bf16.mxu0 0
  %663 = vmatpush1.bf16.msra.mxu0 0
  %664 = vmatprep.subr.bf16.mxu0 0
  %665 = vmatpush1.bf16.msra.mxu0 0
  %666 = vmatprep.mubr.bf16.mxu0 0
  %667 = vmatmul.mubr.bf16.gmra.mrb[0].mxu0 %v512
  %v668 = vpop.f32.mrb[0].mxu0
  %v669 = vadd.f32 %v629, %v668
  %v670 = vpop.f32.mrb[0].mxu0
  %v671 = vpop.f32.mrb[0].mxu0
  %v672 = vpop.f32.mrb[0].mxu0
  %673 = vdwg.mxu0
  %v674 = vmax.f32 %v669, 0.0
  %v675 = vpack.c.bf16 %v674, %v674
  %vm676 = vcmask 516096
  %677 = vst.msk [vmem:[%s3] sm:$0x1] %vm676, %v675
  // Predicated region
  $region14: #{single_view_forward.15} parent=0 // pred_check
    _
  $region15: #{single_view_forward.15} parent=0 // pred_check_branch
    %679 = sbr.rel (0) target = $region17
  $region16: #{single_view_forward.15} parent=0 // pred_region
    _
  $region17: #{single_view_forward.15} parent=0 // pred_fallthru
    _
  // Predicated region
  $region18: #{single_view_forward.15} parent=0 // pred_check
    _
  $region19: #{single_view_forward.15} parent=0 // pred_check_branch
    %681 = sbr.rel (0) target = $region21
  $region20: #{single_view_forward.15} parent=0 // pred_region
    _
  $region21: #{single_view_forward.15} parent=0 // pred_fallthru
    _

// kernel: single_view_forward.16
$region0: #{single_view_forward.16}
  #allocation0 [shape = 'u32[]', space=smem, size = 0x4, offset = 0x4, fixed_abs, tag = 'smem constant byte address 0x4 - core index']
  #allocation1 [shape = 'u32[144,128]{1,0:T(1,128)}', space=vmem, size = 0x12000, scoped, tag = 'internal scratch']
  %s0 = inlined_call_operand.vmem [shape: bf16[2,576], index: 0, kind: input, shape index: {}]
  %s1 = inlined_call_operand.vmem [shape: bf16[576,128], index: 1, kind: input, shape index: {}]
  %s2 = inlined_call_operand.vmem [shape: f32[1,128], index: 2, kind: input, shape index: {}]
  %s3 = inlined_call_operand.vmem [shape: bf16[2,384], index: 3, kind: input, shape index: {}]
  %s4 = inlined_call_operand.vmem [shape: bf16[384,128], index: 4, kind: input, shape index: {}]
  %s5 = inlined_call_operand.vmem [shape: f32[1,128], index: 5, kind: input, shape index: {}]
  %s6 = inlined_call_operand.vmem [shape: bf16[2,128], index: 6, kind: output, shape index: {}]
  %s7 = sld [smem:[#allocation0]]
  $region34: #{single_view_forward.16} parent=0
    _
  %s9 = ssub.s32 1, %s7
  %s10 = scalar_select 0, %s9, %s7
  // Predicated region
  $region2: #{single_view_forward.16} parent=0 // pred_check
    _
  $region3: #{single_view_forward.16} parent=0 // pred_check_branch
    %12 = sbr.rel (0) target = $region5
  $region4: #{single_view_forward.16} parent=0 // pred_region
    _
  $region5: #{single_view_forward.16} parent=0 // pred_fallthru
    _
  // Predicated region
  $region6: #{single_view_forward.16} parent=0 // pred_check
    _
  $region7: #{single_view_forward.16} parent=0 // pred_check_branch
    %14 = sbr.rel (0) target = $region9
  $region8: #{single_view_forward.16} parent=0 // pred_region
    _
  $region9: #{single_view_forward.16} parent=0 // pred_fallthru
    _
  // Predicated region
  $region10: #{single_view_forward.16} parent=0 // pred_check
    _
  $region11: #{single_view_forward.16} parent=0 // pred_check_branch
    %16 = sbr.rel (0) target = $region13
  $region12: #{single_view_forward.16} parent=0 // pred_region
    _
  $region13: #{single_view_forward.16} parent=0 // pred_fallthru
    _
  // Predicated region
  $region14: #{single_view_forward.16} parent=0 // pred_check
    _
  $region15: #{single_view_forward.16} parent=0 // pred_check_branch
    %18 = sbr.rel (0) target = $region17
  $region16: #{single_view_forward.16} parent=0 // pred_region
    _
  $region17: #{single_view_forward.16} parent=0 // pred_fallthru
    _
  // Predicated region
  $region18: #{single_view_forward.16} parent=0 // pred_check
    _
  $region19: #{single_view_forward.16} parent=0 // pred_check_branch
    %20 = sbr.rel (0) target = $region21
  $region20: #{single_view_forward.16} parent=0 // pred_region
    _
  $region21: #{single_view_forward.16} parent=0 // pred_fallthru
    _
  // Predicated region
  $region22: #{single_view_forward.16} parent=0 // pred_check
    _
  $region23: #{single_view_forward.16} parent=0 // pred_check_branch
    %22 = sbr.rel (0) target = $region25
  $region24: #{single_view_forward.16} parent=0 // pred_region
    _
  $region25: #{single_view_forward.16} parent=0 // pred_fallthru
    _
  %v24 = vld [vmem:[%s0] sm:$0x1f]
  %v25 = vld [vmem:[%s1] sm:$0xf]
  %v26 = vld [vmem:[%s1 + $0x4] sm:$0xf]
  %v27 = vld [vmem:[%s1 + $0x8] sm:$0xf]
  %v28 = vld [vmem:[%s1 + $0xc] sm:$0xf]
  %v29 = vld [vmem:[%s1 + $0x10] sm:$0xf]
  %v30 = vld [vmem:[%s1 + $0x14] sm:$0xf]
  %v31 = vld [vmem:[%s1 + $0x18] sm:$0xf]
  %v32 = vld [vmem:[%s1 + $0x1c] sm:$0xf]
  %v33 = vld [vmem:[%s1 + $0x20] sm:$0xf]
  %v34 = vld [vmem:[%s1 + $0x24] sm:$0xf]
  %v35 = vld [vmem:[%s1 + $0x28] sm:$0xf]
  %v36 = vld [vmem:[%s1 + $0x2c] sm:$0xf]
  %v37 = vld [vmem:[%s1 + $0x30] sm:$0xf]
  %v38 = vld [vmem:[%s1 + $0x34] sm:$0xf]
  %v39 = vld [vmem:[%s1 + $0x38] sm:$0xf]
  %v40 = vld [vmem:[%s1 + $0x3c] sm:$0xf]
  %v41 = vld [vmem:[%s1 + $0x40] sm:$0xf]
  %v42 = vld [vmem:[%s1 + $0x44] sm:$0xf]
  %v43 = vld [vmem:[%s1 + $0x48] sm:$0xf]
  %v44 = vld [vmem:[%s1 + $0x4c] sm:$0xf]
  %v45 = vld [vmem:[%s1 + $0x50] sm:$0xf]
  %v46 = vld [vmem:[%s1 + $0x54] sm:$0xf]
  %v47 = vld [vmem:[%s1 + $0x58] sm:$0xf]
  %v48 = vld [vmem:[%s1 + $0x5c] sm:$0xf]
  %v49 = vld [vmem:[%s1 + $0x60] sm:$0xf]
  %v50 = vld [vmem:[%s1 + $0x64] sm:$0xf]
  %v51 = vld [vmem:[%s1 + $0x68] sm:$0xf]
  %v52 = vld [vmem:[%s1 + $0x6c] sm:$0xf]
  %v53 = vld [vmem:[%s1 + $0x70] sm:$0xf]
  %v54 = vld [vmem:[%s1 + $0x74] sm:$0xf]
  %v55 = vld [vmem:[%s1 + $0x78] sm:$0xf]
  %v56 = vld [vmem:[%s1 + $0x7c] sm:$0xf]
  %v57 = vld [vmem:[%s1 + $0x80] sm:$0xf]
  %v58 = vld [vmem:[%s1 + $0x84] sm:$0xf]
  %v59 = vld [vmem:[%s1 + $0x88] sm:$0xf]
  %v60 = vld [vmem:[%s1 + $0x8c] sm:$0xf]
  %v61 = vld [vmem:[%s1 + $0x90] sm:$0xf]
  %v62 = vld [vmem:[%s1 + $0x94] sm:$0xf]
  %v63 = vld [vmem:[%s1 + $0x98] sm:$0xf]
  %v64 = vld [vmem:[%s1 + $0x9c] sm:$0xf]
  %v65 = vld [vmem:[%s1 + $0xa0] sm:$0xf]
  %v66 = vld [vmem:[%s1 + $0xa4] sm:$0xf]
  %v67 = vld [vmem:[%s1 + $0xa8] sm:$0xf]
  %v68 = vld [vmem:[%s1 + $0xac] sm:$0xf]
  %v69 = vld [vmem:[%s1 + $0xb0] sm:$0xf]
  %v70 = vld [vmem:[%s1 + $0xb4] sm:$0xf]
  %v71 = vld [vmem:[%s1 + $0xb8] sm:$0xf]
  %v72 = vld [vmem:[%s1 + $0xbc] sm:$0xf]
  %v73 = vld [vmem:[%s1 + $0xc0] sm:$0xf]
  %v74 = vld [vmem:[%s1 + $0xc4] sm:$0xf]
  %v75 = vld [vmem:[%s1 + $0xc8] sm:$0xf]
  %v76 = vld [vmem:[%s1 + $0xcc] sm:$0xf]
  %v77 = vld [vmem:[%s1 + $0xd0] sm:$0xf]
  %v78 = vld [vmem:[%s1 + $0xd4] sm:$0xf]
  %v79 = vld [vmem:[%s1 + $0xd8] sm:$0xf]
  %v80 = vld [vmem:[%s1 + $0xdc] sm:$0xf]
  %v81 = vld [vmem:[%s1 + $0xe0] sm:$0xf]
  %v82 = vld [vmem:[%s1 + $0xe4] sm:$0xf]
  %v83 = vld [vmem:[%s1 + $0xe8] sm:$0xf]
  %v84 = vld [vmem:[%s1 + $0xec] sm:$0xf]
  %v85 = vld [vmem:[%s1 + $0xf0] sm:$0xf]
  %v86 = vld [vmem:[%s1 + $0xf4] sm:$0xf]
  %v87 = vld [vmem:[%s1 + $0xf8] sm:$0xf]
  %v88 = vld [vmem:[%s1 + $0xfc] sm:$0xf]
  %v89 = vld [vmem:[%s1 + $0x100] sm:$0xf]
  %v90 = vld [vmem:[%s1 + $0x104] sm:$0xf]
  %v91 = vld [vmem:[%s1 + $0x108] sm:$0xf]
  %v92 = vld [vmem:[%s1 + $0x10c] sm:$0xf]
  %v93 = vld [vmem:[%s1 + $0x110] sm:$0xf]
  %v94 = vld [vmem:[%s1 + $0x114] sm:$0xf]
  %v95 = vld [vmem:[%s1 + $0x118] sm:$0xf]
  %v96 = vld [vmem:[%s1 + $0x11c] sm:$0xf]
  %v97 = vld [vmem:[%s2] sm:$0x1]
  %v99 = vlaneseq
  %v100 = vshrl.u32 %v99, 7
  %v101 = vsub.s32 0, %v100
  %v102 = vrot.slane %v97, %v101
  %v105 = vcombine.high %v24, %v24
  %v107 = vunpack.c.l.s4 1966171168
  %v108 = vunpack.c.0.s8 %v107
  %v109 = vlaneseq
  %v110 = vshrl.u32 %v109, 7
  %v111 = vsub.s32 %v108, %v110
  %v112 = vrot.slane %v24, %v111
  %v114 = vunpack.c.l.s4 1966171168
  %v115 = vunpack.c.0.s8 %v114
  %v116 = vlaneseq
  %v117 = vshrl.u32 %v116, 7
  %v118 = vsub.s32 %v115, %v117
  %v119 = vrot.slane %v105, %v118
  %v120 = vcombine.high %v112, %v112
  %v122 = vunpack.c.l.s4 1966171168
  %v123 = vunpack.c.0.s8 %v122
  %v124 = vlaneseq
  %v125 = vshrl.u32 %v124, 7
  %v126 = vsub.s32 %v123, %v125
  %v127 = vrot.slane %v112, %v126
  %v129 = vunpack.c.l.s4 1966171168
  %v130 = vunpack.c.0.s8 %v129
  %v131 = vlaneseq
  %v132 = vshrl.u32 %v131, 7
  %v133 = vsub.s32 %v130, %v132
  %v134 = vrot.slane %v119, %v133
  %v136 = vunpack.c.l.s4 1966171168
  %v137 = vunpack.c.0.s8 %v136
  %v138 = vlaneseq
  %v139 = vshrl.u32 %v138, 7
  %v140 = vsub.s32 %v137, %v139
  %v141 = vrot.slane %v120, %v140
  %v142 = vcombine.high %v127, %v127
  %v143 = vcombine.high %v141, %v141
  %v220 = vunpack.c.l.b16 %v25
  %v221 = vunpack.c.l.b16 %v26
  %v222 = vunpack.c.l.b16 %v27
  %v223 = vunpack.c.l.b16 %v28
  %v224 = vunpack.c.l.b16 %v29
  %v225 = vunpack.c.l.b16 %v30
  %v226 = vunpack.c.l.b16 %v31
  %v227 = vunpack.c.l.b16 %v32
  %v228 = vunpack.c.l.b16 %v33
  %v229 = vunpack.c.l.b16 %v34
  %v230 = vunpack.c.l.b16 %v35
  %v231 = vunpack.c.l.b16 %v36
  %v232 = vunpack.c.l.b16 %v37
  %v233 = vunpack.c.l.b16 %v38
  %v234 = vunpack.c.l.b16 %v39
  %v235 = vunpack.c.l.b16 %v40
  %v236 = vunpack.c.l.b16 %v41
  %v237 = vunpack.c.l.b16 %v42
  %v238 = vunpack.c.l.b16 %v43
  %v239 = vunpack.c.l.b16 %v44
  %v240 = vunpack.c.l.b16 %v45
  %v241 = vunpack.c.l.b16 %v46
  %v242 = vunpack.c.l.b16 %v47
  %v243 = vunpack.c.l.b16 %v48
  %v244 = vunpack.c.l.b16 %v49
  %v245 = vunpack.c.l.b16 %v50
  %v246 = vunpack.c.l.b16 %v51
  %v247 = vunpack.c.l.b16 %v52
  %v248 = vunpack.c.l.b16 %v53
  %v249 = vunpack.c.l.b16 %v54
  %v250 = vunpack.c.l.b16 %v55
  %v251 = vunpack.c.l.b16 %v56
  %v252 = vunpack.c.l.b16 %v57
  %v253 = vunpack.c.l.b16 %v58
  %v254 = vunpack.c.l.b16 %v59
  %v255 = vunpack.c.l.b16 %v60
  %v256 = vunpack.c.l.b16 %v61
  %v257 = vunpack.c.l.b16 %v62
  %v258 = vunpack.c.l.b16 %v63
  %v259 = vunpack.c.l.b16 %v64
  %v260 = vunpack.c.l.b16 %v65
  %v261 = vunpack.c.l.b16 %v66
  %v262 = vunpack.c.l.b16 %v67
  %v263 = vunpack.c.l.b16 %v68
  %v264 = vunpack.c.l.b16 %v69
  %v265 = vunpack.c.l.b16 %v70
  %v266 = vunpack.c.l.b16 %v71
  %v267 = vunpack.c.l.b16 %v72
  %v268 = vunpack.c.l.b16 %v73
  %v269 = vunpack.c.l.b16 %v74
  %v270 = vunpack.c.l.b16 %v75
  %v271 = vunpack.c.l.b16 %v76
  %v272 = vunpack.c.l.b16 %v77
  %v273 = vunpack.c.l.b16 %v78
  %v274 = vunpack.c.l.b16 %v79
  %v275 = vunpack.c.l.b16 %v80
  %v276 = vunpack.c.l.b16 %v81
  %v277 = vunpack.c.l.b16 %v82
  %v278 = vunpack.c.l.b16 %v83
  %v279 = vunpack.c.l.b16 %v84
  %v280 = vunpack.c.l.b16 %v85
  %v281 = vunpack.c.l.b16 %v86
  %v282 = vunpack.c.l.b16 %v87
  %v283 = vunpack.c.l.b16 %v88
  %v284 = vunpack.c.l.b16 %v89
  %v285 = vunpack.c.l.b16 %v90
  %v286 = vunpack.c.l.b16 %v91
  %v287 = vunpack.c.l.b16 %v92
  %v288 = vunpack.c.l.b16 %v93
  %v289 = vunpack.c.l.b16 %v94
  %v290 = vunpack.c.l.b16 %v95
  %v291 = vunpack.c.l.b16 %v96
  %v292 = vpack.c.b16 %v221, %v220
  %v293 = vpack.c.b16 %v223, %v222
  %v294 = vpack.c.b16 %v225, %v224
  %v295 = vpack.c.b16 %v227, %v226
  %v296 = vpack.c.b16 %v229, %v228
  %v297 = vpack.c.b16 %v231, %v230
  %v298 = vpack.c.b16 %v233, %v232
  %v299 = vpack.c.b16 %v235, %v234
  %v300 = vpack.c.b16 %v237, %v236
  %v301 = vpack.c.b16 %v239, %v238
  %v302 = vpack.c.b16 %v241, %v240
  %v303 = vpack.c.b16 %v243, %v242
  %v304 = vpack.c.b16 %v245, %v244
  %v305 = vpack.c.b16 %v247, %v246
  %v306 = vpack.c.b16 %v249, %v248
  %v307 = vpack.c.b16 %v251, %v250
  %v308 = vpack.c.b16 %v253, %v252
  %v309 = vpack.c.b16 %v255, %v254
  %v310 = vpack.c.b16 %v257, %v256
  %v311 = vpack.c.b16 %v259, %v258
  %v312 = vpack.c.b16 %v261, %v260
  %v313 = vpack.c.b16 %v263, %v262
  %v314 = vpack.c.b16 %v265, %v264
  %v315 = vpack.c.b16 %v267, %v266
  %v316 = vpack.c.b16 %v269, %v268
  %v317 = vpack.c.b16 %v271, %v270
  %v318 = vpack.c.b16 %v273, %v272
  %v319 = vpack.c.b16 %v275, %v274
  %v320 = vpack.c.b16 %v277, %v276
  %v321 = vpack.c.b16 %v279, %v278
  %v322 = vpack.c.b16 %v281, %v280
  %v323 = vpack.c.b16 %v283, %v282
  %v324 = vpack.c.b16 %v285, %v284
  %v325 = vpack.c.b16 %v287, %v286
  %v326 = vpack.c.b16 %v289, %v288
  %v327 = vpack.c.b16 %v291, %v290
  %vm364 = vcmask 523264
  %v366 = vsel %vm364, %v134, 0
  %368 = vmatprep.subr.bf16.mxu0 0
  %369 = vmatpush1.bf16.msra.mxu0 %v292
  %370 = vmatprep.subr.bf16.mxu0 0
  %371 = vmatpush1.bf16.msra.mxu0 %v293
  %372 = vmatprep.subr.bf16.mxu0 0
  %373 = vmatpush1.bf16.msra.mxu0 %v294
  %374 = vmatprep.subr.bf16.mxu0 0
  %375 = vmatpush1.bf16.msra.mxu0 %v295
  %376 = vmatprep.subr.bf16.mxu0 0
  %377 = vmatpush1.bf16.msra.mxu0 %v296
  %378 = vmatprep.subr.bf16.mxu0 0
  %379 = vmatpush1.bf16.msra.mxu0 %v297
  %380 = vmatprep.subr.bf16.mxu0 0
  %381 = vmatpush1.bf16.msra.mxu0 %v298
  %382 = vmatprep.subr.bf16.mxu0 0
  %383 = vmatpush1.bf16.msra.mxu0 %v299
  %384 = vmatprep.subr.bf16.mxu0 0
  %385 = vmatpush1.bf16.msra.mxu0 %v300
  %386 = vmatprep.subr.bf16.mxu0 0
  %387 = vmatpush1.bf16.msra.mxu0 %v301
  %388 = vmatprep.subr.bf16.mxu0 0
  %389 = vmatpush1.bf16.msra.mxu0 %v302
  %390 = vmatprep.subr.bf16.mxu0 0
  %391 = vmatpush1.bf16.msra.mxu0 %v303
  %392 = vmatprep.subr.bf16.mxu0 0
  %393 = vmatpush1.bf16.msra.mxu0 %v304
  %394 = vmatprep.subr.bf16.mxu0 0
  %395 = vmatpush1.bf16.msra.mxu0 %v305
  %396 = vmatprep.subr.bf16.mxu0 0
  %397 = vmatpush1.bf16.msra.mxu0 %v306
  %398 = vmatprep.subr.bf16.mxu0 0
  %399 = vmatpush1.bf16.msra.mxu0 %v307
  %400 = vmatprep.mubr.bf16.mxu0 %v141
  %401 = vmatmul.mubr.bf16.gmra.mrb[0].mxu0 %v127
  %v402 = vpop.f32.mrb[0].mxu0
  %v403 = vadd.f32 %v102, %v402
  %v404 = vpop.f32.mrb[0].mxu0
  %v405 = vpop.f32.mrb[0].mxu0
  %v406 = vpop.f32.mrb[0].mxu0
  %407 = vdwg.mxu0
  %408 = vmatprep.subr.bf16.mxu0 0
  %409 = vmatpush1.bf16.msra.mxu0 %v308
  %410 = vmatprep.subr.bf16.mxu0 0
  %411 = vmatpush1.bf16.msra.mxu0 %v309
  %412 = vmatprep.subr.bf16.mxu0 0
  %413 = vmatpush1.bf16.msra.mxu0 %v310
  %414 = vmatprep.subr.bf16.mxu0 0
  %415 = vmatpush1.bf16.msra.mxu0 %v311
  %416 = vmatprep.subr.bf16.mxu0 0
  %417 = vmatpush1.bf16.msra.mxu0 %v312
  %418 = vmatprep.subr.bf16.mxu0 0
  %419 = vmatpush1.bf16.msra.mxu0 %v313
  %420 = vmatprep.subr.bf16.mxu0 0
  %421 = vmatpush1.bf16.msra.mxu0 %v314
  %422 = vmatprep.subr.bf16.mxu0 0
  %423 = vmatpush1.bf16.msra.mxu0 %v315
  %424 = vmatprep.subr.bf16.mxu0 0
  %425 = vmatpush1.bf16.msra.mxu0 %v316
  %426 = vmatprep.subr.bf16.mxu0 0
  %427 = vmatpush1.bf16.msra.mxu0 %v317
  %428 = vmatprep.subr.bf16.mxu0 0
  %429 = vmatpush1.bf16.msra.mxu0 %v318
  %430 = vmatprep.subr.bf16.mxu0 0
  %431 = vmatpush1.bf16.msra.mxu0 %v319
  %432 = vmatprep.subr.bf16.mxu0 0
  %433 = vmatpush1.bf16.msra.mxu0 %v320
  %434 = vmatprep.subr.bf16.mxu0 0
  %435 = vmatpush1.bf16.msra.mxu0 %v321
  %436 = vmatprep.subr.bf16.mxu0 0
  %437 = vmatpush1.bf16.msra.mxu0 %v322
  %438 = vmatprep.subr.bf16.mxu0 0
  %439 = vmatpush1.bf16.msra.mxu0 %v323
  %440 = vmatprep.mubr.bf16.mxu0 %v143
  %441 = vmatmul.mubr.bf16.gmra.mrb[0].mxu0 %v142
  %v442 = vpop.f32.mrb[0].mxu0
  %v443 = vadd.f32 %v403, %v442
  %v444 = vpop.f32.mrb[0].mxu0
  %v445 = vpop.f32.mrb[0].mxu0
  %v446 = vpop.f32.mrb[0].mxu0
  %447 = vdwg.mxu0
  %448 = vmatprep.subr.bf16.mxu0 0
  %449 = vmatpush1.bf16.msra.mxu0 %v324
  %450 = vmatprep.subr.bf16.mxu0 0
  %451 = vmatpush1.bf16.msra.mxu0 %v325
  %452 = vmatprep.subr.bf16.mxu0 0
  %453 = vmatpush1.bf16.msra.mxu0 %v326
  %454 = vmatprep.subr.bf16.mxu0 0
  %455 = vmatpush1.bf16.msra.mxu0 %v327
  %456 = vmatprep.subr.bf16.mxu0 0
  %457 = vmatpush1.bf16.msra.mxu0 0
  %458 = vmatprep.subr.bf16.mxu0 0
  %459 = vmatpush1.bf16.msra.mxu0 0
  %460 = vmatprep.subr.bf16.mxu0 0
  %461 = vmatpush1.bf16.msra.mxu0 0
  %462 = vmatprep.subr.bf16.mxu0 0
  %463 = vmatpush1.bf16.msra.mxu0 0
  %464 = vmatprep.subr.bf16.mxu0 0
  %465 = vmatpush1.bf16.msra.mxu0 0
  %466 = vmatprep.subr.bf16.mxu0 0
  %467 = vmatpush1.bf16.msra.mxu0 0
  %468 = vmatprep.subr.bf16.mxu0 0
  %469 = vmatpush1.bf16.msra.mxu0 0
  %470 = vmatprep.subr.bf16.mxu0 0
  %471 = vmatpush1.bf16.msra.mxu0 0
  %472 = vmatprep.subr.bf16.mxu0 0
  %473 = vmatpush1.bf16.msra.mxu0 0
  %474 = vmatprep.subr.bf16.mxu0 0
  %475 = vmatpush1.bf16.msra.mxu0 0
  %476 = vmatprep.subr.bf16.mxu0 0
  %477 = vmatpush1.bf16.msra.mxu0 0
  %478 = vmatprep.subr.bf16.mxu0 0
  %479 = vmatpush1.bf16.msra.mxu0 0
  %480 = vmatprep.mubr.bf16.mxu0 0
  %481 = vmatmul.mubr.bf16.gmra.mrb[0].mxu0 %v366
  %v482 = vpop.f32.mrb[0].mxu0
  %v483 = vadd.f32 %v443, %v482
  %v484 = vpop.f32.mrb[0].mxu0
  %v485 = vpop.f32.mrb[0].mxu0
  %v486 = vpop.f32.mrb[0].mxu0
  %487 = vdwg.mxu0
  %v488 = vmax.f32 %v483, 0.0
  %v489 = vld [vmem:[%s3] sm:$0x7]
  %v490 = vld [vmem:[%s4] sm:$0xf]
  %v491 = vld [vmem:[%s4 + $0x4] sm:$0xf]
  %v492 = vld [vmem:[%s4 + $0x8] sm:$0xf]
  %v493 = vld [vmem:[%s4 + $0xc] sm:$0xf]
  %v494 = vld [vmem:[%s4 + $0x10] sm:$0xf]
  %v495 = vld [vmem:[%s4 + $0x14] sm:$0xf]
  %v496 = vld [vmem:[%s4 + $0x18] sm:$0xf]
  %v497 = vld [vmem:[%s4 + $0x1c] sm:$0xf]
  %v498 = vld [vmem:[%s4 + $0x20] sm:$0xf]
  %v499 = vld [vmem:[%s4 + $0x24] sm:$0xf]
  %v500 = vld [vmem:[%s4 + $0x28] sm:$0xf]
  %v501 = vld [vmem:[%s4 + $0x2c] sm:$0xf]
  %v502 = vld [vmem:[%s4 + $0x30] sm:$0xf]
  %v503 = vld [vmem:[%s4 + $0x34] sm:$0xf]
  %v504 = vld [vmem:[%s4 + $0x38] sm:$0xf]
  %v505 = vld [vmem:[%s4 + $0x3c] sm:$0xf]
  %v506 = vld [vmem:[%s4 + $0x40] sm:$0xf]
  %v507 = vld [vmem:[%s4 + $0x44] sm:$0xf]
  %v508 = vld [vmem:[%s4 + $0x48] sm:$0xf]
  %v509 = vld [vmem:[%s4 + $0x4c] sm:$0xf]
  %v510 = vld [vmem:[%s4 + $0x50] sm:$0xf]
  %v511 = vld [vmem:[%s4 + $0x54] sm:$0xf]
  %v512 = vld [vmem:[%s4 + $0x58] sm:$0xf]
  %v513 = vld [vmem:[%s4 + $0x5c] sm:$0xf]
  %v514 = vld [vmem:[%s4 + $0x60] sm:$0xf]
  %v515 = vld [vmem:[%s4 + $0x64] sm:$0xf]
  %v516 = vld [vmem:[%s4 + $0x68] sm:$0xf]
  %v517 = vld [vmem:[%s4 + $0x6c] sm:$0xf]
  %v518 = vld [vmem:[%s4 + $0x70] sm:$0xf]
  %v519 = vld [vmem:[%s4 + $0x74] sm:$0xf]
  %v520 = vld [vmem:[%s4 + $0x78] sm:$0xf]
  %v521 = vld [vmem:[%s4 + $0x7c] sm:$0xf]
  %v522 = vld [vmem:[%s4 + $0x80] sm:$0xf]
  %v523 = vld [vmem:[%s4 + $0x84] sm:$0xf]
  %v524 = vld [vmem:[%s4 + $0x88] sm:$0xf]
  %v525 = vld [vmem:[%s4 + $0x8c] sm:$0xf]
  %v526 = vld [vmem:[%s4 + $0x90] sm:$0xf]
  %v527 = vld [vmem:[%s4 + $0x94] sm:$0xf]
  %v528 = vld [vmem:[%s4 + $0x98] sm:$0xf]
  %v529 = vld [vmem:[%s4 + $0x9c] sm:$0xf]
  %v530 = vld [vmem:[%s4 + $0xa0] sm:$0xf]
  %v531 = vld [vmem:[%s4 + $0xa4] sm:$0xf]
  %v532 = vld [vmem:[%s4 + $0xa8] sm:$0xf]
  %v533 = vld [vmem:[%s4 + $0xac] sm:$0xf]
  %v534 = vld [vmem:[%s4 + $0xb0] sm:$0xf]
  %v535 = vld [vmem:[%s4 + $0xb4] sm:$0xf]
  %v536 = vld [vmem:[%s4 + $0xb8] sm:$0xf]
  %v537 = vld [vmem:[%s4 + $0xbc] sm:$0xf]
  %v540 = vunpack.c.l.s4 1966171168
  %v541 = vunpack.c.0.s8 %v540
  %v542 = vlaneseq
  %v543 = vshrl.u32 %v542, 7
  %v544 = vsub.s32 %v541, %v543
  %v545 = vrot.slane %v489, %v544
  %v546 = vcombine.high %v545, %v545
  %v548 = vunpack.c.l.s4 1966171168
  %v549 = vunpack.c.0.s8 %v548
  %v550 = vlaneseq
  %v551 = vshrl.u32 %v550, 7
  %v552 = vsub.s32 %v549, %v551
  %v553 = vrot.slane %v545, %v552
  %v555 = vunpack.c.l.s4 1966171168
  %v556 = vunpack.c.0.s8 %v555
  %v557 = vlaneseq
  %v558 = vshrl.u32 %v557, 7
  %v559 = vsub.s32 %v556, %v558
  %v560 = vrot.slane %v546, %v559
  %v561 = vcombine.high %v553, %v553
  %v613 = vunpack.c.l.b16 %v490
  %v614 = vunpack.c.l.b16 %v491
  %v615 = vunpack.c.l.b16 %v492
  %v616 = vunpack.c.l.b16 %v493
  %v617 = vunpack.c.l.b16 %v494
  %v618 = vunpack.c.l.b16 %v495
  %v619 = vunpack.c.l.b16 %v496
  %v620 = vunpack.c.l.b16 %v497
  %v621 = vunpack.c.l.b16 %v498
  %v622 = vunpack.c.l.b16 %v499
  %v623 = vunpack.c.l.b16 %v500
  %v624 = vunpack.c.l.b16 %v501
  %v625 = vunpack.c.l.b16 %v502
  %v626 = vunpack.c.l.b16 %v503
  %v627 = vunpack.c.l.b16 %v504
  %v628 = vunpack.c.l.b16 %v505
  %v629 = vunpack.c.l.b16 %v506
  %v630 = vunpack.c.l.b16 %v507
  %v631 = vunpack.c.l.b16 %v508
  %v632 = vunpack.c.l.b16 %v509
  %v633 = vunpack.c.l.b16 %v510
  %v634 = vunpack.c.l.b16 %v511
  %v635 = vunpack.c.l.b16 %v512
  %v636 = vunpack.c.l.b16 %v513
  %v637 = vunpack.c.l.b16 %v514
  %v638 = vunpack.c.l.b16 %v515
  %v639 = vunpack.c.l.b16 %v516
  %v640 = vunpack.c.l.b16 %v517
  %v641 = vunpack.c.l.b16 %v518
  %v642 = vunpack.c.l.b16 %v519
  %v643 = vunpack.c.l.b16 %v520
  %v644 = vunpack.c.l.b16 %v521
  %v645 = vunpack.c.l.b16 %v522
  %v646 = vunpack.c.l.b16 %v523
  %v647 = vunpack.c.l.b16 %v524
  %v648 = vunpack.c.l.b16 %v525
  %v649 = vunpack.c.l.b16 %v526
  %v650 = vunpack.c.l.b16 %v527
  %v651 = vunpack.c.l.b16 %v528
  %v652 = vunpack.c.l.b16 %v529
  %v653 = vunpack.c.l.b16 %v530
  %v654 = vunpack.c.l.b16 %v531
  %v655 = vunpack.c.l.b16 %v532
  %v656 = vunpack.c.l.b16 %v533
  %v657 = vunpack.c.l.b16 %v534
  %v658 = vunpack.c.l.b16 %v535
  %v659 = vunpack.c.l.b16 %v536
  %v660 = vunpack.c.l.b16 %v537
  %v661 = vpack.c.b16 %v614, %v613
  %v662 = vpack.c.b16 %v616, %v615
  %v663 = vpack.c.b16 %v618, %v617
  %v664 = vpack.c.b16 %v620, %v619
  %v665 = vpack.c.b16 %v622, %v621
  %v666 = vpack.c.b16 %v624, %v623
  %v667 = vpack.c.b16 %v626, %v625
  %v668 = vpack.c.b16 %v628, %v627
  %v669 = vpack.c.b16 %v630, %v629
  %v670 = vpack.c.b16 %v632, %v631
  %v671 = vpack.c.b16 %v634, %v633
  %v672 = vpack.c.b16 %v636, %v635
  %v673 = vpack.c.b16 %v638, %v637
  %v674 = vpack.c.b16 %v640, %v639
  %v675 = vpack.c.b16 %v642, %v641
  %v676 = vpack.c.b16 %v644, %v643
  %v677 = vpack.c.b16 %v646, %v645
  %v678 = vpack.c.b16 %v648, %v647
  %v679 = vpack.c.b16 %v650, %v649
  %v680 = vpack.c.b16 %v652, %v651
  %v681 = vpack.c.b16 %v654, %v653
  %v682 = vpack.c.b16 %v656, %v655
  %v683 = vpack.c.b16 %v658, %v657
  %v684 = vpack.c.b16 %v660, %v659
  %709 = vmatprep.subr.bf16.mxu0 0
  %710 = vmatpush1.bf16.msra.mxu0 %v661
  %711 = vmatprep.subr.bf16.mxu0 0
  %712 = vmatpush1.bf16.msra.mxu0 %v662
  %713 = vmatprep.subr.bf16.mxu0 0
  %714 = vmatpush1.bf16.msra.mxu0 %v663
  %715 = vmatprep.subr.bf16.mxu0 0
  %716 = vmatpush1.bf16.msra.mxu0 %v664
  %717 = vmatprep.subr.bf16.mxu0 0
  %718 = vmatpush1.bf16.msra.mxu0 %v665
  %719 = vmatprep.subr.bf16.mxu0 0
  %720 = vmatpush1.bf16.msra.mxu0 %v666
  %721 = vmatprep.subr.bf16.mxu0 0
  %722 = vmatpush1.bf16.msra.mxu0 %v667
  %723 = vmatprep.subr.bf16.mxu0 0
  %724 = vmatpush1.bf16.msra.mxu0 %v668
  %725 = vmatprep.subr.bf16.mxu0 0
  %726 = vmatpush1.bf16.msra.mxu0 %v669
  %727 = vmatprep.subr.bf16.mxu0 0
  %728 = vmatpush1.bf16.msra.mxu0 %v670
  %729 = vmatprep.subr.bf16.mxu0 0
  %730 = vmatpush1.bf16.msra.mxu0 %v671
  %731 = vmatprep.subr.bf16.mxu0 0
  %732 = vmatpush1.bf16.msra.mxu0 %v672
  %733 = vmatprep.subr.bf16.mxu0 0
  %734 = vmatpush1.bf16.msra.mxu0 %v673
  %735 = vmatprep.subr.bf16.mxu0 0
  %736 = vmatpush1.bf16.msra.mxu0 %v674
  %737 = vmatprep.subr.bf16.mxu0 0
  %738 = vmatpush1.bf16.msra.mxu0 %v675
  %739 = vmatprep.subr.bf16.mxu0 0
  %740 = vmatpush1.bf16.msra.mxu0 %v676
  %741 = vmatprep.mubr.bf16.mxu0 %v560
  %742 = vmatmul.mubr.bf16.gmra.mrb[0].mxu0 %v553
  %v743 = vpop.f32.mrb[0].mxu0
  %v744 = vadd.f32 0.0, %v743
  %v745 = vpop.f32.mrb[0].mxu0
  %v746 = vpop.f32.mrb[0].mxu0
  %v747 = vpop.f32.mrb[0].mxu0
  %748 = vdwg.mxu0
  %749 = vmatprep.subr.bf16.mxu0 0
  %750 = vmatpush1.bf16.msra.mxu0 %v677
  %751 = vmatprep.subr.bf16.mxu0 0
  %752 = vmatpush1.bf16.msra.mxu0 %v678
  %753 = vmatprep.subr.bf16.mxu0 0
  %754 = vmatpush1.bf16.msra.mxu0 %v679
  %755 = vmatprep.subr.bf16.mxu0 0
  %756 = vmatpush1.bf16.msra.mxu0 %v680
  %757 = vmatprep.subr.bf16.mxu0 0
  %758 = vmatpush1.bf16.msra.mxu0 %v681
  %759 = vmatprep.subr.bf16.mxu0 0
  %760 = vmatpush1.bf16.msra.mxu0 %v682
  %761 = vmatprep.subr.bf16.mxu0 0
  %762 = vmatpush1.bf16.msra.mxu0 %v683
  %763 = vmatprep.subr.bf16.mxu0 0
  %764 = vmatpush1.bf16.msra.mxu0 %v684
  %765 = vmatprep.subr.bf16.mxu0 0
  %766 = vmatpush1.bf16.msra.mxu0 0
  %767 = vmatprep.subr.bf16.mxu0 0
  %768 = vmatpush1.bf16.msra.mxu0 0
  %769 = vmatprep.subr.bf16.mxu0 0
  %770 = vmatpush1.bf16.msra.mxu0 0
  %771 = vmatprep.subr.bf16.mxu0 0
  %772 = vmatpush1.bf16.msra.mxu0 0
  %773 = vmatprep.subr.bf16.mxu0 0
  %774 = vmatpush1.bf16.msra.mxu0 0
  %775 = vmatprep.subr.bf16.mxu0 0
  %776 = vmatpush1.bf16.msra.mxu0 0
  %777 = vmatprep.subr.bf16.mxu0 0
  %778 = vmatpush1.bf16.msra.mxu0 0
  %779 = vmatprep.subr.bf16.mxu0 0
  %780 = vmatpush1.bf16.msra.mxu0 0
  %781 = vmatprep.mubr.bf16.mxu0 0
  %782 = vmatmul.mubr.bf16.gmra.mrb[0].mxu0 %v561
  %v783 = vpop.f32.mrb[0].mxu0
  %v784 = vadd.f32 %v744, %v783
  %v785 = vpop.f32.mrb[0].mxu0
  %v786 = vpop.f32.mrb[0].mxu0
  %v787 = vpop.f32.mrb[0].mxu0
  %788 = vdwg.mxu0
  %v789 = vadd.f32 %v488, %v784
  %v790 = vld [vmem:[%s5] sm:$0x1]
  %v792 = vlaneseq
  %v793 = vshrl.u32 %v792, 7
  %v794 = vsub.s32 0, %v793
  %v795 = vrot.slane %v790, %v794
  %v797 = vadd.f32 %v789, %v795
  %v798 = vpack.c.bf16 %v797, %v797
  %799 = vst [vmem:[%s6] sm:$0x1] %v798
  // Predicated region
  $region26: #{single_view_forward.16} parent=0 // pred_check
    _
  $region27: #{single_view_forward.16} parent=0 // pred_check_branch
    %801 = sbr.rel (0) target = $region29
  $region28: #{single_view_forward.16} parent=0 // pred_region
    _
  $region29: #{single_view_forward.16} parent=0 // pred_fallthru
    _
  // Predicated region
  $region30: #{single_view_forward.16} parent=0 // pred_check
    _
  $region31: #{single_view_forward.16} parent=0 // pred_check_branch
    %803 = sbr.rel (0) target = $region33
  $region32: #{single_view_forward.16} parent=0 // pred_region
    _
  $region33: #{single_view_forward.16} parent=0 // pred_fallthru
    _

// kernel: single_view_forward.17
$region0: #{single_view_forward.17}
  #allocation0 [shape = 'u32[]', space=smem, size = 0x4, offset = 0x4, fixed_abs, tag = 'smem constant byte address 0x4 - core index']
  #allocation1 [shape = 'u32[144,128]{1,0:T(1,128)}', space=vmem, size = 0x12000, scoped, tag = 'internal scratch']
  %s0 = inlined_call_operand.vmem [shape: bf16[8,288], index: 0, kind: input, shape index: {}]
  %s1 = inlined_call_operand.vmem [shape: bf16[288,64], index: 1, kind: input, shape index: {}]
  %s2 = inlined_call_operand.vmem [shape: f32[1,64], index: 2, kind: input, shape index: {}]
  %s3 = inlined_call_operand.vmem [shape: bf16[8,128], index: 3, kind: input, shape index: {}]
  %s4 = inlined_call_operand.vmem [shape: bf16[128,64], index: 4, kind: input, shape index: {}]
  %s5 = inlined_call_operand.vmem [shape: f32[1,64], index: 5, kind: input, shape index: {}]
  %s6 = inlined_call_operand.vmem [shape: bf16[8,64], index: 6, kind: output, shape index: {}]
  %s7 = sld [smem:[#allocation0]]
  $region34: #{single_view_forward.17} parent=0
    _
  %s9 = ssub.s32 1, %s7
  %s10 = scalar_select 0, %s9, %s7
  // Predicated region
  $region2: #{single_view_forward.17} parent=0 // pred_check
    _
  $region3: #{single_view_forward.17} parent=0 // pred_check_branch
    %12 = sbr.rel (0) target = $region5
  $region4: #{single_view_forward.17} parent=0 // pred_region
    _
  $region5: #{single_view_forward.17} parent=0 // pred_fallthru
    _
  // Predicated region
  $region6: #{single_view_forward.17} parent=0 // pred_check
    _
  $region7: #{single_view_forward.17} parent=0 // pred_check_branch
    %14 = sbr.rel (0) target = $region9
  $region8: #{single_view_forward.17} parent=0 // pred_region
    _
  $region9: #{single_view_forward.17} parent=0 // pred_fallthru
    _
  // Predicated region
  $region10: #{single_view_forward.17} parent=0 // pred_check
    _
  $region11: #{single_view_forward.17} parent=0 // pred_check_branch
    %16 = sbr.rel (0) target = $region13
  $region12: #{single_view_forward.17} parent=0 // pred_region
    _
  $region13: #{single_view_forward.17} parent=0 // pred_fallthru
    _
  // Predicated region
  $region14: #{single_view_forward.17} parent=0 // pred_check
    _
  $region15: #{single_view_forward.17} parent=0 // pred_check_branch
    %18 = sbr.rel (0) target = $region17
  $region16: #{single_view_forward.17} parent=0 // pred_region
    _
  $region17: #{single_view_forward.17} parent=0 // pred_fallthru
    _
  // Predicated region
  $region18: #{single_view_forward.17} parent=0 // pred_check
    _
  $region19: #{single_view_forward.17} parent=0 // pred_check_branch
    %20 = sbr.rel (0) target = $region21
  $region20: #{single_view_forward.17} parent=0 // pred_region
    _
  $region21: #{single_view_forward.17} parent=0 // pred_fallthru
    _
  // Predicated region
  $region22: #{single_view_forward.17} parent=0 // pred_check
    _
  $region23: #{single_view_forward.17} parent=0 // pred_check_branch
    %22 = sbr.rel (0) target = $region25
  $region24: #{single_view_forward.17} parent=0 // pred_region
    _
  $region25: #{single_view_forward.17} parent=0 // pred_fallthru
    _
  %v24 = vld [vmem:[%s0] sm:$0xff]
  %v25 = vld [vmem:[%s0 + $0x8] sm:$0xf]
  %v26 = vld [vmem:[%s1] sm:$0xf]
  %v27 = vld [vmem:[%s1 + $0x4] sm:$0xf]
  %v28 = vld [vmem:[%s1 + $0x8] sm:$0xf]
  %v29 = vld [vmem:[%s1 + $0xc] sm:$0xf]
  %v30 = vld [vmem:[%s1 + $0x10] sm:$0xf]
  %v31 = vld [vmem:[%s1 + $0x14] sm:$0xf]
  %v32 = vld [vmem:[%s1 + $0x18] sm:$0xf]
  %v33 = vld [vmem:[%s1 + $0x1c] sm:$0xf]
  %v34 = vld [vmem:[%s1 + $0x20] sm:$0xf]
  %v35 = vld [vmem:[%s1 + $0x24] sm:$0xf]
  %v36 = vld [vmem:[%s1 + $0x28] sm:$0xf]
  %v37 = vld [vmem:[%s1 + $0x2c] sm:$0xf]
  %v38 = vld [vmem:[%s1 + $0x30] sm:$0xf]
  %v39 = vld [vmem:[%s1 + $0x34] sm:$0xf]
  %v40 = vld [vmem:[%s1 + $0x38] sm:$0xf]
  %v41 = vld [vmem:[%s1 + $0x3c] sm:$0xf]
  %v42 = vld [vmem:[%s1 + $0x40] sm:$0xf]
  %v43 = vld [vmem:[%s1 + $0x44] sm:$0xf]
  %v44 = vld [vmem:[%s1 + $0x48] sm:$0xf]
  %v45 = vld [vmem:[%s1 + $0x4c] sm:$0xf]
  %v46 = vld [vmem:[%s1 + $0x50] sm:$0xf]
  %v47 = vld [vmem:[%s1 + $0x54] sm:$0xf]
  %v48 = vld [vmem:[%s1 + $0x58] sm:$0xf]
  %v49 = vld [vmem:[%s1 + $0x5c] sm:$0xf]
  %v50 = vld [vmem:[%s1 + $0x60] sm:$0xf]
  %v51 = vld [vmem:[%s1 + $0x64] sm:$0xf]
  %v52 = vld [vmem:[%s1 + $0x68] sm:$0xf]
  %v53 = vld [vmem:[%s1 + $0x6c] sm:$0xf]
  %v54 = vld [vmem:[%s1 + $0x70] sm:$0xf]
  %v55 = vld [vmem:[%s1 + $0x74] sm:$0xf]
  %v56 = vld [vmem:[%s1 + $0x78] sm:$0xf]
  %v57 = vld [vmem:[%s1 + $0x7c] sm:$0xf]
  %v58 = vld [vmem:[%s1 + $0x80] sm:$0xf]
  %v59 = vld [vmem:[%s1 + $0x84] sm:$0xf]
  %v60 = vld [vmem:[%s1 + $0x88] sm:$0xf]
  %v61 = vld [vmem:[%s1 + $0x8c] sm:$0xf]
  %v62 = vld [vmem:[%s2] sm:$0x1]
  %v64 = vlaneseq
  %v65 = vshrl.u32 %v64, 7
  %v66 = vsub.s32 0, %v65
  %v67 = vrot.slane %v62, %v66
  %v71 = vunpack.c.l.b16 %v24
  %v72 = vunpack.c.h.b16 %v24
  %v73 = vunpack.c.l.b16 %v25
  %v74 = vpack.c.b16 %v71, %v71
  %v75 = vpack.c.b16 %v72, %v72
  %v76 = vpack.c.b16 %v73, %v73
  %v115 = vunpack.c.l.b16 %v26
  %v116 = vunpack.c.l.b16 %v27
  %v117 = vunpack.c.l.b16 %v28
  %v118 = vunpack.c.l.b16 %v29
  %v119 = vunpack.c.l.b16 %v30
  %v120 = vunpack.c.l.b16 %v31
  %v121 = vunpack.c.l.b16 %v32
  %v122 = vunpack.c.l.b16 %v33
  %v123 = vunpack.c.l.b16 %v34
  %v124 = vunpack.c.l.b16 %v35
  %v125 = vunpack.c.l.b16 %v36
  %v126 = vunpack.c.l.b16 %v37
  %v127 = vunpack.c.l.b16 %v38
  %v128 = vunpack.c.l.b16 %v39
  %v129 = vunpack.c.l.b16 %v40
  %v130 = vunpack.c.l.b16 %v41
  %v131 = vunpack.c.l.b16 %v42
  %v132 = vunpack.c.l.b16 %v43
  %v133 = vunpack.c.l.b16 %v44
  %v134 = vunpack.c.l.b16 %v45
  %v135 = vunpack.c.l.b16 %v46
  %v136 = vunpack.c.l.b16 %v47
  %v137 = vunpack.c.l.b16 %v48
  %v138 = vunpack.c.l.b16 %v49
  %v139 = vunpack.c.l.b16 %v50
  %v140 = vunpack.c.l.b16 %v51
  %v141 = vunpack.c.l.b16 %v52
  %v142 = vunpack.c.l.b16 %v53
  %v143 = vunpack.c.l.b16 %v54
  %v144 = vunpack.c.l.b16 %v55
  %v145 = vunpack.c.l.b16 %v56
  %v146 = vunpack.c.l.b16 %v57
  %v147 = vunpack.c.l.b16 %v58
  %v148 = vunpack.c.l.b16 %v59
  %v149 = vunpack.c.l.b16 %v60
  %v150 = vunpack.c.l.b16 %v61
  %v151 = vpack.c.b16 %v116, %v115
  %v152 = vpack.c.b16 %v118, %v117
  %v153 = vpack.c.b16 %v120, %v119
  %v154 = vpack.c.b16 %v122, %v121
  %v155 = vpack.c.b16 %v124, %v123
  %v156 = vpack.c.b16 %v126, %v125
  %v157 = vpack.c.b16 %v128, %v127
  %v158 = vpack.c.b16 %v130, %v129
  %v159 = vpack.c.b16 %v132, %v131
  %v160 = vpack.c.b16 %v134, %v133
  %v161 = vpack.c.b16 %v136, %v135
  %v162 = vpack.c.b16 %v138, %v137
  %v163 = vpack.c.b16 %v140, %v139
  %v164 = vpack.c.b16 %v142, %v141
  %v165 = vpack.c.b16 %v144, %v143
  %v166 = vpack.c.b16 %v146, %v145
  %v167 = vpack.c.b16 %v148, %v147
  %v168 = vpack.c.b16 %v150, %v149
  %vm187 = vcmask 261120
  %v189 = vsel %vm187, %v76, 0
  %191 = vmatprep.subr.bf16.mxu0 0
  %192 = vmatpush1.bf16.msra.mxu0 %v151
  %193 = vmatprep.subr.bf16.mxu0 0
  %194 = vmatpush1.bf16.msra.mxu0 %v152
  %195 = vmatprep.subr.bf16.mxu0 0
  %196 = vmatpush1.bf16.msra.mxu0 %v153
  %197 = vmatprep.subr.bf16.mxu0 0
  %198 = vmatpush1.bf16.msra.mxu0 %v154
  %199 = vmatprep.subr.bf16.mxu0 0
  %200 = vmatpush1.bf16.msra.mxu0 %v155
  %201 = vmatprep.subr.bf16.mxu0 0
  %202 = vmatpush1.bf16.msra.mxu0 %v156
  %203 = vmatprep.subr.bf16.mxu0 0
  %204 = vmatpush1.bf16.msra.mxu0 %v157
  %205 = vmatprep.subr.bf16.mxu0 0
  %206 = vmatpush1.bf16.msra.mxu0 %v158
  %207 = vmatprep.subr.bf16.mxu0 0
  %208 = vmatpush1.bf16.msra.mxu0 %v159
  %209 = vmatprep.subr.bf16.mxu0 0
  %210 = vmatpush1.bf16.msra.mxu0 %v160
  %211 = vmatprep.subr.bf16.mxu0 0
  %212 = vmatpush1.bf16.msra.mxu0 %v161
  %213 = vmatprep.subr.bf16.mxu0 0
  %214 = vmatpush1.bf16.msra.mxu0 %v162
  %215 = vmatprep.subr.bf16.mxu0 0
  %216 = vmatpush1.bf16.msra.mxu0 %v163
  %217 = vmatprep.subr.bf16.mxu0 0
  %218 = vmatpush1.bf16.msra.mxu0 %v164
  %219 = vmatprep.subr.bf16.mxu0 0
  %220 = vmatpush1.bf16.msra.mxu0 %v165
  %221 = vmatprep.subr.bf16.mxu0 0
  %222 = vmatpush1.bf16.msra.mxu0 %v166
  %223 = vmatprep.mubr.bf16.mxu0 %v75
  %224 = vmatmul.mubr.bf16.gmra.mrb[0].mxu0 %v74
  %v225 = vpop.f32.mrb[0].mxu0
  %v226 = vadd.f32 %v67, %v225
  %v227 = vpop.f32.mrb[0].mxu0
  %v228 = vpop.f32.mrb[0].mxu0
  %v229 = vpop.f32.mrb[0].mxu0
  %230 = vdwg.mxu0
  %231 = vmatprep.subr.bf16.mxu0 0
  %232 = vmatpush1.bf16.msra.mxu0 %v167
  %233 = vmatprep.subr.bf16.mxu0 0
  %234 = vmatpush1.bf16.msra.mxu0 %v168
  %235 = vmatprep.subr.bf16.mxu0 0
  %236 = vmatpush1.bf16.msra.mxu0 0
  %237 = vmatprep.subr.bf16.mxu0 0
  %238 = vmatpush1.bf16.msra.mxu0 0
  %239 = vmatprep.subr.bf16.mxu0 0
  %240 = vmatpush1.bf16.msra.mxu0 0
  %241 = vmatprep.subr.bf16.mxu0 0
  %242 = vmatpush1.bf16.msra.mxu0 0
  %243 = vmatprep.subr.bf16.mxu0 0
  %244 = vmatpush1.bf16.msra.mxu0 0
  %245 = vmatprep.subr.bf16.mxu0 0
  %246 = vmatpush1.bf16.msra.mxu0 0
  %247 = vmatprep.subr.bf16.mxu0 0
  %248 = vmatpush1.bf16.msra.mxu0 0
  %249 = vmatprep.subr.bf16.mxu0 0
  %250 = vmatpush1.bf16.msra.mxu0 0
  %251 = vmatprep.subr.bf16.mxu0 0
  %252 = vmatpush1.bf16.msra.mxu0 0
  %253 = vmatprep.subr.bf16.mxu0 0
  %254 = vmatpush1.bf16.msra.mxu0 0
  %255 = vmatprep.subr.bf16.mxu0 0
  %256 = vmatpush1.bf16.msra.mxu0 0
  %257 = vmatprep.subr.bf16.mxu0 0
  %258 = vmatpush1.bf16.msra.mxu0 0
  %259 = vmatprep.subr.bf16.mxu0 0
  %260 = vmatpush1.bf16.msra.mxu0 0
  %261 = vmatprep.subr.bf16.mxu0 0
  %262 = vmatpush1.bf16.msra.mxu0 0
  %263 = vmatprep.mubr.bf16.mxu0 0
  %264 = vmatmul.mubr.bf16.gmra.mrb[0].mxu0 %v189
  %v265 = vpop.f32.mrb[0].mxu0
  %v266 = vadd.f32 %v226, %v265
  %v267 = vpop.f32.mrb[0].mxu0
  %v268 = vpop.f32.mrb[0].mxu0
  %v269 = vpop.f32.mrb[0].mxu0
  %270 = vdwg.mxu0
  %v271 = vmax.f32 %v266, 0.0
  %v272 = vld [vmem:[%s3] sm:$0xf]
  %v273 = vld [vmem:[%s4] sm:$0xf]
  %v274 = vld [vmem:[%s4 + $0x4] sm:$0xf]
  %v275 = vld [vmem:[%s4 + $0x8] sm:$0xf]
  %v276 = vld [vmem:[%s4 + $0xc] sm:$0xf]
  %v277 = vld [vmem:[%s4 + $0x10] sm:$0xf]
  %v278 = vld [vmem:[%s4 + $0x14] sm:$0xf]
  %v279 = vld [vmem:[%s4 + $0x18] sm:$0xf]
  %v280 = vld [vmem:[%s4 + $0x1c] sm:$0xf]
  %v281 = vld [vmem:[%s4 + $0x20] sm:$0xf]
  %v282 = vld [vmem:[%s4 + $0x24] sm:$0xf]
  %v283 = vld [vmem:[%s4 + $0x28] sm:$0xf]
  %v284 = vld [vmem:[%s4 + $0x2c] sm:$0xf]
  %v285 = vld [vmem:[%s4 + $0x30] sm:$0xf]
  %v286 = vld [vmem:[%s4 + $0x34] sm:$0xf]
  %v287 = vld [vmem:[%s4 + $0x38] sm:$0xf]
  %v288 = vld [vmem:[%s4 + $0x3c] sm:$0xf]
  %v305 = vunpack.c.l.b16 %v273
  %v306 = vunpack.c.l.b16 %v274
  %v307 = vunpack.c.l.b16 %v275
  %v308 = vunpack.c.l.b16 %v276
  %v309 = vunpack.c.l.b16 %v277
  %v310 = vunpack.c.l.b16 %v278
  %v311 = vunpack.c.l.b16 %v279
  %v312 = vunpack.c.l.b16 %v280
  %v313 = vunpack.c.l.b16 %v281
  %v314 = vunpack.c.l.b16 %v282
  %v315 = vunpack.c.l.b16 %v283
  %v316 = vunpack.c.l.b16 %v284
  %v317 = vunpack.c.l.b16 %v285
  %v318 = vunpack.c.l.b16 %v286
  %v319 = vunpack.c.l.b16 %v287
  %v320 = vunpack.c.l.b16 %v288
  %v321 = vpack.c.b16 %v306, %v305
  %v322 = vpack.c.b16 %v308, %v307
  %v323 = vpack.c.b16 %v310, %v309
  %v324 = vpack.c.b16 %v312, %v311
  %v325 = vpack.c.b16 %v314, %v313
  %v326 = vpack.c.b16 %v316, %v315
  %v327 = vpack.c.b16 %v318, %v317
  %v328 = vpack.c.b16 %v320, %v319
  %337 = vmatprep.subr.bf16.mxu0 0
  %338 = vmatpush1.bf16.msra.mxu0 %v321
  %339 = vmatprep.subr.bf16.mxu0 0
  %340 = vmatpush1.bf16.msra.mxu0 %v322
  %341 = vmatprep.subr.bf16.mxu0 0
  %342 = vmatpush1.bf16.msra.mxu0 %v323
  %343 = vmatprep.subr.bf16.mxu0 0
  %344 = vmatpush1.bf16.msra.mxu0 %v324
  %345 = vmatprep.subr.bf16.mxu0 0
  %346 = vmatpush1.bf16.msra.mxu0 %v325
  %347 = vmatprep.subr.bf16.mxu0 0
  %348 = vmatpush1.bf16.msra.mxu0 %v326
  %349 = vmatprep.subr.bf16.mxu0 0
  %350 = vmatpush1.bf16.msra.mxu0 %v327
  %351 = vmatprep.subr.bf16.mxu0 0
  %352 = vmatpush1.bf16.msra.mxu0 %v328
  %353 = vmatprep.subr.bf16.mxu0 0
  %354 = vmatpush1.bf16.msra.mxu0 0
  %355 = vmatprep.subr.bf16.mxu0 0
  %356 = vmatpush1.bf16.msra.mxu0 0
  %357 = vmatprep.subr.bf16.mxu0 0
  %358 = vmatpush1.bf16.msra.mxu0 0
  %359 = vmatprep.subr.bf16.mxu0 0
  %360 = vmatpush1.bf16.msra.mxu0 0
  %361 = vmatprep.subr.bf16.mxu0 0
  %362 = vmatpush1.bf16.msra.mxu0 0
  %363 = vmatprep.subr.bf16.mxu0 0
  %364 = vmatpush1.bf16.msra.mxu0 0
  %365 = vmatprep.subr.bf16.mxu0 0
  %366 = vmatpush1.bf16.msra.mxu0 0
  %367 = vmatprep.subr.bf16.mxu0 0
  %368 = vmatpush1.bf16.msra.mxu0 0
  %369 = vmatprep.mubr.bf16.mxu0 0
  %370 = vmatmul.mubr.bf16.gmra.mrb[0].mxu0 %v272
  %v371 = vpop.f32.mrb[0].mxu0
  %v372 = vadd.f32 0.0, %v371
  %v373 = vpop.f32.mrb[0].mxu0
  %v374 = vpop.f32.mrb[0].mxu0
  %v375 = vpop.f32.mrb[0].mxu0
  %376 = vdwg.mxu0
  %v377 = vadd.f32 %v271, %v372
  %v378 = vld [vmem:[%s5] sm:$0x1]
  %v380 = vlaneseq
  %v381 = vshrl.u32 %v380, 7
  %v382 = vsub.s32 0, %v381
  %v383 = vrot.slane %v378, %v382
  %v385 = vadd.f32 %v377, %v383
  %v386 = vpack.c.bf16 %v385, %v385
  %vm387 = vcmask 519168
  %388 = vst.msk [vmem:[%s6] sm:$0xf] %vm387, %v386
  // Predicated region
  $region26: #{single_view_forward.17} parent=0 // pred_check
    _
  $region27: #{single_view_forward.17} parent=0 // pred_check_branch
    %390 = sbr.rel (0) target = $region29
  $region28: #{single_view_forward.17} parent=0 // pred_region
    _
  $region29: #{single_view_forward.17} parent=0 // pred_fallthru
    _
  // Predicated region
  $region30: #{single_view_forward.17} parent=0 // pred_check
    _
  $region31: #{single_view_forward.17} parent=0 // pred_check_branch
    %392 = sbr.rel (0) target = $region33
  $region32: #{single_view_forward.17} parent=0 // pred_region
    _
  $region33: #{single_view_forward.17} parent=0 // pred_fallthru
    _

// kernel: single_view_forward.18
$region0: #{single_view_forward.18}
  #allocation0 [shape = 'u32[]', space=smem, size = 0x4, offset = 0x4, fixed_abs, tag = 'smem constant byte address 0x4 - core index']
  #allocation1 [shape = 'u32[144,128]{1,0:T(1,128)}', space=vmem, size = 0x12000, scoped, tag = 'internal scratch']
  %s0 = inlined_call_operand.vmem [shape: bf16[32,144], index: 0, kind: input, shape index: {}]
  %s1 = inlined_call_operand.vmem [shape: bf16[144,32], index: 1, kind: input, shape index: {}]
  %s2 = inlined_call_operand.vmem [shape: f32[1,32], index: 2, kind: input, shape index: {}]
  %s3 = inlined_call_operand.vmem [shape: bf16[32,96], index: 3, kind: input, shape index: {}]
  %s4 = inlined_call_operand.vmem [shape: bf16[96,32], index: 4, kind: input, shape index: {}]
  %s5 = inlined_call_operand.vmem [shape: f32[1,32], index: 5, kind: input, shape index: {}]
  %s6 = inlined_call_operand.vmem [shape: bf16[32,32], index: 6, kind: output, shape index: {}]
  %s7 = sld [smem:[#allocation0]]
  $region34: #{single_view_forward.18} parent=0
    _
  %s9 = ssub.s32 1, %s7
  %s10 = scalar_select 0, %s9, %s7
  // Predicated region
  $region2: #{single_view_forward.18} parent=0 // pred_check
    _
  $region3: #{single_view_forward.18} parent=0 // pred_check_branch
    %12 = sbr.rel (0) target = $region5
  $region4: #{single_view_forward.18} parent=0 // pred_region
    _
  $region5: #{single_view_forward.18} parent=0 // pred_fallthru
    _
  // Predicated region
  $region6: #{single_view_forward.18} parent=0 // pred_check
    _
  $region7: #{single_view_forward.18} parent=0 // pred_check_branch
    %14 = sbr.rel (0) target = $region9
  $region8: #{single_view_forward.18} parent=0 // pred_region
    _
  $region9: #{single_view_forward.18} parent=0 // pred_fallthru
    _
  // Predicated region
  $region10: #{single_view_forward.18} parent=0 // pred_check
    _
  $region11: #{single_view_forward.18} parent=0 // pred_check_branch
    %16 = sbr.rel (0) target = $region13
  $region12: #{single_view_forward.18} parent=0 // pred_region
    _
  $region13: #{single_view_forward.18} parent=0 // pred_fallthru
    _
  // Predicated region
  $region14: #{single_view_forward.18} parent=0 // pred_check
    _
  $region15: #{single_view_forward.18} parent=0 // pred_check_branch
    %18 = sbr.rel (0) target = $region17
  $region16: #{single_view_forward.18} parent=0 // pred_region
    _
  $region17: #{single_view_forward.18} parent=0 // pred_fallthru
    _
  // Predicated region
  $region18: #{single_view_forward.18} parent=0 // pred_check
    _
  $region19: #{single_view_forward.18} parent=0 // pred_check_branch
    %20 = sbr.rel (0) target = $region21
  $region20: #{single_view_forward.18} parent=0 // pred_region
    _
  $region21: #{single_view_forward.18} parent=0 // pred_fallthru
    _
  // Predicated region
  $region22: #{single_view_forward.18} parent=0 // pred_check
    _
  $region23: #{single_view_forward.18} parent=0 // pred_check_branch
    %22 = sbr.rel (0) target = $region25
  $region24: #{single_view_forward.18} parent=0 // pred_region
    _
  $region25: #{single_view_forward.18} parent=0 // pred_fallthru
    _
  %v24 = vld [vmem:[%s0] sm:$0xff]
  %v25 = vld [vmem:[%s0 + $0x8] sm:$0xff]
  %v26 = vld [vmem:[%s0 + $0x10] sm:$0xff]
  %v27 = vld [vmem:[%s0 + $0x18] sm:$0xff]
  %v28 = vld [vmem:[%s1] sm:$0xf]
  %v29 = vld [vmem:[%s1 + $0x4] sm:$0xf]
  %v30 = vld [vmem:[%s1 + $0x8] sm:$0xf]
  %v31 = vld [vmem:[%s1 + $0xc] sm:$0xf]
  %v32 = vld [vmem:[%s1 + $0x10] sm:$0xf]
  %v33 = vld [vmem:[%s1 + $0x14] sm:$0xf]
  %v34 = vld [vmem:[%s1 + $0x18] sm:$0xf]
  %v35 = vld [vmem:[%s1 + $0x1c] sm:$0xf]
  %v36 = vld [vmem:[%s1 + $0x20] sm:$0xf]
  %v37 = vld [vmem:[%s1 + $0x24] sm:$0xf]
  %v38 = vld [vmem:[%s1 + $0x28] sm:$0xf]
  %v39 = vld [vmem:[%s1 + $0x2c] sm:$0xf]
  %v40 = vld [vmem:[%s1 + $0x30] sm:$0xf]
  %v41 = vld [vmem:[%s1 + $0x34] sm:$0xf]
  %v42 = vld [vmem:[%s1 + $0x38] sm:$0xf]
  %v43 = vld [vmem:[%s1 + $0x3c] sm:$0xf]
  %v44 = vld [vmem:[%s1 + $0x40] sm:$0xf]
  %v45 = vld [vmem:[%s1 + $0x44] sm:$0xf]
  %v46 = vld [vmem:[%s2] sm:$0x1]
  %v48 = vlaneseq
  %v49 = vshrl.u32 %v48, 7
  %v50 = vsub.s32 0, %v49
  %v51 = vrot.slane %v46, %v50
  %v57 = vunpack.c.l.b16 %v24
  %v58 = vunpack.c.h.b16 %v24
  %v59 = vunpack.c.l.b16 %v25
  %v60 = vunpack.c.h.b16 %v25
  %v61 = vunpack.c.l.b16 %v26
  %v62 = vunpack.c.h.b16 %v26
  %v63 = vunpack.c.l.b16 %v27
  %v64 = vunpack.c.h.b16 %v27
  %v65 = vpack.c.b16 %v59, %v57
  %v66 = vpack.c.b16 %v60, %v58
  %v67 = vpack.c.b16 %v63, %v61
  %v68 = vpack.c.b16 %v64, %v62
  %v89 = vunpack.c.l.b16 %v28
  %v90 = vunpack.c.l.b16 %v29
  %v91 = vunpack.c.l.b16 %v30
  %v92 = vunpack.c.l.b16 %v31
  %v93 = vunpack.c.l.b16 %v32
  %v94 = vunpack.c.l.b16 %v33
  %v95 = vunpack.c.l.b16 %v34
  %v96 = vunpack.c.l.b16 %v35
  %v97 = vunpack.c.l.b16 %v36
  %v98 = vunpack.c.l.b16 %v37
  %v99 = vunpack.c.l.b16 %v38
  %v100 = vunpack.c.l.b16 %v39
  %v101 = vunpack.c.l.b16 %v40
  %v102 = vunpack.c.l.b16 %v41
  %v103 = vunpack.c.l.b16 %v42
  %v104 = vunpack.c.l.b16 %v43
  %v105 = vunpack.c.l.b16 %v44
  %v106 = vunpack.c.l.b16 %v45
  %v107 = vpack.c.b16 %v90, %v89
  %v108 = vpack.c.b16 %v92, %v91
  %v109 = vpack.c.b16 %v94, %v93
  %v110 = vpack.c.b16 %v96, %v95
  %v111 = vpack.c.b16 %v98, %v97
  %v112 = vpack.c.b16 %v100, %v99
  %v113 = vpack.c.b16 %v102, %v101
  %v114 = vpack.c.b16 %v104, %v103
  %v115 = vpack.c.b16 %v106, %v105
  %vm125 = vcmask 130048
  %v127 = vsel %vm125, %v66, 0
  %v130 = vsel %vm125, %v68, 0
  %132 = vmatprep.subr.bf16.mxu0 0
  %133 = vmatpush1.bf16.msra.mxu0 %v107
  %134 = vmatprep.subr.bf16.mxu0 0
  %135 = vmatpush1.bf16.msra.mxu0 %v108
  %136 = vmatprep.subr.bf16.mxu0 0
  %137 = vmatpush1.bf16.msra.mxu0 %v109
  %138 = vmatprep.subr.bf16.mxu0 0
  %139 = vmatpush1.bf16.msra.mxu0 %v110
  %140 = vmatprep.subr.bf16.mxu0 0
  %141 = vmatpush1.bf16.msra.mxu0 %v111
  %142 = vmatprep.subr.bf16.mxu0 0
  %143 = vmatpush1.bf16.msra.mxu0 %v112
  %144 = vmatprep.subr.bf16.mxu0 0
  %145 = vmatpush1.bf16.msra.mxu0 %v113
  %146 = vmatprep.subr.bf16.mxu0 0
  %147 = vmatpush1.bf16.msra.mxu0 %v114
  %148 = vmatprep.subr.bf16.mxu0 0
  %149 = vmatpush1.bf16.msra.mxu0 %v115
  %150 = vmatprep.subr.bf16.mxu0 0
  %151 = vmatpush1.bf16.msra.mxu0 0
  %152 = vmatprep.subr.bf16.mxu0 0
  %153 = vmatpush1.bf16.msra.mxu0 0
  %154 = vmatprep.subr.bf16.mxu0 0
  %155 = vmatpush1.bf16.msra.mxu0 0
  %156 = vmatprep.subr.bf16.mxu0 0
  %157 = vmatpush1.bf16.msra.mxu0 0
  %158 = vmatprep.subr.bf16.mxu0 0
  %159 = vmatpush1.bf16.msra.mxu0 0
  %160 = vmatprep.subr.bf16.mxu0 0
  %161 = vmatpush1.bf16.msra.mxu0 0
  %162 = vmatprep.subr.bf16.mxu0 0
  %163 = vmatpush1.bf16.msra.mxu0 0
  %164 = vmatprep.mubr.bf16.mxu0 %v127
  %165 = vmatmul.mubr.bf16.gmra.mrb[0].mxu0 %v65
  %v166 = vpop.f32.mrb[0].mxu0
  %v167 = vadd.f32 %v51, %v166
  %v168 = vpop.f32.mrb[0].mxu0
  %v169 = vpop.f32.mrb[0].mxu0
  %v170 = vadd.f32 %v51, %v169
  %v171 = vpop.f32.mrb[0].mxu0
  %172 = vmatprep.mubr.bf16.mxu0 %v130
  %173 = vmatmul.mubr.bf16.gmra.mrb[0].mxu0 %v67
  %v174 = vpop.f32.mrb[0].mxu0
  %v175 = vadd.f32 %v51, %v174
  %v176 = vpop.f32.mrb[0].mxu0
  %v177 = vpop.f32.mrb[0].mxu0
  %v178 = vadd.f32 %v51, %v177
  %v179 = vpop.f32.mrb[0].mxu0
  %180 = vdwg.mxu0
  %v181 = vmax.f32 %v167, 0.0
  %v182 = vmax.f32 %v170, 0.0
  %v183 = vmax.f32 %v175, 0.0
  %v184 = vmax.f32 %v178, 0.0
  %v185 = vld [vmem:[%s3] sm:$0xf]
  %v186 = vld [vmem:[%s3 + $0x4] sm:$0xf]
  %v187 = vld [vmem:[%s3 + $0x8] sm:$0xf]
  %v188 = vld [vmem:[%s3 + $0xc] sm:$0xf]
  %v189 = vld [vmem:[%s4] sm:$0xf]
  %v190 = vld [vmem:[%s4 + $0x4] sm:$0xf]
  %v191 = vld [vmem:[%s4 + $0x8] sm:$0xf]
  %v192 = vld [vmem:[%s4 + $0xc] sm:$0xf]
  %v193 = vld [vmem:[%s4 + $0x10] sm:$0xf]
  %v194 = vld [vmem:[%s4 + $0x14] sm:$0xf]
  %v195 = vld [vmem:[%s4 + $0x18] sm:$0xf]
  %v196 = vld [vmem:[%s4 + $0x1c] sm:$0xf]
  %v197 = vld [vmem:[%s4 + $0x20] sm:$0xf]
  %v198 = vld [vmem:[%s4 + $0x24] sm:$0xf]
  %v199 = vld [vmem:[%s4 + $0x28] sm:$0xf]
  %v200 = vld [vmem:[%s4 + $0x2c] sm:$0xf]
  %v205 = vunpack.c.l.b16 %v185
  %v206 = vunpack.c.l.b16 %v186
  %v207 = vunpack.c.l.b16 %v187
  %v208 = vunpack.c.l.b16 %v188
  %v209 = vpack.c.b16 %v206, %v205
  %v210 = vpack.c.b16 %v208, %v207
  %v223 = vunpack.c.l.b16 %v189
  %v224 = vunpack.c.l.b16 %v190
  %v225 = vunpack.c.l.b16 %v191
  %v226 = vunpack.c.l.b16 %v192
  %v227 = vunpack.c.l.b16 %v193
  %v228 = vunpack.c.l.b16 %v194
  %v229 = vunpack.c.l.b16 %v195
  %v230 = vunpack.c.l.b16 %v196
  %v231 = vunpack.c.l.b16 %v197
  %v232 = vunpack.c.l.b16 %v198
  %v233 = vunpack.c.l.b16 %v199
  %v234 = vunpack.c.l.b16 %v200
  %v235 = vpack.c.b16 %v224, %v223
  %v236 = vpack.c.b16 %v226, %v225
  %v237 = vpack.c.b16 %v228, %v227
  %v238 = vpack.c.b16 %v230, %v229
  %v239 = vpack.c.b16 %v232, %v231
  %v240 = vpack.c.b16 %v234, %v233
  %vm247 = vcmask 785408
  %v249 = vsel %vm247, %v209, 0
  %v252 = vsel %vm247, %v210, 0
  %254 = vmatprep.subr.bf16.mxu0 0
  %255 = vmatpush1.bf16.msra.mxu0 %v235
  %256 = vmatprep.subr.bf16.mxu0 0
  %257 = vmatpush1.bf16.msra.mxu0 %v236
  %258 = vmatprep.subr.bf16.mxu0 0
  %259 = vmatpush1.bf16.msra.mxu0 %v237
  %260 = vmatprep.subr.bf16.mxu0 0
  %261 = vmatpush1.bf16.msra.mxu0 %v238
  %262 = vmatprep.subr.bf16.mxu0 0
  %263 = vmatpush1.bf16.msra.mxu0 %v239
  %264 = vmatprep.subr.bf16.mxu0 0
  %265 = vmatpush1.bf16.msra.mxu0 %v240
  %266 = vmatprep.subr.bf16.mxu0 0
  %267 = vmatpush1.bf16.msra.mxu0 0
  %268 = vmatprep.subr.bf16.mxu0 0
  %269 = vmatpush1.bf16.msra.mxu0 0
  %270 = vmatprep.subr.bf16.mxu0 0
  %271 = vmatpush1.bf16.msra.mxu0 0
  %272 = vmatprep.subr.bf16.mxu0 0
  %273 = vmatpush1.bf16.msra.mxu0 0
  %274 = vmatprep.subr.bf16.mxu0 0
  %275 = vmatpush1.bf16.msra.mxu0 0
  %276 = vmatprep.subr.bf16.mxu0 0
  %277 = vmatpush1.bf16.msra.mxu0 0
  %278 = vmatprep.subr.bf16.mxu0 0
  %279 = vmatpush1.bf16.msra.mxu0 0
  %280 = vmatprep.subr.bf16.mxu0 0
  %281 = vmatpush1.bf16.msra.mxu0 0
  %282 = vmatprep.subr.bf16.mxu0 0
  %283 = vmatpush1.bf16.msra.mxu0 0
  %284 = vmatprep.subr.bf16.mxu0 0
  %285 = vmatpush1.bf16.msra.mxu0 0
  %286 = vmatprep.mubr.bf16.mxu0 0
  %287 = vmatmul.mubr.bf16.gmra.mrb[0].mxu0 %v249
  %v288 = vpop.f32.mrb[0].mxu0
  %v289 = vadd.f32 0.0, %v288
  %v290 = vpop.f32.mrb[0].mxu0
  %v291 = vpop.f32.mrb[0].mxu0
  %v292 = vadd.f32 0.0, %v291
  %v293 = vpop.f32.mrb[0].mxu0
  %294 = vmatprep.mubr.bf16.mxu0 0
  %295 = vmatmul.mubr.bf16.gmra.mrb[0].mxu0 %v252
  %v296 = vpop.f32.mrb[0].mxu0
  %v297 = vadd.f32 0.0, %v296
  %v298 = vpop.f32.mrb[0].mxu0
  %v299 = vpop.f32.mrb[0].mxu0
  %v300 = vadd.f32 0.0, %v299
  %v301 = vpop.f32.mrb[0].mxu0
  %302 = vdwg.mxu0
  %v303 = vadd.f32 %v181, %v289
  %v304 = vadd.f32 %v182, %v292
  %v305 = vadd.f32 %v183, %v297
  %v306 = vadd.f32 %v184, %v300
  %v307 = vld [vmem:[%s5] sm:$0x1]
  %v309 = vlaneseq
  %v310 = vshrl.u32 %v309, 7
  %v311 = vsub.s32 0, %v310
  %v312 = vrot.slane %v307, %v311
  %v314 = vadd.f32 %v303, %v312
  %v315 = vadd.f32 %v304, %v312
  %v316 = vadd.f32 %v305, %v312
  %v317 = vadd.f32 %v306, %v312
  %v318 = vpack.c.bf16 %v315, %v314
  %v319 = vpack.c.bf16 %v317, %v316
  %v322 = vunpack.c.l.b16 %v318
  %v323 = vunpack.c.h.b16 %v318
  %v324 = vunpack.c.l.b16 %v319
  %v325 = vunpack.c.h.b16 %v319
  %v326 = vpack.c.b16 %v322, %v322
  %v327 = vpack.c.b16 %v323, %v323
  %v328 = vpack.c.b16 %v324, %v324
  %v329 = vpack.c.b16 %v325, %v325
  %vm334 = vcmask 257024
  %335 = vst.msk [vmem:[%s6] sm:$0xf] %vm334, %v326
  %336 = vst.msk [vmem:[%s6 + $0x4] sm:$0xf] %vm334, %v327
  %337 = vst.msk [vmem:[%s6 + $0x8] sm:$0xf] %vm334, %v328
  %338 = vst.msk [vmem:[%s6 + $0xc] sm:$0xf] %vm334, %v329
  // Predicated region
  $region26: #{single_view_forward.18} parent=0 // pred_check
    _
  $region27: #{single_view_forward.18} parent=0 // pred_check_branch
    %340 = sbr.rel (0) target = $region29
  $region28: #{single_view_forward.18} parent=0 // pred_region
    _
  $region29: #{single_view_forward.18} parent=0 // pred_fallthru
    _
  // Predicated region
  $region30: #{single_view_forward.18} parent=0 // pred_check
    _
  $region31: #{single_view_forward.18} parent=0 // pred_check_branch
    %342 = sbr.rel (0) target = $region33
  $region32: #{single_view_forward.18} parent=0 // pred_region
    _
  $region33: #{single_view_forward.18} parent=0 // pred_fallthru
    _

// kernel: single_view_forward.19
$region0: #{single_view_forward.19}
  #allocation0 [shape = 'u32[]', space=smem, size = 0x4, offset = 0x4, fixed_abs, tag = 'smem constant byte address 0x4 - core index']
  #allocation1 [shape = 'u32[144,128]{1,0:T(1,128)}', space=vmem, size = 0x12000, scoped, tag = 'internal scratch']
  %s0 = inlined_call_operand.vmem [shape: bf16[128,72], index: 0, kind: input, shape index: {}]
  %s1 = inlined_call_operand.vmem [shape: bf16[72,16], index: 1, kind: input, shape index: {}]
  %s2 = inlined_call_operand.vmem [shape: f32[1,16], index: 2, kind: input, shape index: {}]
  %s3 = inlined_call_operand.vmem [shape: bf16[128,64], index: 3, kind: input, shape index: {}]
  %s4 = inlined_call_operand.vmem [shape: bf16[64,16], index: 4, kind: input, shape index: {}]
  %s5 = inlined_call_operand.vmem [shape: f32[1,16], index: 5, kind: input, shape index: {}]
  %s6 = inlined_call_operand.vmem [shape: bf16[128,16], index: 6, kind: output, shape index: {}]
  %s7 = sld [smem:[#allocation0]]
  $region34: #{single_view_forward.19} parent=0
    _
  %s9 = ssub.s32 1, %s7
  %s10 = scalar_select 0, %s9, %s7
  // Predicated region
  $region2: #{single_view_forward.19} parent=0 // pred_check
    _
  $region3: #{single_view_forward.19} parent=0 // pred_check_branch
    %12 = sbr.rel (0) target = $region5
  $region4: #{single_view_forward.19} parent=0 // pred_region
    _
  $region5: #{single_view_forward.19} parent=0 // pred_fallthru
    _
  // Predicated region
  $region6: #{single_view_forward.19} parent=0 // pred_check
    _
  $region7: #{single_view_forward.19} parent=0 // pred_check_branch
    %14 = sbr.rel (0) target = $region9
  $region8: #{single_view_forward.19} parent=0 // pred_region
    _
  $region9: #{single_view_forward.19} parent=0 // pred_fallthru
    _
  // Predicated region
  $region10: #{single_view_forward.19} parent=0 // pred_check
    _
  $region11: #{single_view_forward.19} parent=0 // pred_check_branch
    %16 = sbr.rel (0) target = $region13
  $region12: #{single_view_forward.19} parent=0 // pred_region
    _
  $region13: #{single_view_forward.19} parent=0 // pred_fallthru
    _
  // Predicated region
  $region14: #{single_view_forward.19} parent=0 // pred_check
    _
  $region15: #{single_view_forward.19} parent=0 // pred_check_branch
    %18 = sbr.rel (0) target = $region17
  $region16: #{single_view_forward.19} parent=0 // pred_region
    _
  $region17: #{single_view_forward.19} parent=0 // pred_fallthru
    _
  // Predicated region
  $region18: #{single_view_forward.19} parent=0 // pred_check
    _
  $region19: #{single_view_forward.19} parent=0 // pred_check_branch
    %20 = sbr.rel (0) target = $region21
  $region20: #{single_view_forward.19} parent=0 // pred_region
    _
  $region21: #{single_view_forward.19} parent=0 // pred_fallthru
    _
  // Predicated region
  $region22: #{single_view_forward.19} parent=0 // pred_check
    _
  $region23: #{single_view_forward.19} parent=0 // pred_check_branch
    %22 = sbr.rel (0) target = $region25
  $region24: #{single_view_forward.19} parent=0 // pred_region
    _
  $region25: #{single_view_forward.19} parent=0 // pred_fallthru
    _
  %v24 = vld [vmem:[%s0] sm:$0xf]
  %v25 = vld [vmem:[%s0 + $0x4] sm:$0xf]
  %v26 = vld [vmem:[%s0 + $0x8] sm:$0xf]
  %v27 = vld [vmem:[%s0 + $0xc] sm:$0xf]
  %v28 = vld [vmem:[%s0 + $0x10] sm:$0xf]
  %v29 = vld [vmem:[%s0 + $0x14] sm:$0xf]
  %v30 = vld [vmem:[%s0 + $0x18] sm:$0xf]
  %v31 = vld [vmem:[%s0 + $0x1c] sm:$0xf]
  %v32 = vld [vmem:[%s0 + $0x20] sm:$0xf]
  %v33 = vld [vmem:[%s0 + $0x24] sm:$0xf]
  %v34 = vld [vmem:[%s0 + $0x28] sm:$0xf]
  %v35 = vld [vmem:[%s0 + $0x2c] sm:$0xf]
  %v36 = vld [vmem:[%s0 + $0x30] sm:$0xf]
  %v37 = vld [vmem:[%s0 + $0x34] sm:$0xf]
  %v38 = vld [vmem:[%s0 + $0x38] sm:$0xf]
  %v39 = vld [vmem:[%s0 + $0x3c] sm:$0xf]
  %v40 = vld [vmem:[%s1] sm:$0xf]
  %v41 = vld [vmem:[%s1 + $0x4] sm:$0xf]
  %v42 = vld [vmem:[%s1 + $0x8] sm:$0xf]
  %v43 = vld [vmem:[%s1 + $0xc] sm:$0xf]
  %v44 = vld [vmem:[%s1 + $0x10] sm:$0xf]
  %v45 = vld [vmem:[%s1 + $0x14] sm:$0xf]
  %v46 = vld [vmem:[%s1 + $0x18] sm:$0xf]
  %v47 = vld [vmem:[%s1 + $0x1c] sm:$0xf]
  %v48 = vld [vmem:[%s1 + $0x20] sm:$0xf]
  %v49 = vld [vmem:[%s2] sm:$0x1]
  %v51 = vlaneseq
  %v52 = vshrl.u32 %v51, 7
  %v53 = vsub.s32 0, %v52
  %v54 = vrot.slane %v49, %v53
  %v72 = vunpack.c.l.b16 %v24
  %v73 = vunpack.c.l.b16 %v25
  %v74 = vunpack.c.l.b16 %v26
  %v75 = vunpack.c.l.b16 %v27
  %v76 = vunpack.c.l.b16 %v28
  %v77 = vunpack.c.l.b16 %v29
  %v78 = vunpack.c.l.b16 %v30
  %v79 = vunpack.c.l.b16 %v31
  %v80 = vunpack.c.l.b16 %v32
  %v81 = vunpack.c.l.b16 %v33
  %v82 = vunpack.c.l.b16 %v34
  %v83 = vunpack.c.l.b16 %v35
  %v84 = vunpack.c.l.b16 %v36
  %v85 = vunpack.c.l.b16 %v37
  %v86 = vunpack.c.l.b16 %v38
  %v87 = vunpack.c.l.b16 %v39
  %v88 = vpack.c.b16 %v73, %v72
  %v89 = vpack.c.b16 %v75, %v74
  %v90 = vpack.c.b16 %v77, %v76
  %v91 = vpack.c.b16 %v79, %v78
  %v92 = vpack.c.b16 %v81, %v80
  %v93 = vpack.c.b16 %v83, %v82
  %v94 = vpack.c.b16 %v85, %v84
  %v95 = vpack.c.b16 %v87, %v86
  %v105 = vunpack.c.l.b16 %v40
  %v106 = vunpack.c.l.b16 %v41
  %v107 = vunpack.c.l.b16 %v42
  %v108 = vunpack.c.l.b16 %v43
  %v109 = vunpack.c.l.b16 %v44
  %v110 = vunpack.c.l.b16 %v45
  %v111 = vunpack.c.l.b16 %v46
  %v112 = vunpack.c.l.b16 %v47
  %v113 = vunpack.c.l.b16 %v48
  %v114 = vpack.c.b16 %v106, %v105
  %v115 = vpack.c.b16 %v108, %v107
  %v116 = vpack.c.b16 %v110, %v109
  %v117 = vpack.c.b16 %v112, %v111
  %v118 = vpack.c.b16 %v113, %v113
  %vm123 = vcmask 588800
  %v125 = vsel %vm123, %v88, 0
  %v128 = vsel %vm123, %v89, 0
  %v131 = vsel %vm123, %v90, 0
  %v134 = vsel %vm123, %v91, 0
  %v137 = vsel %vm123, %v92, 0
  %v140 = vsel %vm123, %v93, 0
  %v143 = vsel %vm123, %v94, 0
  %v146 = vsel %vm123, %v95, 0
  %vm148 = vcmask 1043456
  %v150 = vsel %vm148, %v118, 0
  %152 = vmatprep.subr.bf16.mxu0 0
  %153 = vmatpush1.bf16.msra.mxu0 %v114
  %154 = vmatprep.subr.bf16.mxu0 0
  %155 = vmatpush1.bf16.msra.mxu0 %v115
  %156 = vmatprep.subr.bf16.mxu0 0
  %157 = vmatpush1.bf16.msra.mxu0 %v116
  %158 = vmatprep.subr.bf16.mxu0 0
  %159 = vmatpush1.bf16.msra.mxu0 %v117
  %160 = vmatprep.subr.bf16.mxu0 0
  %161 = vmatpush1.bf16.msra.mxu0 %v150
  %162 = vmatprep.subr.bf16.mxu0 0
  %163 = vmatpush1.bf16.msra.mxu0 0
  %164 = vmatprep.subr.bf16.mxu0 0
  %165 = vmatpush1.bf16.msra.mxu0 0
  %166 = vmatprep.subr.bf16.mxu0 0
  %167 = vmatpush1.bf16.msra.mxu0 0
  %168 = vmatprep.subr.bf16.mxu0 0
  %169 = vmatpush1.bf16.msra.mxu0 0
  %170 = vmatprep.subr.bf16.mxu0 0
  %171 = vmatpush1.bf16.msra.mxu0 0
  %172 = vmatprep.subr.bf16.mxu0 0
  %173 = vmatpush1.bf16.msra.mxu0 0
  %174 = vmatprep.subr.bf16.mxu0 0
  %175 = vmatpush1.bf16.msra.mxu0 0
  %176 = vmatprep.subr.bf16.mxu0 0
  %177 = vmatpush1.bf16.msra.mxu0 0
  %178 = vmatprep.subr.bf16.mxu0 0
  %179 = vmatpush1.bf16.msra.mxu0 0
  %180 = vmatprep.subr.bf16.mxu0 0
  %181 = vmatpush1.bf16.msra.mxu0 0
  %182 = vmatprep.subr.bf16.mxu0 0
  %183 = vmatpush1.bf16.msra.mxu0 0
  %184 = vmatprep.mubr.bf16.mxu0 0
  %185 = vmatmul.mubr.bf16.gmra.mrb[0].mxu0 %v125
  %v186 = vpop.f32.mrb[0].mxu0
  %v187 = vadd.f32 %v54, %v186
  %v188 = vpop.f32.mrb[0].mxu0
  %v189 = vpop.f32.mrb[0].mxu0
  %v190 = vadd.f32 %v54, %v189
  %v191 = vpop.f32.mrb[0].mxu0
  %192 = vmatprep.mubr.bf16.mxu0 0
  %193 = vmatmul.mubr.bf16.gmra.mrb[0].mxu0 %v128
  %v194 = vpop.f32.mrb[0].mxu0
  %v195 = vadd.f32 %v54, %v194
  %v196 = vpop.f32.mrb[0].mxu0
  %v197 = vpop.f32.mrb[0].mxu0
  %v198 = vadd.f32 %v54, %v197
  %v199 = vpop.f32.mrb[0].mxu0
  %200 = vmatprep.mubr.bf16.mxu0 0
  %201 = vmatmul.mubr.bf16.gmra.mrb[0].mxu0 %v131
  %v202 = vpop.f32.mrb[0].mxu0
  %v203 = vadd.f32 %v54, %v202
  %v204 = vpop.f32.mrb[0].mxu0
  %v205 = vpop.f32.mrb[0].mxu0
  %v206 = vadd.f32 %v54, %v205
  %v207 = vpop.f32.mrb[0].mxu0
  %208 = vmatprep.mubr.bf16.mxu0 0
  %209 = vmatmul.mubr.bf16.gmra.mrb[0].mxu0 %v134
  %v210 = vpop.f32.mrb[0].mxu0
  %v211 = vadd.f32 %v54, %v210
  %v212 = vpop.f32.mrb[0].mxu0
  %v213 = vpop.f32.mrb[0].mxu0
  %v214 = vadd.f32 %v54, %v213
  %v215 = vpop.f32.mrb[0].mxu0
  %216 = vmatprep.mubr.bf16.mxu0 0
  %217 = vmatmul.mubr.bf16.gmra.mrb[0].mxu0 %v137
  %v218 = vpop.f32.mrb[0].mxu0
  %v219 = vadd.f32 %v54, %v218
  %v220 = vpop.f32.mrb[0].mxu0
  %v221 = vpop.f32.mrb[0].mxu0
  %v222 = vadd.f32 %v54, %v221
  %v223 = vpop.f32.mrb[0].mxu0
  %224 = vmatprep.mubr.bf16.mxu0 0
  %225 = vmatmul.mubr.bf16.gmra.mrb[0].mxu0 %v140
  %v226 = vpop.f32.mrb[0].mxu0
  %v227 = vadd.f32 %v54, %v226
  %v228 = vpop.f32.mrb[0].mxu0
  %v229 = vpop.f32.mrb[0].mxu0
  %v230 = vadd.f32 %v54, %v229
  %v231 = vpop.f32.mrb[0].mxu0
  %232 = vmatprep.mubr.bf16.mxu0 0
  %233 = vmatmul.mubr.bf16.gmra.mrb[0].mxu0 %v143
  %v234 = vpop.f32.mrb[0].mxu0
  %v235 = vadd.f32 %v54, %v234
  %v236 = vpop.f32.mrb[0].mxu0
  %v237 = vpop.f32.mrb[0].mxu0
  %v238 = vadd.f32 %v54, %v237
  %v239 = vpop.f32.mrb[0].mxu0
  %240 = vmatprep.mubr.bf16.mxu0 0
  %241 = vmatmul.mubr.bf16.gmra.mrb[0].mxu0 %v146
  %v242 = vpop.f32.mrb[0].mxu0
  %v243 = vadd.f32 %v54, %v242
  %v244 = vpop.f32.mrb[0].mxu0
  %v245 = vpop.f32.mrb[0].mxu0
  %v246 = vadd.f32 %v54, %v245
  %v247 = vpop.f32.mrb[0].mxu0
  %248 = vdwg.mxu0
  %v249 = vmax.f32 %v187, 0.0
  %v250 = vmax.f32 %v190, 0.0
  %v251 = vmax.f32 %v195, 0.0
  %v252 = vmax.f32 %v198, 0.0
  %v253 = vmax.f32 %v203, 0.0
  %v254 = vmax.f32 %v206, 0.0
  %v255 = vmax.f32 %v211, 0.0
  %v256 = vmax.f32 %v214, 0.0
  %v257 = vmax.f32 %v219, 0.0
  %v258 = vmax.f32 %v222, 0.0
  %v259 = vmax.f32 %v227, 0.0
  %v260 = vmax.f32 %v230, 0.0
  %v261 = vmax.f32 %v235, 0.0
  %v262 = vmax.f32 %v238, 0.0
  %v263 = vmax.f32 %v243, 0.0
  %v264 = vmax.f32 %v246, 0.0
  %v265 = vld [vmem:[%s3] sm:$0xf]
  %v266 = vld [vmem:[%s3 + $0x4] sm:$0xf]
  %v267 = vld [vmem:[%s3 + $0x8] sm:$0xf]
  %v268 = vld [vmem:[%s3 + $0xc] sm:$0xf]
  %v269 = vld [vmem:[%s3 + $0x10] sm:$0xf]
  %v270 = vld [vmem:[%s3 + $0x14] sm:$0xf]
  %v271 = vld [vmem:[%s3 + $0x18] sm:$0xf]
  %v272 = vld [vmem:[%s3 + $0x1c] sm:$0xf]
  %v273 = vld [vmem:[%s3 + $0x20] sm:$0xf]
  %v274 = vld [vmem:[%s3 + $0x24] sm:$0xf]
  %v275 = vld [vmem:[%s3 + $0x28] sm:$0xf]
  %v276 = vld [vmem:[%s3 + $0x2c] sm:$0xf]
  %v277 = vld [vmem:[%s3 + $0x30] sm:$0xf]
  %v278 = vld [vmem:[%s3 + $0x34] sm:$0xf]
  %v279 = vld [vmem:[%s3 + $0x38] sm:$0xf]
  %v280 = vld [vmem:[%s3 + $0x3c] sm:$0xf]
  %v281 = vld [vmem:[%s4] sm:$0xf]
  %v282 = vld [vmem:[%s4 + $0x4] sm:$0xf]
  %v283 = vld [vmem:[%s4 + $0x8] sm:$0xf]
  %v284 = vld [vmem:[%s4 + $0xc] sm:$0xf]
  %v285 = vld [vmem:[%s4 + $0x10] sm:$0xf]
  %v286 = vld [vmem:[%s4 + $0x14] sm:$0xf]
  %v287 = vld [vmem:[%s4 + $0x18] sm:$0xf]
  %v288 = vld [vmem:[%s4 + $0x1c] sm:$0xf]
  %v305 = vunpack.c.l.b16 %v265
  %v306 = vunpack.c.l.b16 %v266
  %v307 = vunpack.c.l.b16 %v267
  %v308 = vunpack.c.l.b16 %v268
  %v309 = vunpack.c.l.b16 %v269
  %v310 = vunpack.c.l.b16 %v270
  %v311 = vunpack.c.l.b16 %v271
  %v312 = vunpack.c.l.b16 %v272
  %v313 = vunpack.c.l.b16 %v273
  %v314 = vunpack.c.l.b16 %v274
  %v315 = vunpack.c.l.b16 %v275
  %v316 = vunpack.c.l.b16 %v276
  %v317 = vunpack.c.l.b16 %v277
  %v318 = vunpack.c.l.b16 %v278
  %v319 = vunpack.c.l.b16 %v279
  %v320 = vunpack.c.l.b16 %v280
  %v321 = vpack.c.b16 %v306, %v305
  %v322 = vpack.c.b16 %v308, %v307
  %v323 = vpack.c.b16 %v310, %v309
  %v324 = vpack.c.b16 %v312, %v311
  %v325 = vpack.c.b16 %v314, %v313
  %v326 = vpack.c.b16 %v316, %v315
  %v327 = vpack.c.b16 %v318, %v317
  %v328 = vpack.c.b16 %v320, %v319
  %v337 = vunpack.c.l.b16 %v281
  %v338 = vunpack.c.l.b16 %v282
  %v339 = vunpack.c.l.b16 %v283
  %v340 = vunpack.c.l.b16 %v284
  %v341 = vunpack.c.l.b16 %v285
  %v342 = vunpack.c.l.b16 %v286
  %v343 = vunpack.c.l.b16 %v287
  %v344 = vunpack.c.l.b16 %v288
  %v345 = vpack.c.b16 %v338, %v337
  %v346 = vpack.c.b16 %v340, %v339
  %v347 = vpack.c.b16 %v342, %v341
  %v348 = vpack.c.b16 %v344, %v343
  %vm353 = vcmask 523264
  %v355 = vsel %vm353, %v321, 0
  %v358 = vsel %vm353, %v322, 0
  %v361 = vsel %vm353, %v323, 0
  %v364 = vsel %vm353, %v324, 0
  %v367 = vsel %vm353, %v325, 0
  %v370 = vsel %vm353, %v326, 0
  %v373 = vsel %vm353, %v327, 0
  %v376 = vsel %vm353, %v328, 0
  %378 = vmatprep.subr.bf16.mxu0 0
  %379 = vmatpush1.bf16.msra.mxu0 %v345
  %380 = vmatprep.subr.bf16.mxu0 0
  %381 = vmatpush1.bf16.msra.mxu0 %v346
  %382 = vmatprep.subr.bf16.mxu0 0
  %383 = vmatpush1.bf16.msra.mxu0 %v347
  %384 = vmatprep.subr.bf16.mxu0 0
  %385 = vmatpush1.bf16.msra.mxu0 %v348
  %386 = vmatprep.subr.bf16.mxu0 0
  %387 = vmatpush1.bf16.msra.mxu0 0
  %388 = vmatprep.subr.bf16.mxu0 0
  %389 = vmatpush1.bf16.msra.mxu0 0
  %390 = vmatprep.subr.bf16.mxu0 0
  %391 = vmatpush1.bf16.msra.mxu0 0
  %392 = vmatprep.subr.bf16.mxu0 0
  %393 = vmatpush1.bf16.msra.mxu0 0
  %394 = vmatprep.subr.bf16.mxu0 0
  %395 = vmatpush1.bf16.msra.mxu0 0
  %396 = vmatprep.subr.bf16.mxu0 0
  %397 = vmatpush1.bf16.msra.mxu0 0
  %398 = vmatprep.subr.bf16.mxu0 0
  %399 = vmatpush1.bf16.msra.mxu0 0
  %400 = vmatprep.subr.bf16.mxu0 0
  %401 = vmatpush1.bf16.msra.mxu0 0
  %402 = vmatprep.subr.bf16.mxu0 0
  %403 = vmatpush1.bf16.msra.mxu0 0
  %404 = vmatprep.subr.bf16.mxu0 0
  %405 = vmatpush1.bf16.msra.mxu0 0
  %406 = vmatprep.subr.bf16.mxu0 0
  %407 = vmatpush1.bf16.msra.mxu0 0
  %408 = vmatprep.subr.bf16.mxu0 0
  %409 = vmatpush1.bf16.msra.mxu0 0
  %410 = vmatprep.mubr.bf16.mxu0 0
  %411 = vmatmul.mubr.bf16.gmra.mrb[0].mxu0 %v355
  %v412 = vpop.f32.mrb[0].mxu0
  %v413 = vadd.f32 0.0, %v412
  %v414 = vpop.f32.mrb[0].mxu0
  %v415 = vpop.f32.mrb[0].mxu0
  %v416 = vadd.f32 0.0, %v415
  %v417 = vpop.f32.mrb[0].mxu0
  %418 = vmatprep.mubr.bf16.mxu0 0
  %419 = vmatmul.mubr.bf16.gmra.mrb[0].mxu0 %v358
  %v420 = vpop.f32.mrb[0].mxu0
  %v421 = vadd.f32 0.0, %v420
  %v422 = vpop.f32.mrb[0].mxu0
  %v423 = vpop.f32.mrb[0].mxu0
  %v424 = vadd.f32 0.0, %v423
  %v425 = vpop.f32.mrb[0].mxu0
  %426 = vmatprep.mubr.bf16.mxu0 0
  %427 = vmatmul.mubr.bf16.gmra.mrb[0].mxu0 %v361
  %v428 = vpop.f32.mrb[0].mxu0
  %v429 = vadd.f32 0.0, %v428
  %v430 = vpop.f32.mrb[0].mxu0
  %v431 = vpop.f32.mrb[0].mxu0
  %v432 = vadd.f32 0.0, %v431
  %v433 = vpop.f32.mrb[0].mxu0
  %434 = vmatprep.mubr.bf16.mxu0 0
  %435 = vmatmul.mubr.bf16.gmra.mrb[0].mxu0 %v364
  %v436 = vpop.f32.mrb[0].mxu0
  %v437 = vadd.f32 0.0, %v436
  %v438 = vpop.f32.mrb[0].mxu0
  %v439 = vpop.f32.mrb[0].mxu0
  %v440 = vadd.f32 0.0, %v439
  %v441 = vpop.f32.mrb[0].mxu0
  %442 = vmatprep.mubr.bf16.mxu0 0
  %443 = vmatmul.mubr.bf16.gmra.mrb[0].mxu0 %v367
  %v444 = vpop.f32.mrb[0].mxu0
  %v445 = vadd.f32 0.0, %v444
  %v446 = vpop.f32.mrb[0].mxu0
  %v447 = vpop.f32.mrb[0].mxu0
  %v448 = vadd.f32 0.0, %v447
  %v449 = vpop.f32.mrb[0].mxu0
  %450 = vmatprep.mubr.bf16.mxu0 0
  %451 = vmatmul.mubr.bf16.gmra.mrb[0].mxu0 %v370
  %v452 = vpop.f32.mrb[0].mxu0
  %v453 = vadd.f32 0.0, %v452
  %v454 = vpop.f32.mrb[0].mxu0
  %v455 = vpop.f32.mrb[0].mxu0
  %v456 = vadd.f32 0.0, %v455
  %v457 = vpop.f32.mrb[0].mxu0
  %458 = vmatprep.mubr.bf16.mxu0 0
  %459 = vmatmul.mubr.bf16.gmra.mrb[0].mxu0 %v373
  %v460 = vpop.f32.mrb[0].mxu0
  %v461 = vadd.f32 0.0, %v460
  %v462 = vpop.f32.mrb[0].mxu0
  %v463 = vpop.f32.mrb[0].mxu0
  %v464 = vadd.f32 0.0, %v463
  %v465 = vpop.f32.mrb[0].mxu0
  %466 = vmatprep.mubr.bf16.mxu0 0
  %467 = vmatmul.mubr.bf16.gmra.mrb[0].mxu0 %v376
  %v468 = vpop.f32.mrb[0].mxu0
  %v469 = vadd.f32 0.0, %v468
  %v470 = vpop.f32.mrb[0].mxu0
  %v471 = vpop.f32.mrb[0].mxu0
  %v472 = vadd.f32 0.0, %v471
  %v473 = vpop.f32.mrb[0].mxu0
  %474 = vdwg.mxu0
  %v475 = vadd.f32 %v249, %v413
  %v476 = vadd.f32 %v250, %v416
  %v477 = vadd.f32 %v251, %v421
  %v478 = vadd.f32 %v252, %v424
  %v479 = vadd.f32 %v253, %v429
  %v480 = vadd.f32 %v254, %v432
  %v481 = vadd.f32 %v255, %v437
  %v482 = vadd.f32 %v256, %v440
  %v483 = vadd.f32 %v257, %v445
  %v484 = vadd.f32 %v258, %v448
  %v485 = vadd.f32 %v259, %v453
  %v486 = vadd.f32 %v260, %v456
  %v487 = vadd.f32 %v261, %v461
  %v488 = vadd.f32 %v262, %v464
  %v489 = vadd.f32 %v263, %v469
  %v490 = vadd.f32 %v264, %v472
  %v491 = vld [vmem:[%s5] sm:$0x1]
  %v493 = vlaneseq
  %v494 = vshrl.u32 %v493, 7
  %v495 = vsub.s32 0, %v494
  %v496 = vrot.slane %v491, %v495
  %v498 = vadd.f32 %v475, %v496
  %v499 = vadd.f32 %v476, %v496
  %v500 = vadd.f32 %v477, %v496
  %v501 = vadd.f32 %v478, %v496
  %v502 = vadd.f32 %v479, %v496
  %v503 = vadd.f32 %v480, %v496
  %v504 = vadd.f32 %v481, %v496
  %v505 = vadd.f32 %v482, %v496
  %v506 = vadd.f32 %v483, %v496
  %v507 = vadd.f32 %v484, %v496
  %v508 = vadd.f32 %v485, %v496
  %v509 = vadd.f32 %v486, %v496
  %v510 = vadd.f32 %v487, %v496
  %v511 = vadd.f32 %v488, %v496
  %v512 = vadd.f32 %v489, %v496
  %v513 = vadd.f32 %v490, %v496
  %v514 = vpack.c.bf16 %v499, %v498
  %v515 = vpack.c.bf16 %v501, %v500
  %v516 = vpack.c.bf16 %v503, %v502
  %v517 = vpack.c.bf16 %v505, %v504
  %v518 = vpack.c.bf16 %v507, %v506
  %v519 = vpack.c.bf16 %v509, %v508
  %v520 = vpack.c.bf16 %v511, %v510
  %v521 = vpack.c.bf16 %v513, %v512
  %v530 = vunpack.c.l.b16 %v514
  %v531 = vunpack.c.h.b16 %v514
  %v532 = vunpack.c.l.b16 %v515
  %v533 = vunpack.c.h.b16 %v515
  %v534 = vunpack.c.l.b16 %v516
  %v535 = vunpack.c.h.b16 %v516
  %v536 = vunpack.c.l.b16 %v517
  %v537 = vunpack.c.h.b16 %v517
  %v538 = vunpack.c.l.b16 %v518
  %v539 = vunpack.c.h.b16 %v518
  %v540 = vunpack.c.l.b16 %v519
  %v541 = vunpack.c.h.b16 %v519
  %v542 = vunpack.c.l.b16 %v520
  %v543 = vunpack.c.h.b16 %v520
  %v544 = vunpack.c.l.b16 %v521
  %v545 = vunpack.c.h.b16 %v521
  %v546 = vpack.c.b16 %v530, %v530
  %v547 = vpack.c.b16 %v531, %v531
  %v548 = vpack.c.b16 %v532, %v532
  %v549 = vpack.c.b16 %v533, %v533
  %v550 = vpack.c.b16 %v534, %v534
  %v551 = vpack.c.b16 %v535, %v535
  %v552 = vpack.c.b16 %v536, %v536
  %v553 = vpack.c.b16 %v537, %v537
  %v554 = vpack.c.b16 %v538, %v538
  %v555 = vpack.c.b16 %v539, %v539
  %v556 = vpack.c.b16 %v540, %v540
  %v557 = vpack.c.b16 %v541, %v541
  %v558 = vpack.c.b16 %v542, %v542
  %v559 = vpack.c.b16 %v543, %v543
  %v560 = vpack.c.b16 %v544, %v544
  %v561 = vpack.c.b16 %v545, %v545
  %vm578 = vcmask 125952
  %579 = vst.msk [vmem:[%s6] sm:$0xf] %vm578, %v546
  %580 = vst.msk [vmem:[%s6 + $0x4] sm:$0xf] %vm578, %v547
  %581 = vst.msk [vmem:[%s6 + $0x8] sm:$0xf] %vm578, %v548
  %582 = vst.msk [vmem:[%s6 + $0xc] sm:$0xf] %vm578, %v549
  %583 = vst.msk [vmem:[%s6 + $0x10] sm:$0xf] %vm578, %v550
  %584 = vst.msk [vmem:[%s6 + $0x14] sm:$0xf] %vm578, %v551
  %585 = vst.msk [vmem:[%s6 + $0x18] sm:$0xf] %vm578, %v552
  %586 = vst.msk [vmem:[%s6 + $0x1c] sm:$0xf] %vm578, %v553
  %587 = vst.msk [vmem:[%s6 + $0x20] sm:$0xf] %vm578, %v554
  %588 = vst.msk [vmem:[%s6 + $0x24] sm:$0xf] %vm578, %v555
  %589 = vst.msk [vmem:[%s6 + $0x28] sm:$0xf] %vm578, %v556
  %590 = vst.msk [vmem:[%s6 + $0x2c] sm:$0xf] %vm578, %v557
  %591 = vst.msk [vmem:[%s6 + $0x30] sm:$0xf] %vm578, %v558
  %592 = vst.msk [vmem:[%s6 + $0x34] sm:$0xf] %vm578, %v559
  %593 = vst.msk [vmem:[%s6 + $0x38] sm:$0xf] %vm578, %v560
  %594 = vst.msk [vmem:[%s6 + $0x3c] sm:$0xf] %vm578, %v561
  // Predicated region
  $region26: #{single_view_forward.19} parent=0 // pred_check
    _
  $region27: #{single_view_forward.19} parent=0 // pred_check_branch
    %596 = sbr.rel (0) target = $region29
  $region28: #{single_view_forward.19} parent=0 // pred_region
    _
  $region29: #{single_view_forward.19} parent=0 // pred_fallthru
    _
  // Predicated region
  $region30: #{single_view_forward.19} parent=0 // pred_check
    _
  $region31: #{single_view_forward.19} parent=0 // pred_check_branch
    %598 = sbr.rel (0) target = $region33
  $region32: #{single_view_forward.19} parent=0 // pred_region
    _
  $region33: #{single_view_forward.19} parent=0 // pred_fallthru
    _

// kernel: single_view_forward.20
$region0: #{single_view_forward.20}
  #allocation0 [shape = 'u32[]', space=smem, size = 0x4, offset = 0x4, fixed_abs, tag = 'smem constant byte address 0x4 - core index']
  #allocation1 [shape = 'u32[144,128]{1,0:T(1,128)}', space=vmem, size = 0x12000, scoped, tag = 'internal scratch']
  %s0 = inlined_call_operand.vmem [shape: bf16[512,36], index: 0, kind: input, shape index: {}]
  %s1 = inlined_call_operand.vmem [shape: bf16[36,8], index: 1, kind: input, shape index: {}]
  %s2 = inlined_call_operand.vmem [shape: f32[1,8], index: 2, kind: input, shape index: {}]
  %s3 = inlined_call_operand.vmem [shape: bf16[512,8], index: 3, kind: output, shape index: {}]
  %s4 = sld [smem:[#allocation0]]
  $region45: #{single_view_forward.20} parent=0
    _
  %s6 = ssub.s32 1, %s4
  %s7 = scalar_select 0, %s6, %s4
  loop: start=0, step=1, limit=4
  $region2: #{single_view_forward.20} parent=0 // loop_pre_header
    _
  $region3: #{single_view_forward.20} parent=0 // loop_header
    %s9 = sphi 0, %s13
    %p10 = scmp.ge.s32.totalorder %s9, 4
    %s19 = sphi 0, %s21
    %s22 = sphi 0, %s19
    %s23 = sphi 0, %s22
    %s39 = sphi 0, %s23
    %s43 = sphi 0, %s43
    %s45 = sphi 0, %s43
    %s46 = sphi 0, %s45
    %s60 = sphi 0, %s46
    %s64 = sphi 0, %s64
    %s66 = sphi 0, %s64
    %s67 = sphi 0, %s66
    %s81 = sphi 0, %s67
    %s87 = sphi 0, %s89
    %s90 = sphi 0, %s87
    %s91 = sphi 0, %s90
    %s107 = sphi 0, %s91
  $region4: #{single_view_forward.20} parent=0 // loop_header_branch
    %12 = sbr.rel (%p10) target = $region8
  $region5: #{single_view_forward.20} parent=0 // loop_body
    %s14 = ssub.s32 %s9, 1
    %s15 = ssub.s32 %s9, 2
    %s16 = sadd.s32 %s9, 1
    %s17 = ssub.s32 %s9, %s16
    %p18 = scmp.eq.s32.totalorder %s17, 0
    %s20 = sadd.s32 %s19, 1
    %s21 = scalar_select %p18, %s19, %s20
    %p24 = pneg %p18
    %p25 = scmp.eq.s32.totalorder %s9, 1
    %p26 = por %p24, %p25
    %p27 = scmp.ne.s32.totalorder %s19, %s22
    %p28 = scmp.eq.s32.totalorder %s9, 0
    %p29 = por %p27, %p28
    %p30 = scmp.ne.s32.totalorder %s19, %s22
    %p31 = scmp.eq.s32.totalorder %s14, 1
    %p32 = por %p30, %p31
    %p33 = scmp.ne.s32.totalorder %s22, %s23
    %p34 = scmp.eq.s32.totalorder %s14, 0
    %p35 = por %p33, %p34
    %p36 = scmp.ne.s32.totalorder %s22, %s23
    %p37 = scmp.eq.s32.totalorder %s15, 1
    %p38 = por %p36, %p37
    %p40 = scmp.ne.s32.totalorder %s23, %s39
    %p41 = scmp.eq.s32.totalorder %s15, 0
    %p42 = por %p40, %p41
    %s44 = sadd.s32 %s43, 1
    %p47 = scmp.eq.s32.totalorder %s9, 1
    %p48 = scmp.ne.s32.totalorder %s43, %s45
    %p49 = scmp.eq.s32.totalorder %s9, 0
    %p50 = por %p48, %p49
    %p51 = scmp.ne.s32.totalorder %s43, %s45
    %p52 = scmp.eq.s32.totalorder %s14, 1
    %p53 = por %p51, %p52
    %p54 = scmp.ne.s32.totalorder %s45, %s46
    %p55 = scmp.eq.s32.totalorder %s14, 0
    %p56 = por %p54, %p55
    %p57 = scmp.ne.s32.totalorder %s45, %s46
    %p58 = scmp.eq.s32.totalorder %s15, 1
    %p59 = por %p57, %p58
    %p61 = scmp.ne.s32.totalorder %s46, %s60
    %p62 = scmp.eq.s32.totalorder %s15, 0
    %p63 = por %p61, %p62
    %s65 = sadd.s32 %s64, 1
    %p68 = scmp.eq.s32.totalorder %s9, 1
    %p69 = scmp.ne.s32.totalorder %s64, %s66
    %p70 = scmp.eq.s32.totalorder %s9, 0
    %p71 = por %p69, %p70
    %p72 = scmp.ne.s32.totalorder %s64, %s66
    %p73 = scmp.eq.s32.totalorder %s14, 1
    %p74 = por %p72, %p73
    %p75 = scmp.ne.s32.totalorder %s66, %s67
    %p76 = scmp.eq.s32.totalorder %s14, 0
    %p77 = por %p75, %p76
    %p78 = scmp.ne.s32.totalorder %s66, %s67
    %p79 = scmp.eq.s32.totalorder %s15, 1
    %p80 = por %p78, %p79
    %p82 = scmp.ne.s32.totalorder %s67, %s81
    %p83 = scmp.eq.s32.totalorder %s15, 0
    %p84 = por %p82, %p83
    %s85 = ssub.s32 %s9, %s16
    %p86 = scmp.eq.s32.totalorder %s85, 0
    %s88 = sadd.s32 %s87, 1
    %s89 = scalar_select %p86, %s87, %s88
    %p92 = pneg %p86
    %p93 = scmp.eq.s32.totalorder %s9, 1
    %p94 = por %p92, %p93
    %p95 = scmp.ne.s32.totalorder %s87, %s90
    %p96 = scmp.eq.s32.totalorder %s9, 0
    %p97 = por %p95, %p96
    %p98 = scmp.ne.s32.totalorder %s87, %s90
    %p99 = scmp.eq.s32.totalorder %s14, 1
    %p100 = por %p98, %p99
    %p101 = scmp.ne.s32.totalorder %s90, %s91
    %p102 = scmp.eq.s32.totalorder %s14, 0
    %p103 = por %p101, %p102
    %p104 = scmp.ne.s32.totalorder %s90, %s91
    %p105 = scmp.eq.s32.totalorder %s15, 1
    %p106 = por %p104, %p105
    %p108 = scmp.ne.s32.totalorder %s91, %s107
    %p109 = scmp.eq.s32.totalorder %s15, 0
    %p110 = por %p108, %p109
    %p111 = scmp.le.s32.totalorder 1, %s9
    %p112 = scmp.lt.s32.totalorder %s9, 3
    %p113 = pnand %p111, %p112
    %p114 = pneg %p113
    // Predicated region
    $region9: #{single_view_forward.20} parent=5 // pred_check
      _
    $region10: #{single_view_forward.20} parent=5 // pred_check_branch
      %116 = sbr.rel (%p113) target = $region12
    $region11: #{single_view_forward.20} parent=5 // pred_region
      %s117 = ssub.s32 %s9, 1
      // Predicated region
      $region13: #{single_view_forward.20} parent=11 // pred_check
        %p118 = pneg %p56
      $region14: #{single_view_forward.20} parent=11 // pred_check_branch
        %120 = sbr.rel (%p118) target = $region16
      $region15: #{single_view_forward.20} parent=11 // pred_region
        _
      $region16: #{single_view_forward.20} parent=11 // pred_fallthru
        _
      // Predicated region
      $region17: #{single_view_forward.20} parent=11 // pred_check
        %p121 = pneg %p77
      $region18: #{single_view_forward.20} parent=11 // pred_check_branch
        %123 = sbr.rel (%p121) target = $region20
      $region19: #{single_view_forward.20} parent=11 // pred_region
        _
      $region20: #{single_view_forward.20} parent=11 // pred_fallthru
        _
    $region12: #{single_view_forward.20} parent=5 // pred_fallthru
      _
    %p124 = scmp.lt.s32.totalorder %s9, 2
    // Predicated region
    $region21: #{single_view_forward.20} parent=5 // pred_check
      %p125 = pneg %p124
    $region22: #{single_view_forward.20} parent=5 // pred_check_branch
      %127 = sbr.rel (%p125) target = $region24
    $region23: #{single_view_forward.20} parent=5 // pred_region
      // Predicated region
      $region25: #{single_view_forward.20} parent=23 // pred_check
        %p128 = pneg %p29
      $region26: #{single_view_forward.20} parent=23 // pred_check_branch
        %130 = sbr.rel (%p128) target = $region28
      $region27: #{single_view_forward.20} parent=23 // pred_region
        %s131 = smul.u32 32, %s9
        %p132 = scmp.lt.s32.totalorder %s131, 63
        %s133 = scalar_select %p132, %s131, 63
        %s134 = smul.addr %s133, 4
        %s135 = scalar_lea.vmem %s0, %s134
        %s136 = smul.u32 32, %s9
      $region28: #{single_view_forward.20} parent=23 // pred_fallthru
        _
    $region24: #{single_view_forward.20} parent=5 // pred_fallthru
      _
    %p137 = scmp.le.s32.totalorder 1, %s9
    %p138 = scmp.lt.s32.totalorder %s9, 3
    %p139 = pnand %p137, %p138
    %p140 = pneg %p139
    // Predicated region
    $region29: #{single_view_forward.20} parent=5 // pred_check
      _
    $region30: #{single_view_forward.20} parent=5 // pred_check_branch
      %142 = sbr.rel (%p139) target = $region32
    $region31: #{single_view_forward.20} parent=5 // pred_region
      %s143 = ssub.s32 %s9, 1
      %s144 = smul.u32 32, %s14
      %p145 = scmp.lt.s32.totalorder %s144, 63
      %s146 = scalar_select %p145, %s144, 63
      %s147 = smul.addr %s146, 4
      %s148 = scalar_lea.vmem %s0, %s147
      %p149 = pneg %p35
      %p150 = pneg %p32
      %p151 = pneg %p56
      %p152 = pneg %p53
      %p153 = pneg %p77
      %p154 = pneg %p74
      %p155 = pneg %p103
      %p156 = pneg %p100
      %s157 = smul.u32 32, %s14
      %p158 = scmp.lt.s32.totalorder %s157, 63
      %s159 = scalar_select %p158, %s157, 63
      %s160 = smul.addr %s159, 4
      %s161 = scalar_lea.vmem %s3, %s160
      %s162 = smul.u32 32, %s14
      %p163 = scmp.lt.s32.totalorder %s162, 63
      %s164 = scalar_select %p163, %s162, 63
      %s165 = smul.addr %s164, 4
      %s166 = scalar_lea.vmem %s0, %s165
      %s167 = smul.u32 32, %s14
      %s168 = smul.u32 32, %s14
      %p169 = scmp.lt.s32.totalorder %s168, 63
      %s170 = scalar_select %p169, %s168, 63
      %s171 = smul.addr %s170, 4
      %s172 = scalar_lea.vmem %s3, %s171
      %s173 = smul.u32 32, %s14
      %v175 = vld [vmem:[%s166] sm:$0xf]
      %v176 = vld [vmem:[%s166 + $0x4] sm:$0xf]
      %v177 = vld [vmem:[%s166 + $0x8] sm:$0xf]
      %v178 = vld [vmem:[%s166 + $0xc] sm:$0xf]
      %v179 = vld [vmem:[%s166 + $0x10] sm:$0xf]
      %v180 = vld [vmem:[%s166 + $0x14] sm:$0xf]
      %v181 = vld [vmem:[%s166 + $0x18] sm:$0xf]
      %v182 = vld [vmem:[%s166 + $0x1c] sm:$0xf]
      %v183 = vld [vmem:[%s166 + $0x20] sm:$0xf]
      %v184 = vld [vmem:[%s166 + $0x24] sm:$0xf]
      %v185 = vld [vmem:[%s166 + $0x28] sm:$0xf]
      %v186 = vld [vmem:[%s166 + $0x2c] sm:$0xf]
      %v187 = vld [vmem:[%s166 + $0x30] sm:$0xf]
      %v188 = vld [vmem:[%s166 + $0x34] sm:$0xf]
      %v189 = vld [vmem:[%s166 + $0x38] sm:$0xf]
      %v190 = vld [vmem:[%s166 + $0x3c] sm:$0xf]
      %v191 = vld [vmem:[%s166 + $0x40] sm:$0xf]
      %v192 = vld [vmem:[%s166 + $0x44] sm:$0xf]
      %v193 = vld [vmem:[%s166 + $0x48] sm:$0xf]
      %v194 = vld [vmem:[%s166 + $0x4c] sm:$0xf]
      %v195 = vld [vmem:[%s166 + $0x50] sm:$0xf]
      %v196 = vld [vmem:[%s166 + $0x54] sm:$0xf]
      %v197 = vld [vmem:[%s166 + $0x58] sm:$0xf]
      %v198 = vld [vmem:[%s166 + $0x5c] sm:$0xf]
      %v199 = vld [vmem:[%s166 + $0x60] sm:$0xf]
      %v200 = vld [vmem:[%s166 + $0x64] sm:$0xf]
      %v201 = vld [vmem:[%s166 + $0x68] sm:$0xf]
      %v202 = vld [vmem:[%s166 + $0x6c] sm:$0xf]
      %v203 = vld [vmem:[%s166 + $0x70] sm:$0xf]
      %v204 = vld [vmem:[%s166 + $0x74] sm:$0xf]
      %v205 = vld [vmem:[%s166 + $0x78] sm:$0xf]
      %v206 = vld [vmem:[%s166 + $0x7c] sm:$0xf]
      %v207 = vld [vmem:[%s1] sm:$0xf]
      %v208 = vld [vmem:[%s1 + $0x4] sm:$0xf]
      %v209 = vld [vmem:[%s1 + $0x8] sm:$0xf]
      %v210 = vld [vmem:[%s1 + $0xc] sm:$0xf]
      %v211 = vld [vmem:[%s1 + $0x10] sm:$0x3]
      %v212 = vld [vmem:[%s2] sm:$0x1]
      %v214 = vlaneseq
      %v215 = vshrl.u32 %v214, 7
      %v216 = vsub.s32 0, %v215
      %v217 = vrot.slane %v212, %v216
      %v251 = vunpack.c.l.b16 %v175
      %v252 = vunpack.c.l.b16 %v176
      %v253 = vunpack.c.l.b16 %v177
      %v254 = vunpack.c.l.b16 %v178
      %v255 = vunpack.c.l.b16 %v179
      %v256 = vunpack.c.l.b16 %v180
      %v257 = vunpack.c.l.b16 %v181
      %v258 = vunpack.c.l.b16 %v182
      %v259 = vunpack.c.l.b16 %v183
      %v260 = vunpack.c.l.b16 %v184
      %v261 = vunpack.c.l.b16 %v185
      %v262 = vunpack.c.l.b16 %v186
      %v263 = vunpack.c.l.b16 %v187
      %v264 = vunpack.c.l.b16 %v188
      %v265 = vunpack.c.l.b16 %v189
      %v266 = vunpack.c.l.b16 %v190
      %v267 = vunpack.c.l.b16 %v191
      %v268 = vunpack.c.l.b16 %v192
      %v269 = vunpack.c.l.b16 %v193
      %v270 = vunpack.c.l.b16 %v194
      %v271 = vunpack.c.l.b16 %v195
      %v272 = vunpack.c.l.b16 %v196
      %v273 = vunpack.c.l.b16 %v197
      %v274 = vunpack.c.l.b16 %v198
      %v275 = vunpack.c.l.b16 %v199
      %v276 = vunpack.c.l.b16 %v200
      %v277 = vunpack.c.l.b16 %v201
      %v278 = vunpack.c.l.b16 %v202
      %v279 = vunpack.c.l.b16 %v203
      %v280 = vunpack.c.l.b16 %v204
      %v281 = vunpack.c.l.b16 %v205
      %v282 = vunpack.c.l.b16 %v206
      %v283 = vpack.c.b16 %v252, %v251
      %v284 = vpack.c.b16 %v254, %v253
      %v285 = vpack.c.b16 %v256, %v255
      %v286 = vpack.c.b16 %v258, %v257
      %v287 = vpack.c.b16 %v260, %v259
      %v288 = vpack.c.b16 %v262, %v261
      %v289 = vpack.c.b16 %v264, %v263
      %v290 = vpack.c.b16 %v266, %v265
      %v291 = vpack.c.b16 %v268, %v267
      %v292 = vpack.c.b16 %v270, %v269
      %v293 = vpack.c.b16 %v272, %v271
      %v294 = vpack.c.b16 %v274, %v273
      %v295 = vpack.c.b16 %v276, %v275
      %v296 = vpack.c.b16 %v278, %v277
      %v297 = vpack.c.b16 %v280, %v279
      %v298 = vpack.c.b16 %v282, %v281
      %v304 = vunpack.c.l.b16 %v207
      %v305 = vunpack.c.l.b16 %v208
      %v306 = vunpack.c.l.b16 %v209
      %v307 = vunpack.c.l.b16 %v210
      %v308 = vunpack.c.l.b16 %v211
      %v309 = vpack.c.b16 %v305, %v304
      %v310 = vpack.c.b16 %v307, %v306
      %v311 = vpack.c.b16 %v308, %v308
      %vm314 = vcmask 293888
      %v316 = vsel %vm314, %v283, 0
      %v319 = vsel %vm314, %v284, 0
      %v322 = vsel %vm314, %v285, 0
      %v325 = vsel %vm314, %v286, 0
      %v328 = vsel %vm314, %v287, 0
      %v331 = vsel %vm314, %v288, 0
      %v334 = vsel %vm314, %v289, 0
      %v337 = vsel %vm314, %v290, 0
      %v340 = vsel %vm314, %v291, 0
      %v343 = vsel %vm314, %v292, 0
      %v346 = vsel %vm314, %v293, 0
      %v349 = vsel %vm314, %v294, 0
      %v352 = vsel %vm314, %v295, 0
      %v355 = vsel %vm314, %v296, 0
      %v358 = vsel %vm314, %v297, 0
      %v361 = vsel %vm314, %v298, 0
      %vm363 = vcmask 1041408
      %v365 = vsel %vm363, %v311, 0
      %367 = vmatprep.subr.bf16.mxu0 0
      %368 = vmatpush1.bf16.msra.mxu0 %v309
      %369 = vmatprep.subr.bf16.mxu0 0
      %370 = vmatpush1.bf16.msra.mxu0 %v310
      %371 = vmatprep.subr.bf16.mxu0 0
      %372 = vmatpush1.bf16.msra.mxu0 %v365
      %373 = vmatprep.subr.bf16.mxu0 0
      %374 = vmatpush1.bf16.msra.mxu0 0
      %375 = vmatprep.subr.bf16.mxu0 0
      %376 = vmatpush1.bf16.msra.mxu0 0
      %377 = vmatprep.subr.bf16.mxu0 0
      %378 = vmatpush1.bf16.msra.mxu0 0
      %379 = vmatprep.subr.bf16.mxu0 0
      %380 = vmatpush1.bf16.msra.mxu0 0
      %381 = vmatprep.subr.bf16.mxu0 0
      %382 = vmatpush1.bf16.msra.mxu0 0
      %383 = vmatprep.subr.bf16.mxu0 0
      %384 = vmatpush1.bf16.msra.mxu0 0
      %385 = vmatprep.subr.bf16.mxu0 0
      %386 = vmatpush1.bf16.msra.mxu0 0
      %387 = vmatprep.subr.bf16.mxu0 0
      %388 = vmatpush1.bf16.msra.mxu0 0
      %389 = vmatprep.subr.bf16.mxu0 0
      %390 = vmatpush1.bf16.msra.mxu0 0
      %391 = vmatprep.subr.bf16.mxu0 0
      %392 = vmatpush1.bf16.msra.mxu0 0
      %393 = vmatprep.subr.bf16.mxu0 0
      %394 = vmatpush1.bf16.msra.mxu0 0
      %395 = vmatprep.subr.bf16.mxu0 0
      %396 = vmatpush1.bf16.msra.mxu0 0
      %397 = vmatprep.subr.bf16.mxu0 0
      %398 = vmatpush1.bf16.msra.mxu0 0
      %399 = vmatprep.mubr.bf16.mxu0 0
      %400 = vmatmul.mubr.bf16.gmra.mrb[0].mxu0 %v316
      %v401 = vpop.f32.mrb[0].mxu0
      %v402 = vadd.f32 %v217, %v401
      %v403 = vpop.f32.mrb[0].mxu0
      %v404 = vpop.f32.mrb[0].mxu0
      %v405 = vadd.f32 %v217, %v404
      %v406 = vpop.f32.mrb[0].mxu0
      %407 = vmatprep.mubr.bf16.mxu0 0
      %408 = vmatmul.mubr.bf16.gmra.mrb[0].mxu0 %v319
      %v409 = vpop.f32.mrb[0].mxu0
      %v410 = vadd.f32 %v217, %v409
      %v411 = vpop.f32.mrb[0].mxu0
      %v412 = vpop.f32.mrb[0].mxu0
      %v413 = vadd.f32 %v217, %v412
      %v414 = vpop.f32.mrb[0].mxu0
      %415 = vmatprep.mubr.bf16.mxu0 0
      %416 = vmatmul.mubr.bf16.gmra.mrb[0].mxu0 %v322
      %v417 = vpop.f32.mrb[0].mxu0
      %v418 = vadd.f32 %v217, %v417
      %v419 = vpop.f32.mrb[0].mxu0
      %v420 = vpop.f32.mrb[0].mxu0
      %v421 = vadd.f32 %v217, %v420
      %v422 = vpop.f32.mrb[0].mxu0
      %423 = vmatprep.mubr.bf16.mxu0 0
      %424 = vmatmul.mubr.bf16.gmra.mrb[0].mxu0 %v325
      %v425 = vpop.f32.mrb[0].mxu0
      %v426 = vadd.f32 %v217, %v425
      %v427 = vpop.f32.mrb[0].mxu0
      %v428 = vpop.f32.mrb[0].mxu0
      %v429 = vadd.f32 %v217, %v428
      %v430 = vpop.f32.mrb[0].mxu0
      %431 = vmatprep.mubr.bf16.mxu0 0
      %432 = vmatmul.mubr.bf16.gmra.mrb[0].mxu0 %v328
      %v433 = vpop.f32.mrb[0].mxu0
      %v434 = vadd.f32 %v217, %v433
      %v435 = vpop.f32.mrb[0].mxu0
      %v436 = vpop.f32.mrb[0].mxu0
      %v437 = vadd.f32 %v217, %v436
      %v438 = vpop.f32.mrb[0].mxu0
      %439 = vmatprep.mubr.bf16.mxu0 0
      %440 = vmatmul.mubr.bf16.gmra.mrb[0].mxu0 %v331
      %v441 = vpop.f32.mrb[0].mxu0
      %v442 = vadd.f32 %v217, %v441
      %v443 = vpop.f32.mrb[0].mxu0
      %v444 = vpop.f32.mrb[0].mxu0
      %v445 = vadd.f32 %v217, %v444
      %v446 = vpop.f32.mrb[0].mxu0
      %447 = vmatprep.mubr.bf16.mxu0 0
      %448 = vmatmul.mubr.bf16.gmra.mrb[0].mxu0 %v334
      %v449 = vpop.f32.mrb[0].mxu0
      %v450 = vadd.f32 %v217, %v449
      %v451 = vpop.f32.mrb[0].mxu0
      %v452 = vpop.f32.mrb[0].mxu0
      %v453 = vadd.f32 %v217, %v452
      %v454 = vpop.f32.mrb[0].mxu0
      %455 = vmatprep.mubr.bf16.mxu0 0
      %456 = vmatmul.mubr.bf16.gmra.mrb[0].mxu0 %v337
      %v457 = vpop.f32.mrb[0].mxu0
      %v458 = vadd.f32 %v217, %v457
      %v459 = vpop.f32.mrb[0].mxu0
      %v460 = vpop.f32.mrb[0].mxu0
      %v461 = vadd.f32 %v217, %v460
      %v462 = vpop.f32.mrb[0].mxu0
      %463 = vmatprep.mubr.bf16.mxu0 0
      %464 = vmatmul.mubr.bf16.gmra.mrb[0].mxu0 %v340
      %v465 = vpop.f32.mrb[0].mxu0
      %v466 = vadd.f32 %v217, %v465
      %v467 = vpop.f32.mrb[0].mxu0
      %v468 = vpop.f32.mrb[0].mxu0
      %v469 = vadd.f32 %v217, %v468
      %v470 = vpop.f32.mrb[0].mxu0
      %471 = vmatprep.mubr.bf16.mxu0 0
      %472 = vmatmul.mubr.bf16.gmra.mrb[0].mxu0 %v343
      %v473 = vpop.f32.mrb[0].mxu0
      %v474 = vadd.f32 %v217, %v473
      %v475 = vpop.f32.mrb[0].mxu0
      %v476 = vpop.f32.mrb[0].mxu0
      %v477 = vadd.f32 %v217, %v476
      %v478 = vpop.f32.mrb[0].mxu0
      %479 = vmatprep.mubr.bf16.mxu0 0
      %480 = vmatmul.mubr.bf16.gmra.mrb[0].mxu0 %v346
      %v481 = vpop.f32.mrb[0].mxu0
      %v482 = vadd.f32 %v217, %v481
      %v483 = vpop.f32.mrb[0].mxu0
      %v484 = vpop.f32.mrb[0].mxu0
      %v485 = vadd.f32 %v217, %v484
      %v486 = vpop.f32.mrb[0].mxu0
      %487 = vmatprep.mubr.bf16.mxu0 0
      %488 = vmatmul.mubr.bf16.gmra.mrb[0].mxu0 %v349
      %v489 = vpop.f32.mrb[0].mxu0
      %v490 = vadd.f32 %v217, %v489
      %v491 = vpop.f32.mrb[0].mxu0
      %v492 = vpop.f32.mrb[0].mxu0
      %v493 = vadd.f32 %v217, %v492
      %v494 = vpop.f32.mrb[0].mxu0
      %495 = vmatprep.mubr.bf16.mxu0 0
      %496 = vmatmul.mubr.bf16.gmra.mrb[0].mxu0 %v352
      %v497 = vpop.f32.mrb[0].mxu0
      %v498 = vadd.f32 %v217, %v497
      %v499 = vpop.f32.mrb[0].mxu0
      %v500 = vpop.f32.mrb[0].mxu0
      %v501 = vadd.f32 %v217, %v500
      %v502 = vpop.f32.mrb[0].mxu0
      %503 = vmatprep.mubr.bf16.mxu0 0
      %504 = vmatmul.mubr.bf16.gmra.mrb[0].mxu0 %v355
      %v505 = vpop.f32.mrb[0].mxu0
      %v506 = vadd.f32 %v217, %v505
      %v507 = vpop.f32.mrb[0].mxu0
      %v508 = vpop.f32.mrb[0].mxu0
      %v509 = vadd.f32 %v217, %v508
      %v510 = vpop.f32.mrb[0].mxu0
      %511 = vmatprep.mubr.bf16.mxu0 0
      %512 = vmatmul.mubr.bf16.gmra.mrb[0].mxu0 %v358
      %v513 = vpop.f32.mrb[0].mxu0
      %v514 = vadd.f32 %v217, %v513
      %v515 = vpop.f32.mrb[0].mxu0
      %v516 = vpop.f32.mrb[0].mxu0
      %v517 = vadd.f32 %v217, %v516
      %v518 = vpop.f32.mrb[0].mxu0
      %519 = vmatprep.mubr.bf16.mxu0 0
      %520 = vmatmul.mubr.bf16.gmra.mrb[0].mxu0 %v361
      %v521 = vpop.f32.mrb[0].mxu0
      %v522 = vadd.f32 %v217, %v521
      %v523 = vpop.f32.mrb[0].mxu0
      %v524 = vpop.f32.mrb[0].mxu0
      %v525 = vadd.f32 %v217, %v524
      %v526 = vpop.f32.mrb[0].mxu0
      %527 = vdwg.mxu0
      %v528 = vmax.f32 %v402, 0.0
      %v529 = vmax.f32 %v405, 0.0
      %v530 = vmax.f32 %v410, 0.0
      %v531 = vmax.f32 %v413, 0.0
      %v532 = vmax.f32 %v418, 0.0
      %v533 = vmax.f32 %v421, 0.0
      %v534 = vmax.f32 %v426, 0.0
      %v535 = vmax.f32 %v429, 0.0
      %v536 = vmax.f32 %v434, 0.0
      %v537 = vmax.f32 %v437, 0.0
      %v538 = vmax.f32 %v442, 0.0
      %v539 = vmax.f32 %v445, 0.0
      %v540 = vmax.f32 %v450, 0.0
      %v541 = vmax.f32 %v453, 0.0
      %v542 = vmax.f32 %v458, 0.0
      %v543 = vmax.f32 %v461, 0.0
      %v544 = vmax.f32 %v466, 0.0
      %v545 = vmax.f32 %v469, 0.0
      %v546 = vmax.f32 %v474, 0.0
      %v547 = vmax.f32 %v477, 0.0
      %v548 = vmax.f32 %v482, 0.0
      %v549 = vmax.f32 %v485, 0.0
      %v550 = vmax.f32 %v490, 0.0
      %v551 = vmax.f32 %v493, 0.0
      %v552 = vmax.f32 %v498, 0.0
      %v553 = vmax.f32 %v501, 0.0
      %v554 = vmax.f32 %v506, 0.0
      %v555 = vmax.f32 %v509, 0.0
      %v556 = vmax.f32 %v514, 0.0
      %v557 = vmax.f32 %v517, 0.0
      %v558 = vmax.f32 %v522, 0.0
      %v559 = vmax.f32 %v525, 0.0
      %v560 = vpack.c.bf16 %v529, %v528
      %v561 = vpack.c.bf16 %v531, %v530
      %v562 = vpack.c.bf16 %v533, %v532
      %v563 = vpack.c.bf16 %v535, %v534
      %v564 = vpack.c.bf16 %v537, %v536
      %v565 = vpack.c.bf16 %v539, %v538
      %v566 = vpack.c.bf16 %v541, %v540
      %v567 = vpack.c.bf16 %v543, %v542
      %v568 = vpack.c.bf16 %v545, %v544
      %v569 = vpack.c.bf16 %v547, %v546
      %v570 = vpack.c.bf16 %v549, %v548
      %v571 = vpack.c.bf16 %v551, %v550
      %v572 = vpack.c.bf16 %v553, %v552
      %v573 = vpack.c.bf16 %v555, %v554
      %v574 = vpack.c.bf16 %v557, %v556
      %v575 = vpack.c.bf16 %v559, %v558
      %v592 = vunpack.c.l.b16 %v560
      %v593 = vunpack.c.h.b16 %v560
      %v594 = vunpack.c.l.b16 %v561
      %v595 = vunpack.c.h.b16 %v561
      %v596 = vunpack.c.l.b16 %v562
      %v597 = vunpack.c.h.b16 %v562
      %v598 = vunpack.c.l.b16 %v563
      %v599 = vunpack.c.h.b16 %v563
      %v600 = vunpack.c.l.b16 %v564
      %v601 = vunpack.c.h.b16 %v564
      %v602 = vunpack.c.l.b16 %v565
      %v603 = vunpack.c.h.b16 %v565
      %v604 = vunpack.c.l.b16 %v566
      %v605 = vunpack.c.h.b16 %v566
      %v606 = vunpack.c.l.b16 %v567
      %v607 = vunpack.c.h.b16 %v567
      %v608 = vunpack.c.l.b16 %v568
      %v609 = vunpack.c.h.b16 %v568
      %v610 = vunpack.c.l.b16 %v569
      %v611 = vunpack.c.h.b16 %v569
      %v612 = vunpack.c.l.b16 %v570
      %v613 = vunpack.c.h.b16 %v570
      %v614 = vunpack.c.l.b16 %v571
      %v615 = vunpack.c.h.b16 %v571
      %v616 = vunpack.c.l.b16 %v572
      %v617 = vunpack.c.h.b16 %v572
      %v618 = vunpack.c.l.b16 %v573
      %v619 = vunpack.c.h.b16 %v573
      %v620 = vunpack.c.l.b16 %v574
      %v621 = vunpack.c.h.b16 %v574
      %v622 = vunpack.c.l.b16 %v575
      %v623 = vunpack.c.h.b16 %v575
      %v624 = vpack.c.b16 %v592, %v592
      %v625 = vpack.c.b16 %v593, %v593
      %v626 = vpack.c.b16 %v594, %v594
      %v627 = vpack.c.b16 %v595, %v595
      %v628 = vpack.c.b16 %v596, %v596
      %v629 = vpack.c.b16 %v597, %v597
      %v630 = vpack.c.b16 %v598, %v598
      %v631 = vpack.c.b16 %v599, %v599
      %v632 = vpack.c.b16 %v600, %v600
      %v633 = vpack.c.b16 %v601, %v601
      %v634 = vpack.c.b16 %v602, %v602
      %v635 = vpack.c.b16 %v603, %v603
      %v636 = vpack.c.b16 %v604, %v604
      %v637 = vpack.c.b16 %v605, %v605
      %v638 = vpack.c.b16 %v606, %v606
      %v639 = vpack.c.b16 %v607, %v607
      %v640 = vpack.c.b16 %v608, %v608
      %v641 = vpack.c.b16 %v609, %v609
      %v642 = vpack.c.b16 %v610, %v610
      %v643 = vpack.c.b16 %v611, %v611
      %v644 = vpack.c.b16 %v612, %v612
      %v645 = vpack.c.b16 %v613, %v613
      %v646 = vpack.c.b16 %v614, %v614
      %v647 = vpack.c.b16 %v615, %v615
      %v648 = vpack.c.b16 %v616, %v616
      %v649 = vpack.c.b16 %v617, %v617
      %v650 = vpack.c.b16 %v618, %v618
      %v651 = vpack.c.b16 %v619, %v619
      %v652 = vpack.c.b16 %v620, %v620
      %v653 = vpack.c.b16 %v621, %v621
      %v654 = vpack.c.b16 %v622, %v622
      %v655 = vpack.c.b16 %v623, %v623
      %vm688 = vcmask 60416
      %689 = vst.msk [vmem:[%s172] sm:$0xf] %vm688, %v624
      %690 = vst.msk [vmem:[%s172 + $0x4] sm:$0xf] %vm688, %v625
      %691 = vst.msk [vmem:[%s172 + $0x8] sm:$0xf] %vm688, %v626
      %692 = vst.msk [vmem:[%s172 + $0xc] sm:$0xf] %vm688, %v627
      %693 = vst.msk [vmem:[%s172 + $0x10] sm:$0xf] %vm688, %v628
      %694 = vst.msk [vmem:[%s172 + $0x14] sm:$0xf] %vm688, %v629
      %695 = vst.msk [vmem:[%s172 + $0x18] sm:$0xf] %vm688, %v630
      %696 = vst.msk [vmem:[%s172 + $0x1c] sm:$0xf] %vm688, %v631
      %697 = vst.msk [vmem:[%s172 + $0x20] sm:$0xf] %vm688, %v632
      %698 = vst.msk [vmem:[%s172 + $0x24] sm:$0xf] %vm688, %v633
      %699 = vst.msk [vmem:[%s172 + $0x28] sm:$0xf] %vm688, %v634
      %700 = vst.msk [vmem:[%s172 + $0x2c] sm:$0xf] %vm688, %v635
      %701 = vst.msk [vmem:[%s172 + $0x30] sm:$0xf] %vm688, %v636
      %702 = vst.msk [vmem:[%s172 + $0x34] sm:$0xf] %vm688, %v637
      %703 = vst.msk [vmem:[%s172 + $0x38] sm:$0xf] %vm688, %v638
      %704 = vst.msk [vmem:[%s172 + $0x3c] sm:$0xf] %vm688, %v639
      %705 = vst.msk [vmem:[%s172 + $0x40] sm:$0xf] %vm688, %v640
      %706 = vst.msk [vmem:[%s172 + $0x44] sm:$0xf] %vm688, %v641
      %707 = vst.msk [vmem:[%s172 + $0x48] sm:$0xf] %vm688, %v642
      %708 = vst.msk [vmem:[%s172 + $0x4c] sm:$0xf] %vm688, %v643
      %709 = vst.msk [vmem:[%s172 + $0x50] sm:$0xf] %vm688, %v644
      %710 = vst.msk [vmem:[%s172 + $0x54] sm:$0xf] %vm688, %v645
      %711 = vst.msk [vmem:[%s172 + $0x58] sm:$0xf] %vm688, %v646
      %712 = vst.msk [vmem:[%s172 + $0x5c] sm:$0xf] %vm688, %v647
      %713 = vst.msk [vmem:[%s172 + $0x60] sm:$0xf] %vm688, %v648
      %714 = vst.msk [vmem:[%s172 + $0x64] sm:$0xf] %vm688, %v649
      %715 = vst.msk [vmem:[%s172 + $0x68] sm:$0xf] %vm688, %v650
      %716 = vst.msk [vmem:[%s172 + $0x6c] sm:$0xf] %vm688, %v651
      %717 = vst.msk [vmem:[%s172 + $0x70] sm:$0xf] %vm688, %v652
      %718 = vst.msk [vmem:[%s172 + $0x74] sm:$0xf] %vm688, %v653
      %719 = vst.msk [vmem:[%s172 + $0x78] sm:$0xf] %vm688, %v654
      %720 = vst.msk [vmem:[%s172 + $0x7c] sm:$0xf] %vm688, %v655
      %s721 = smul.u32 32, %s14
      %p722 = scmp.lt.s32.totalorder %s721, 63
      %s723 = scalar_select %p722, %s721, 63
      %s724 = smul.addr %s723, 4
      %s725 = scalar_lea.vmem %s3, %s724
      // Predicated region
      $region33: #{single_view_forward.20} parent=31 // pred_check
        %p726 = pneg %p100
      $region34: #{single_view_forward.20} parent=31 // pred_check_branch
        %728 = sbr.rel (%p726) target = $region36
      $region35: #{single_view_forward.20} parent=31 // pred_region
        %s729 = smul.u32 32, %s14
      $region36: #{single_view_forward.20} parent=31 // pred_fallthru
        _
    $region32: #{single_view_forward.20} parent=5 // pred_fallthru
      _
    %p730 = scmp.le.s32.totalorder 2, %s9
    // Predicated region
    $region37: #{single_view_forward.20} parent=5 // pred_check
      %p731 = pneg %p730
    $region38: #{single_view_forward.20} parent=5 // pred_check_branch
      %733 = sbr.rel (%p731) target = $region40
    $region39: #{single_view_forward.20} parent=5 // pred_region
      %s734 = ssub.s32 %s9, 2
      // Predicated region
      $region41: #{single_view_forward.20} parent=39 // pred_check
        %p735 = pneg %p106
      $region42: #{single_view_forward.20} parent=39 // pred_check_branch
        %737 = sbr.rel (%p735) target = $region44
      $region43: #{single_view_forward.20} parent=39 // pred_region
        %s738 = smul.u32 32, %s15
        %p739 = scmp.lt.s32.totalorder %s738, 63
        %s740 = scalar_select %p739, %s738, 63
        %s741 = smul.addr %s740, 4
        %s742 = scalar_lea.vmem %s3, %s741
      $region44: #{single_view_forward.20} parent=39 // pred_fallthru
        _
    $region40: #{single_view_forward.20} parent=5 // pred_fallthru
      _
  $region6: #{single_view_forward.20} parent=0 // loop_footer
    %s13 = sadd.s32 1, %s9
  $region7: #{single_view_forward.20} parent=0 // loop_footer_branch
    %8 = sbr.rel target = $region3
  $region8: #{single_view_forward.20} parent=0 // loop_exit
    _

// kernel: single_view_forward.21
$region0: #{single_view_forward.21}
  #allocation0 [shape = 'u32[]', space=smem, size = 0x4, offset = 0x4, fixed_abs, tag = 'smem constant byte address 0x4 - core index']
  #allocation1 [shape = 'u32[144,128]{1,0:T(1,128)}', space=vmem, size = 0x12000, scoped, tag = 'internal scratch']
  %s0 = inlined_call_operand.vmem [shape: bf16[2048,2], index: 0, kind: input, shape index: {}]
  %s1 = inlined_call_operand.vmem [shape: bf16[2,3], index: 1, kind: input, shape index: {}]
  %s2 = inlined_call_operand.vmem [shape: f32[1,3], index: 2, kind: input, shape index: {}]
  %s3 = inlined_call_operand.vmem [shape: f32[2048,3], index: 3, kind: output, shape index: {}]
  %s4 = sld [smem:[#allocation0]]
  $region45: #{single_view_forward.21} parent=0
    _
  %s6 = ssub.s32 1, %s4
  %s7 = scalar_select 0, %s6, %s4
  loop: start=0, step=1, limit=10
  $region2: #{single_view_forward.21} parent=0 // loop_pre_header
    _
  $region3: #{single_view_forward.21} parent=0 // loop_header
    %s9 = sphi 0, %s13
    %p10 = scmp.ge.s32.totalorder %s9, 10
    %s19 = sphi 0, %s21
    %s22 = sphi 0, %s19
    %s23 = sphi 0, %s22
    %s39 = sphi 0, %s23
    %s43 = sphi 0, %s43
    %s45 = sphi 0, %s43
    %s46 = sphi 0, %s45
    %s60 = sphi 0, %s46
    %s64 = sphi 0, %s64
    %s66 = sphi 0, %s64
    %s67 = sphi 0, %s66
    %s81 = sphi 0, %s67
    %s87 = sphi 0, %s89
    %s90 = sphi 0, %s87
    %s91 = sphi 0, %s90
    %s107 = sphi 0, %s91
  $region4: #{single_view_forward.21} parent=0 // loop_header_branch
    %12 = sbr.rel (%p10) target = $region8
  $region5: #{single_view_forward.21} parent=0 // loop_body
    %s14 = ssub.s32 %s9, 1
    %s15 = ssub.s32 %s9, 2
    %s16 = sadd.s32 %s9, 1
    %s17 = ssub.s32 %s9, %s16
    %p18 = scmp.eq.s32.totalorder %s17, 0
    %s20 = sadd.s32 %s19, 1
    %s21 = scalar_select %p18, %s19, %s20
    %p24 = pneg %p18
    %p25 = scmp.eq.s32.totalorder %s9, 7
    %p26 = por %p24, %p25
    %p27 = scmp.ne.s32.totalorder %s19, %s22
    %p28 = scmp.eq.s32.totalorder %s9, 0
    %p29 = por %p27, %p28
    %p30 = scmp.ne.s32.totalorder %s19, %s22
    %p31 = scmp.eq.s32.totalorder %s14, 7
    %p32 = por %p30, %p31
    %p33 = scmp.ne.s32.totalorder %s22, %s23
    %p34 = scmp.eq.s32.totalorder %s14, 0
    %p35 = por %p33, %p34
    %p36 = scmp.ne.s32.totalorder %s22, %s23
    %p37 = scmp.eq.s32.totalorder %s15, 7
    %p38 = por %p36, %p37
    %p40 = scmp.ne.s32.totalorder %s23, %s39
    %p41 = scmp.eq.s32.totalorder %s15, 0
    %p42 = por %p40, %p41
    %s44 = sadd.s32 %s43, 1
    %p47 = scmp.eq.s32.totalorder %s9, 7
    %p48 = scmp.ne.s32.totalorder %s43, %s45
    %p49 = scmp.eq.s32.totalorder %s9, 0
    %p50 = por %p48, %p49
    %p51 = scmp.ne.s32.totalorder %s43, %s45
    %p52 = scmp.eq.s32.totalorder %s14, 7
    %p53 = por %p51, %p52
    %p54 = scmp.ne.s32.totalorder %s45, %s46
    %p55 = scmp.eq.s32.totalorder %s14, 0
    %p56 = por %p54, %p55
    %p57 = scmp.ne.s32.totalorder %s45, %s46
    %p58 = scmp.eq.s32.totalorder %s15, 7
    %p59 = por %p57, %p58
    %p61 = scmp.ne.s32.totalorder %s46, %s60
    %p62 = scmp.eq.s32.totalorder %s15, 0
    %p63 = por %p61, %p62
    %s65 = sadd.s32 %s64, 1
    %p68 = scmp.eq.s32.totalorder %s9, 7
    %p69 = scmp.ne.s32.totalorder %s64, %s66
    %p70 = scmp.eq.s32.totalorder %s9, 0
    %p71 = por %p69, %p70
    %p72 = scmp.ne.s32.totalorder %s64, %s66
    %p73 = scmp.eq.s32.totalorder %s14, 7
    %p74 = por %p72, %p73
    %p75 = scmp.ne.s32.totalorder %s66, %s67
    %p76 = scmp.eq.s32.totalorder %s14, 0
    %p77 = por %p75, %p76
    %p78 = scmp.ne.s32.totalorder %s66, %s67
    %p79 = scmp.eq.s32.totalorder %s15, 7
    %p80 = por %p78, %p79
    %p82 = scmp.ne.s32.totalorder %s67, %s81
    %p83 = scmp.eq.s32.totalorder %s15, 0
    %p84 = por %p82, %p83
    %s85 = ssub.s32 %s9, %s16
    %p86 = scmp.eq.s32.totalorder %s85, 0
    %s88 = sadd.s32 %s87, 1
    %s89 = scalar_select %p86, %s87, %s88
    %p92 = pneg %p86
    %p93 = scmp.eq.s32.totalorder %s9, 7
    %p94 = por %p92, %p93
    %p95 = scmp.ne.s32.totalorder %s87, %s90
    %p96 = scmp.eq.s32.totalorder %s9, 0
    %p97 = por %p95, %p96
    %p98 = scmp.ne.s32.totalorder %s87, %s90
    %p99 = scmp.eq.s32.totalorder %s14, 7
    %p100 = por %p98, %p99
    %p101 = scmp.ne.s32.totalorder %s90, %s91
    %p102 = scmp.eq.s32.totalorder %s14, 0
    %p103 = por %p101, %p102
    %p104 = scmp.ne.s32.totalorder %s90, %s91
    %p105 = scmp.eq.s32.totalorder %s15, 7
    %p106 = por %p104, %p105
    %p108 = scmp.ne.s32.totalorder %s91, %s107
    %p109 = scmp.eq.s32.totalorder %s15, 0
    %p110 = por %p108, %p109
    %p111 = scmp.le.s32.totalorder 1, %s9
    %p112 = scmp.lt.s32.totalorder %s9, 9
    %p113 = pnand %p111, %p112
    %p114 = pneg %p113
    // Predicated region
    $region9: #{single_view_forward.21} parent=5 // pred_check
      _
    $region10: #{single_view_forward.21} parent=5 // pred_check_branch
      %116 = sbr.rel (%p113) target = $region12
    $region11: #{single_view_forward.21} parent=5 // pred_region
      %s117 = ssub.s32 %s9, 1
      // Predicated region
      $region13: #{single_view_forward.21} parent=11 // pred_check
        %p118 = pneg %p56
      $region14: #{single_view_forward.21} parent=11 // pred_check_branch
        %120 = sbr.rel (%p118) target = $region16
      $region15: #{single_view_forward.21} parent=11 // pred_region
        _
      $region16: #{single_view_forward.21} parent=11 // pred_fallthru
        _
      // Predicated region
      $region17: #{single_view_forward.21} parent=11 // pred_check
        %p121 = pneg %p77
      $region18: #{single_view_forward.21} parent=11 // pred_check_branch
        %123 = sbr.rel (%p121) target = $region20
      $region19: #{single_view_forward.21} parent=11 // pred_region
        _
      $region20: #{single_view_forward.21} parent=11 // pred_fallthru
        _
    $region12: #{single_view_forward.21} parent=5 // pred_fallthru
      _
    %p124 = scmp.lt.s32.totalorder %s9, 8
    // Predicated region
    $region21: #{single_view_forward.21} parent=5 // pred_check
      %p125 = pneg %p124
    $region22: #{single_view_forward.21} parent=5 // pred_check_branch
      %127 = sbr.rel (%p125) target = $region24
    $region23: #{single_view_forward.21} parent=5 // pred_region
      // Predicated region
      $region25: #{single_view_forward.21} parent=23 // pred_check
        %p128 = pneg %p29
      $region26: #{single_view_forward.21} parent=23 // pred_check_branch
        %130 = sbr.rel (%p128) target = $region28
      $region27: #{single_view_forward.21} parent=23 // pred_region
        %s131 = smul.u32 32, %s9
        %p132 = scmp.lt.s32.totalorder %s131, 255
        %s133 = scalar_select %p132, %s131, 255
        %s134 = smul.addr %s133, 4
        %s135 = scalar_lea.vmem %s0, %s134
        %s136 = smul.u32 32, %s9
      $region28: #{single_view_forward.21} parent=23 // pred_fallthru
        _
    $region24: #{single_view_forward.21} parent=5 // pred_fallthru
      _
    %p137 = scmp.le.s32.totalorder 1, %s9
    %p138 = scmp.lt.s32.totalorder %s9, 9
    %p139 = pnand %p137, %p138
    %p140 = pneg %p139
    // Predicated region
    $region29: #{single_view_forward.21} parent=5 // pred_check
      _
    $region30: #{single_view_forward.21} parent=5 // pred_check_branch
      %142 = sbr.rel (%p139) target = $region32
    $region31: #{single_view_forward.21} parent=5 // pred_region
      %s143 = ssub.s32 %s9, 1
      %s144 = smul.u32 32, %s14
      %p145 = scmp.lt.s32.totalorder %s144, 255
      %s146 = scalar_select %p145, %s144, 255
      %s147 = smul.addr %s146, 4
      %s148 = scalar_lea.vmem %s0, %s147
      %p149 = pneg %p35
      %p150 = pneg %p32
      %p151 = pneg %p56
      %p152 = pneg %p53
      %p153 = pneg %p77
      %p154 = pneg %p74
      %p155 = pneg %p103
      %p156 = pneg %p100
      %s157 = smul.u32 32, %s14
      %p158 = scmp.lt.s32.totalorder %s157, 255
      %s159 = scalar_select %p158, %s157, 255
      %s160 = smul.addr %s159, 8
      %s161 = scalar_lea.vmem %s3, %s160
      %s162 = smul.u32 32, %s14
      %p163 = scmp.lt.s32.totalorder %s162, 255
      %s164 = scalar_select %p163, %s162, 255
      %s165 = smul.addr %s164, 4
      %s166 = scalar_lea.vmem %s0, %s165
      %s167 = smul.u32 32, %s14
      %s168 = smul.u32 32, %s14
      %p169 = scmp.lt.s32.totalorder %s168, 255
      %s170 = scalar_select %p169, %s168, 255
      %s171 = smul.addr %s170, 8
      %s172 = scalar_lea.vmem %s3, %s171
      %s173 = smul.u32 32, %s14
      %v175 = vld [vmem:[%s166] sm:$0xf]
      %v176 = vld [vmem:[%s166 + $0x4] sm:$0xf]
      %v177 = vld [vmem:[%s166 + $0x8] sm:$0xf]
      %v178 = vld [vmem:[%s166 + $0xc] sm:$0xf]
      %v179 = vld [vmem:[%s166 + $0x10] sm:$0xf]
      %v180 = vld [vmem:[%s166 + $0x14] sm:$0xf]
      %v181 = vld [vmem:[%s166 + $0x18] sm:$0xf]
      %v182 = vld [vmem:[%s166 + $0x1c] sm:$0xf]
      %v183 = vld [vmem:[%s166 + $0x20] sm:$0xf]
      %v184 = vld [vmem:[%s166 + $0x24] sm:$0xf]
      %v185 = vld [vmem:[%s166 + $0x28] sm:$0xf]
      %v186 = vld [vmem:[%s166 + $0x2c] sm:$0xf]
      %v187 = vld [vmem:[%s166 + $0x30] sm:$0xf]
      %v188 = vld [vmem:[%s166 + $0x34] sm:$0xf]
      %v189 = vld [vmem:[%s166 + $0x38] sm:$0xf]
      %v190 = vld [vmem:[%s166 + $0x3c] sm:$0xf]
      %v191 = vld [vmem:[%s166 + $0x40] sm:$0xf]
      %v192 = vld [vmem:[%s166 + $0x44] sm:$0xf]
      %v193 = vld [vmem:[%s166 + $0x48] sm:$0xf]
      %v194 = vld [vmem:[%s166 + $0x4c] sm:$0xf]
      %v195 = vld [vmem:[%s166 + $0x50] sm:$0xf]
      %v196 = vld [vmem:[%s166 + $0x54] sm:$0xf]
      %v197 = vld [vmem:[%s166 + $0x58] sm:$0xf]
      %v198 = vld [vmem:[%s166 + $0x5c] sm:$0xf]
      %v199 = vld [vmem:[%s166 + $0x60] sm:$0xf]
      %v200 = vld [vmem:[%s166 + $0x64] sm:$0xf]
      %v201 = vld [vmem:[%s166 + $0x68] sm:$0xf]
      %v202 = vld [vmem:[%s166 + $0x6c] sm:$0xf]
      %v203 = vld [vmem:[%s166 + $0x70] sm:$0xf]
      %v204 = vld [vmem:[%s166 + $0x74] sm:$0xf]
      %v205 = vld [vmem:[%s166 + $0x78] sm:$0xf]
      %v206 = vld [vmem:[%s166 + $0x7c] sm:$0xf]
      %v207 = vld [vmem:[%s1] sm:$0x1]
      %v208 = vld [vmem:[%s2] sm:$0x1]
      %v210 = vlaneseq
      %v211 = vshrl.u32 %v210, 7
      %v212 = vsub.s32 0, %v211
      %v213 = vrot.slane %v208, %v212
      %v247 = vunpack.c.l.b16 %v175
      %v248 = vunpack.c.l.b16 %v176
      %v249 = vunpack.c.l.b16 %v177
      %v250 = vunpack.c.l.b16 %v178
      %v251 = vunpack.c.l.b16 %v179
      %v252 = vunpack.c.l.b16 %v180
      %v253 = vunpack.c.l.b16 %v181
      %v254 = vunpack.c.l.b16 %v182
      %v255 = vunpack.c.l.b16 %v183
      %v256 = vunpack.c.l.b16 %v184
      %v257 = vunpack.c.l.b16 %v185
      %v258 = vunpack.c.l.b16 %v186
      %v259 = vunpack.c.l.b16 %v187
      %v260 = vunpack.c.l.b16 %v188
      %v261 = vunpack.c.l.b16 %v189
      %v262 = vunpack.c.l.b16 %v190
      %v263 = vunpack.c.l.b16 %v191
      %v264 = vunpack.c.l.b16 %v192
      %v265 = vunpack.c.l.b16 %v193
      %v266 = vunpack.c.l.b16 %v194
      %v267 = vunpack.c.l.b16 %v195
      %v268 = vunpack.c.l.b16 %v196
      %v269 = vunpack.c.l.b16 %v197
      %v270 = vunpack.c.l.b16 %v198
      %v271 = vunpack.c.l.b16 %v199
      %v272 = vunpack.c.l.b16 %v200
      %v273 = vunpack.c.l.b16 %v201
      %v274 = vunpack.c.l.b16 %v202
      %v275 = vunpack.c.l.b16 %v203
      %v276 = vunpack.c.l.b16 %v204
      %v277 = vunpack.c.l.b16 %v205
      %v278 = vunpack.c.l.b16 %v206
      %v279 = vpack.c.b16 %v248, %v247
      %v280 = vpack.c.b16 %v250, %v249
      %v281 = vpack.c.b16 %v252, %v251
      %v282 = vpack.c.b16 %v254, %v253
      %v283 = vpack.c.b16 %v256, %v255
      %v284 = vpack.c.b16 %v258, %v257
      %v285 = vpack.c.b16 %v260, %v259
      %v286 = vpack.c.b16 %v262, %v261
      %v287 = vpack.c.b16 %v264, %v263
      %v288 = vpack.c.b16 %v266, %v265
      %v289 = vpack.c.b16 %v268, %v267
      %v290 = vpack.c.b16 %v270, %v269
      %v291 = vpack.c.b16 %v272, %v271
      %v292 = vpack.c.b16 %v274, %v273
      %v293 = vpack.c.b16 %v276, %v275
      %v294 = vpack.c.b16 %v278, %v277
      %vm295 = vcmask 15360
      %v297 = vsel %vm295, %v279, 0
      %v300 = vsel %vm295, %v280, 0
      %v303 = vsel %vm295, %v281, 0
      %v306 = vsel %vm295, %v282, 0
      %v309 = vsel %vm295, %v283, 0
      %v312 = vsel %vm295, %v284, 0
      %v315 = vsel %vm295, %v285, 0
      %v318 = vsel %vm295, %v286, 0
      %v321 = vsel %vm295, %v287, 0
      %v324 = vsel %vm295, %v288, 0
      %v327 = vsel %vm295, %v289, 0
      %v330 = vsel %vm295, %v290, 0
      %v333 = vsel %vm295, %v291, 0
      %v336 = vsel %vm295, %v292, 0
      %v339 = vsel %vm295, %v293, 0
      %v342 = vsel %vm295, %v294, 0
      %vm344 = vcmask 1040384
      %v346 = vsel %vm344, %v207, 0
      %348 = vmatprep.subr.bf16.mxu0 0
      %349 = vmatpush1.bf16.msra.mxu0 %v346
      %350 = vmatprep.subr.bf16.mxu0 0
      %351 = vmatpush1.bf16.msra.mxu0 0
      %352 = vmatprep.subr.bf16.mxu0 0
      %353 = vmatpush1.bf16.msra.mxu0 0
      %354 = vmatprep.subr.bf16.mxu0 0
      %355 = vmatpush1.bf16.msra.mxu0 0
      %356 = vmatprep.subr.bf16.mxu0 0
      %357 = vmatpush1.bf16.msra.mxu0 0
      %358 = vmatprep.subr.bf16.mxu0 0
      %359 = vmatpush1.bf16.msra.mxu0 0
      %360 = vmatprep.subr.bf16.mxu0 0
      %361 = vmatpush1.bf16.msra.mxu0 0
      %362 = vmatprep.subr.bf16.mxu0 0
      %363 = vmatpush1.bf16.msra.mxu0 0
      %364 = vmatprep.subr.bf16.mxu0 0
      %365 = vmatpush1.bf16.msra.mxu0 0
      %366 = vmatprep.subr.bf16.mxu0 0
      %367 = vmatpush1.bf16.msra.mxu0 0
      %368 = vmatprep.subr.bf16.mxu0 0
      %369 = vmatpush1.bf16.msra.mxu0 0
      %370 = vmatprep.subr.bf16.mxu0 0
      %371 = vmatpush1.bf16.msra.mxu0 0
      %372 = vmatprep.subr.bf16.mxu0 0
      %373 = vmatpush1.bf16.msra.mxu0 0
      %374 = vmatprep.subr.bf16.mxu0 0
      %375 = vmatpush1.bf16.msra.mxu0 0
      %376 = vmatprep.subr.bf16.mxu0 0
      %377 = vmatpush1.bf16.msra.mxu0 0
      %378 = vmatprep.subr.bf16.mxu0 0
      %379 = vmatpush1.bf16.msra.mxu0 0
      %380 = vmatprep.mubr.bf16.mxu0 0
      %381 = vmatmul.mubr.bf16.gmra.mrb[0].mxu0 %v297
      %v382 = vpop.f32.mrb[0].mxu0
      %v383 = vadd.f32 %v213, %v382
      %v384 = vpop.f32.mrb[0].mxu0
      %v385 = vpop.f32.mrb[0].mxu0
      %v386 = vadd.f32 %v213, %v385
      %v387 = vpop.f32.mrb[0].mxu0
      %388 = vmatprep.mubr.bf16.mxu0 0
      %389 = vmatmul.mubr.bf16.gmra.mrb[0].mxu0 %v300
      %v390 = vpop.f32.mrb[0].mxu0
      %v391 = vadd.f32 %v213, %v390
      %v392 = vpop.f32.mrb[0].mxu0
      %v393 = vpop.f32.mrb[0].mxu0
      %v394 = vadd.f32 %v213, %v393
      %v395 = vpop.f32.mrb[0].mxu0
      %396 = vmatprep.mubr.bf16.mxu0 0
      %397 = vmatmul.mubr.bf16.gmra.mrb[0].mxu0 %v303
      %v398 = vpop.f32.mrb[0].mxu0
      %v399 = vadd.f32 %v213, %v398
      %v400 = vpop.f32.mrb[0].mxu0
      %v401 = vpop.f32.mrb[0].mxu0
      %v402 = vadd.f32 %v213, %v401
      %v403 = vpop.f32.mrb[0].mxu0
      %404 = vmatprep.mubr.bf16.mxu0 0
      %405 = vmatmul.mubr.bf16.gmra.mrb[0].mxu0 %v306
      %v406 = vpop.f32.mrb[0].mxu0
      %v407 = vadd.f32 %v213, %v406
      %v408 = vpop.f32.mrb[0].mxu0
      %v409 = vpop.f32.mrb[0].mxu0
      %v410 = vadd.f32 %v213, %v409
      %v411 = vpop.f32.mrb[0].mxu0
      %412 = vmatprep.mubr.bf16.mxu0 0
      %413 = vmatmul.mubr.bf16.gmra.mrb[0].mxu0 %v309
      %v414 = vpop.f32.mrb[0].mxu0
      %v415 = vadd.f32 %v213, %v414
      %v416 = vpop.f32.mrb[0].mxu0
      %v417 = vpop.f32.mrb[0].mxu0
      %v418 = vadd.f32 %v213, %v417
      %v419 = vpop.f32.mrb[0].mxu0
      %420 = vmatprep.mubr.bf16.mxu0 0
      %421 = vmatmul.mubr.bf16.gmra.mrb[0].mxu0 %v312
      %v422 = vpop.f32.mrb[0].mxu0
      %v423 = vadd.f32 %v213, %v422
      %v424 = vpop.f32.mrb[0].mxu0
      %v425 = vpop.f32.mrb[0].mxu0
      %v426 = vadd.f32 %v213, %v425
      %v427 = vpop.f32.mrb[0].mxu0
      %428 = vmatprep.mubr.bf16.mxu0 0
      %429 = vmatmul.mubr.bf16.gmra.mrb[0].mxu0 %v315
      %v430 = vpop.f32.mrb[0].mxu0
      %v431 = vadd.f32 %v213, %v430
      %v432 = vpop.f32.mrb[0].mxu0
      %v433 = vpop.f32.mrb[0].mxu0
      %v434 = vadd.f32 %v213, %v433
      %v435 = vpop.f32.mrb[0].mxu0
      %436 = vmatprep.mubr.bf16.mxu0 0
      %437 = vmatmul.mubr.bf16.gmra.mrb[0].mxu0 %v318
      %v438 = vpop.f32.mrb[0].mxu0
      %v439 = vadd.f32 %v213, %v438
      %v440 = vpop.f32.mrb[0].mxu0
      %v441 = vpop.f32.mrb[0].mxu0
      %v442 = vadd.f32 %v213, %v441
      %v443 = vpop.f32.mrb[0].mxu0
      %444 = vmatprep.mubr.bf16.mxu0 0
      %445 = vmatmul.mubr.bf16.gmra.mrb[0].mxu0 %v321
      %v446 = vpop.f32.mrb[0].mxu0
      %v447 = vadd.f32 %v213, %v446
      %v448 = vpop.f32.mrb[0].mxu0
      %v449 = vpop.f32.mrb[0].mxu0
      %v450 = vadd.f32 %v213, %v449
      %v451 = vpop.f32.mrb[0].mxu0
      %452 = vmatprep.mubr.bf16.mxu0 0
      %453 = vmatmul.mubr.bf16.gmra.mrb[0].mxu0 %v324
      %v454 = vpop.f32.mrb[0].mxu0
      %v455 = vadd.f32 %v213, %v454
      %v456 = vpop.f32.mrb[0].mxu0
      %v457 = vpop.f32.mrb[0].mxu0
      %v458 = vadd.f32 %v213, %v457
      %v459 = vpop.f32.mrb[0].mxu0
      %460 = vmatprep.mubr.bf16.mxu0 0
      %461 = vmatmul.mubr.bf16.gmra.mrb[0].mxu0 %v327
      %v462 = vpop.f32.mrb[0].mxu0
      %v463 = vadd.f32 %v213, %v462
      %v464 = vpop.f32.mrb[0].mxu0
      %v465 = vpop.f32.mrb[0].mxu0
      %v466 = vadd.f32 %v213, %v465
      %v467 = vpop.f32.mrb[0].mxu0
      %468 = vmatprep.mubr.bf16.mxu0 0
      %469 = vmatmul.mubr.bf16.gmra.mrb[0].mxu0 %v330
      %v470 = vpop.f32.mrb[0].mxu0
      %v471 = vadd.f32 %v213, %v470
      %v472 = vpop.f32.mrb[0].mxu0
      %v473 = vpop.f32.mrb[0].mxu0
      %v474 = vadd.f32 %v213, %v473
      %v475 = vpop.f32.mrb[0].mxu0
      %476 = vmatprep.mubr.bf16.mxu0 0
      %477 = vmatmul.mubr.bf16.gmra.mrb[0].mxu0 %v333
      %v478 = vpop.f32.mrb[0].mxu0
      %v479 = vadd.f32 %v213, %v478
      %v480 = vpop.f32.mrb[0].mxu0
      %v481 = vpop.f32.mrb[0].mxu0
      %v482 = vadd.f32 %v213, %v481
      %v483 = vpop.f32.mrb[0].mxu0
      %484 = vmatprep.mubr.bf16.mxu0 0
      %485 = vmatmul.mubr.bf16.gmra.mrb[0].mxu0 %v336
      %v486 = vpop.f32.mrb[0].mxu0
      %v487 = vadd.f32 %v213, %v486
      %v488 = vpop.f32.mrb[0].mxu0
      %v489 = vpop.f32.mrb[0].mxu0
      %v490 = vadd.f32 %v213, %v489
      %v491 = vpop.f32.mrb[0].mxu0
      %492 = vmatprep.mubr.bf16.mxu0 0
      %493 = vmatmul.mubr.bf16.gmra.mrb[0].mxu0 %v339
      %v494 = vpop.f32.mrb[0].mxu0
      %v495 = vadd.f32 %v213, %v494
      %v496 = vpop.f32.mrb[0].mxu0
      %v497 = vpop.f32.mrb[0].mxu0
      %v498 = vadd.f32 %v213, %v497
      %v499 = vpop.f32.mrb[0].mxu0
      %500 = vmatprep.mubr.bf16.mxu0 0
      %501 = vmatmul.mubr.bf16.gmra.mrb[0].mxu0 %v342
      %v502 = vpop.f32.mrb[0].mxu0
      %v503 = vadd.f32 %v213, %v502
      %v504 = vpop.f32.mrb[0].mxu0
      %v505 = vpop.f32.mrb[0].mxu0
      %v506 = vadd.f32 %v213, %v505
      %v507 = vpop.f32.mrb[0].mxu0
      %508 = vdwg.mxu0
      %vm509 = vcmask 23552
      %510 = vst.msk [vmem:[%s172] sm:$0xff] %vm509, %v383
      %511 = vst.msk [vmem:[%s172 + $0x8] sm:$0xff] %vm509, %v386
      %512 = vst.msk [vmem:[%s172 + $0x10] sm:$0xff] %vm509, %v391
      %513 = vst.msk [vmem:[%s172 + $0x18] sm:$0xff] %vm509, %v394
      %514 = vst.msk [vmem:[%s172 + $0x20] sm:$0xff] %vm509, %v399
      %515 = vst.msk [vmem:[%s172 + $0x28] sm:$0xff] %vm509, %v402
      %516 = vst.msk [vmem:[%s172 + $0x30] sm:$0xff] %vm509, %v407
      %517 = vst.msk [vmem:[%s172 + $0x38] sm:$0xff] %vm509, %v410
      %518 = vst.msk [vmem:[%s172 + $0x40] sm:$0xff] %vm509, %v415
      %519 = vst.msk [vmem:[%s172 + $0x48] sm:$0xff] %vm509, %v418
      %520 = vst.msk [vmem:[%s172 + $0x50] sm:$0xff] %vm509, %v423
      %521 = vst.msk [vmem:[%s172 + $0x58] sm:$0xff] %vm509, %v426
      %522 = vst.msk [vmem:[%s172 + $0x60] sm:$0xff] %vm509, %v431
      %523 = vst.msk [vmem:[%s172 + $0x68] sm:$0xff] %vm509, %v434
      %524 = vst.msk [vmem:[%s172 + $0x70] sm:$0xff] %vm509, %v439
      %525 = vst.msk [vmem:[%s172 + $0x78] sm:$0xff] %vm509, %v442
      %526 = vst.msk [vmem:[%s172 + $0x80] sm:$0xff] %vm509, %v447
      %527 = vst.msk [vmem:[%s172 + $0x88] sm:$0xff] %vm509, %v450
      %528 = vst.msk [vmem:[%s172 + $0x90] sm:$0xff] %vm509, %v455
      %529 = vst.msk [vmem:[%s172 + $0x98] sm:$0xff] %vm509, %v458
      %530 = vst.msk [vmem:[%s172 + $0xa0] sm:$0xff] %vm509, %v463
      %531 = vst.msk [vmem:[%s172 + $0xa8] sm:$0xff] %vm509, %v466
      %532 = vst.msk [vmem:[%s172 + $0xb0] sm:$0xff] %vm509, %v471
      %533 = vst.msk [vmem:[%s172 + $0xb8] sm:$0xff] %vm509, %v474
      %534 = vst.msk [vmem:[%s172 + $0xc0] sm:$0xff] %vm509, %v479
      %535 = vst.msk [vmem:[%s172 + $0xc8] sm:$0xff] %vm509, %v482
      %536 = vst.msk [vmem:[%s172 + $0xd0] sm:$0xff] %vm509, %v487
      %537 = vst.msk [vmem:[%s172 + $0xd8] sm:$0xff] %vm509, %v490
      %538 = vst.msk [vmem:[%s172 + $0xe0] sm:$0xff] %vm509, %v495
      %539 = vst.msk [vmem:[%s172 + $0xe8] sm:$0xff] %vm509, %v498
      %540 = vst.msk [vmem:[%s172 + $0xf0] sm:$0xff] %vm509, %v503
      %541 = vst.msk [vmem:[%s172 + $0xf8] sm:$0xff] %vm509, %v506
      %s542 = smul.u32 32, %s14
      %p543 = scmp.lt.s32.totalorder %s542, 255
      %s544 = scalar_select %p543, %s542, 255
      %s545 = smul.addr %s544, 8
      %s546 = scalar_lea.vmem %s3, %s545
      // Predicated region
      $region33: #{single_view_forward.21} parent=31 // pred_check
        %p547 = pneg %p100
      $region34: #{single_view_forward.21} parent=31 // pred_check_branch
        %549 = sbr.rel (%p547) target = $region36
      $region35: #{single_view_forward.21} parent=31 // pred_region
        %s550 = smul.u32 32, %s14
      $region36: #{single_view_forward.21} parent=31 // pred_fallthru
        _
    $region32: #{single_view_forward.21} parent=5 // pred_fallthru
      _
    %p551 = scmp.le.s32.totalorder 2, %s9
    // Predicated region
    $region37: #{single_view_forward.21} parent=5 // pred_check
      %p552 = pneg %p551
    $region38: #{single_view_forward.21} parent=5 // pred_check_branch
      %554 = sbr.rel (%p552) target = $region40
    $region39: #{single_view_forward.21} parent=5 // pred_region
      %s555 = ssub.s32 %s9, 2
      // Predicated region
      $region41: #{single_view_forward.21} parent=39 // pred_check
        %p556 = pneg %p106
      $region42: #{single_view_forward.21} parent=39 // pred_check_branch
        %558 = sbr.rel (%p556) target = $region44
      $region43: #{single_view_forward.21} parent=39 // pred_region
        %s559 = smul.u32 32, %s15
        %p560 = scmp.lt.s32.totalorder %s559, 255
        %s561 = scalar_select %p560, %s559, 255
        %s562 = smul.addr %s561, 8
        %s563 = scalar_lea.vmem %s3, %s562
      $region44: #{single_view_forward.21} parent=39 // pred_fallthru
        _
    $region40: #{single_view_forward.21} parent=5 // pred_fallthru
      _
  $region6: #{single_view_forward.21} parent=0 // loop_footer
    %s13 = sadd.s32 1, %s9
  $region7: #{single_view_forward.21} parent=0 // loop_footer_branch
    %8 = sbr.rel target = $region3
  $region8: #{single_view_forward.21} parent=0 // loop_exit
    _

</llo_original>
